<compile_context>
chip_gen: v7x
topology: tpu7x:2x2x1
jax: 0.10.0
libtpu: 0.0.40
codegen_flags: <defaults>
</compile_context>

<pallas_src>
import functools

import jax
import jax.numpy as jnp
from jax.experimental import pallas as pl
from jax.experimental.pallas import tpu as pltpu


def _round_up(x, m):
    return (x + m - 1) // m * m


def _pad_gate_dim(w, H, Hp):
    """(4H, ...) -> (4Hp, ...), zero-padding each gate block [i, f, g, o]."""
    if Hp == H:
        return w
    w4 = w.reshape((4, H) + w.shape[1:])
    pad = [(0, 0), (0, Hp - H)] + [(0, 0)] * (w.ndim - 1)
    return jnp.pad(w4, pad).reshape((4 * Hp,) + w.shape[1:])


# ---------------------------------------------------------------------------
# Fused LSTM layer kernel: chunked input projection + serial recurrence.
# ---------------------------------------------------------------------------
def _make_lstm_kernel(Tc, Bp, Hp, T_valid, needs_mask, unroll):
    """Kernel over one time chunk.

    Refs (inputs, outputs, scratch):
      x_ref    : (Tc*Bp, Dp)  bf16  flattened (time, batch) rows for this chunk
      wih_t_ref: (Dp, 4Hp)    bf16  W_ih^T (VMEM resident, constant index)
      whh_t_ref: (Hp, 4Hp)    bf16  W_hh^T (VMEM resident, constant index)
      b_ref    : (1, 4Hp)     f32   combined bias b_ih + b_hh
      y_ref    : (Tc*Bp, Hp)  bf16  per-timestep hidden outputs (lane dense)
      h_ref    : (Bp, Hp)     f32   hidden carry == h_n (constant block index)
      c_ref    : (Bp, Hp)     f32   cell carry   == c_n (constant block index)
      gx_ref   : (Tc*Bp, 4Hp) f32   scratch: x @ W_ih^T + b for this chunk
    """

    def kernel(x_ref, wih_t_ref, whh_t_ref, b_ref, y_ref, h_ref, c_ref, gx_ref):
        s = pl.program_id(0)

        @pl.when(s == 0)
        def _init():
            h_ref[...] = jnp.zeros_like(h_ref)
            c_ref[...] = jnp.zeros_like(c_ref)

        # Fused chunk-level input projection: one (Tc*Bp, Dp) x (Dp, 4Hp) matmul
        # on the MXU (bf16 operands, f32 accumulation) — no gates_x HBM traffic.
        gx_ref[...] = (
            jnp.dot(x_ref[...].astype(jnp.bfloat16), wih_t_ref[...],
                    preferred_element_type=jnp.float32)
            + b_ref[...])

        w_hh = whh_t_ref[...]            # hoisted; stays VMEM resident

        def sigm(z):
            # sigmoid(z) == 0.5 * tanh(0.5 * z) + 0.5: one EUP push per gate.
            return 0.5 * jnp.tanh(0.5 * z) + 0.5

        def step(t, carry):
            r = pl.multiple_of(t * Bp, Bp)          # sublane-aligned row offset
            h_prev = h_ref[...]
            c_prev = c_ref[...]
            gates = gx_ref[pl.ds(r, Bp), :] + jnp.dot(
                h_prev.astype(w_hh.dtype), w_hh,
                preferred_element_type=jnp.float32)
            i_g = sigm(gates[:, 0 * Hp:1 * Hp])
            f_g = sigm(gates[:, 1 * Hp:2 * Hp])
            g_g = jnp.tanh(gates[:, 2 * Hp:3 * Hp])
            o_g = sigm(gates[:, 3 * Hp:4 * Hp])
            c_new = f_g * c_prev + i_g * g_g
            h_new = o_g * jnp.tanh(c_new)
            if needs_mask:
                # Padded tail timesteps: keep the carries unchanged (predicated
                # select; no control flow on the serial chain).
                valid = (s * Tc + t) < T_valid
                c_new = jnp.where(valid, c_new, c_prev)
                h_new = jnp.where(valid, h_new, h_prev)
            c_ref[...] = c_new
            h_ref[...] = h_new
            y_ref[pl.ds(r, Bp), :] = h_new.astype(y_ref.dtype)
            return carry

        jax.lax.fori_loop(0, Tc, step, 0, unroll=unroll)

    return kernel


def _lstm_layer(x_flat, wih_t, whh_t, b, *, Hp, Bp, Tc, T_pad, T_valid, unroll=8):
    """One fused LSTM layer over the whole (padded) sequence.

    x_flat (T_pad*Bp, Dp) bf16; wih_t (Dp, 4Hp) bf16; whh_t (Hp, 4Hp) bf16;
    b (1, 4Hp) f32.  Returns y_flat (T_pad*Bp, Hp) bf16, h_n/c_n (Bp, Hp) f32.
    """
    Dp = x_flat.shape[1]
    G = 4 * Hp
    n_chunks = T_pad // Tc
    needs_mask = (T_pad != T_valid)
    kernel = _make_lstm_kernel(Tc, Bp, Hp, T_valid, needs_mask, min(unroll, Tc))

    grid_spec = pltpu.PrefetchScalarGridSpec(
        num_scalar_prefetch=0,
        grid=(n_chunks,),
        in_specs=[
            pl.BlockSpec((Tc * Bp, Dp), lambda s: (s, 0)),   # x chunk
            pl.BlockSpec((Dp, G), lambda s: (0, 0)),         # W_ih^T (resident)
            pl.BlockSpec((Hp, G), lambda s: (0, 0)),         # W_hh^T (resident)
            pl.BlockSpec((1, G), lambda s: (0, 0)),          # combined bias
        ],
        out_specs=[
            pl.BlockSpec((Tc * Bp, Hp), lambda s: (s, 0)),   # y chunk (lane dense)
            pl.BlockSpec((Bp, Hp), lambda s: (0, 0)),        # h carry / h_n
            pl.BlockSpec((Bp, Hp), lambda s: (0, 0)),        # c carry / c_n
        ],
        scratch_shapes=[pltpu.VMEM((Tc * Bp, G), jnp.float32)],  # gates_x chunk
    )
    out_shape = (
        jax.ShapeDtypeStruct((T_pad * Bp, Hp), jnp.bfloat16),  # y (padded, flat)
        jax.ShapeDtypeStruct((Bp, Hp), jnp.float32),           # h_n
        jax.ShapeDtypeStruct((Bp, Hp), jnp.float32),           # c_n
    )
    return pl.pallas_call(
        kernel,
        out_shape=out_shape,
        grid_spec=grid_spec,
        compiler_params=pltpu.CompilerParams(
            dimension_semantics=("arbitrary",)),   # time is a serial dependency
    )(x_flat, wih_t, whh_t, b)


# ---------------------------------------------------------------------------
# One-time parameter preparation (hoisted out of the jitted forward).
# ---------------------------------------------------------------------------
def prepare_rnn_params(params, ninp):
    """Pad gate/hidden dims to lane multiples, pad each layer's input dim to the
    previous layer's padded width, transpose, cast to bf16, combine biases.
    Returns (weights, dims) where dims is a static tuple of (H, Hp) per layer."""
    weights, dims = [], []
    din_pad = ninp                        # layer-0 input keeps its true width
    for p in params:
        H = p["w_hh"].shape[1]
        Hp = _round_up(H, 128)
        wih = _pad_gate_dim(p["w_ih"], H, Hp)                  # (4Hp, din)
        if wih.shape[1] != din_pad:                            # pad input dim
            wih = jnp.pad(wih, ((0, 0), (0, din_pad - wih.shape[1])))
        whh = _pad_gate_dim(p["w_hh"], H, Hp)                  # (4Hp, H)
        if Hp != H:
            whh = jnp.pad(whh, ((0, 0), (0, Hp - H)))          # (4Hp, Hp)
        bias = _pad_gate_dim((p["b_ih"] + p["b_hh"]).astype(jnp.float32), H, Hp)
        weights.append(dict(
            wih_t=jnp.transpose(wih).astype(jnp.bfloat16),     # (din_pad, 4Hp)
            whh_t=jnp.transpose(whh).astype(jnp.bfloat16),     # (Hp, 4Hp)
            b=bias.reshape(1, 4 * Hp),
        ))
        dims.append((H, Hp))
        din_pad = Hp        # next layer consumes the lane-padded bf16 y directly
    return weights, tuple(dims)


def rnn_forward(x, weights, *, dims, max_time_chunk=32):
    """Equivalent of RNN.forward(input, hidden=None) with all dropouts = 0.

    x (T, B, ninp) f32.  Returns (output, (h_n_list, c_n_list)); each h_n/c_n
    entry is (1, B, H_l) to match PyTorch nn.LSTM(num_layers=1) state shapes.
    """
    T, B, _ = x.shape
    Bp = _round_up(B, 16)                 # bf16 sublane-tile aligned batch pad
    Tc = min(T, max_time_chunk)
    T_pad = _round_up(T, Tc)              # tail timesteps predicated in-kernel

    xp = x.astype(jnp.bfloat16)           # bf16 activations end-to-end
    xp = jnp.pad(xp, ((0, T_pad - T), (0, Bp - B), (0, 0)))
    out = xp.reshape(T_pad * Bp, xp.shape[-1])     # flat (time*batch, feat) slab

    h_list, c_list = [], []
    for (H, Hp), w in zip(dims, weights):
        # idrop/ldrop/odrop are identity (dropout prob 0.0, inference).
        y, h_n, c_n = _lstm_layer(out, w["wih_t"], w["whh_t"], w["b"],
                                  Hp=Hp, Bp=Bp, Tc=Tc, T_pad=T_pad, T_valid=T)
        h_list.append(h_n[:B, :H][None])   # (1, B, H_l)
        c_list.append(c_n[:B, :H][None])
        out = y                            # bf16, lane-padded, stays flat

    H_last = dims[-1][0]
    output = out.reshape(T_pad, Bp, -1)[:T, :B, :H_last].astype(jnp.float32)
    return output, (h_list, c_list)


# ---------------------------------------------------------------------------
# Parameter init + pure-JAX references.
# ---------------------------------------------------------------------------
def init_rnn_params(key, ninp, nhid, nout, nlayers):
    """PyTorch-style LSTM init: uniform(-1/sqrt(H), 1/sqrt(H)) per layer."""
    params = []
    for l in range(nlayers):
        din = ninp if l == 0 else nhid
        h = nhid if l != nlayers - 1 else nout
        k = 1.0 / jnp.sqrt(jnp.float32(h))
        key, k1, k2, k3, k4 = jax.random.split(key, 5)
        params.append(dict(
            w_ih=jax.random.uniform(k1, (4 * h, din), jnp.float32, -k, k),
            w_hh=jax.random.uniform(k2, (4 * h, h), jnp.float32, -k, k),
            b_ih=jax.random.uniform(k3, (4 * h,), jnp.float32, -k, k),
            b_hh=jax.random.uniform(k4, (4 * h,), jnp.float32, -k, k),
        ))
    return params


def _lstm_layer_ref(x, w_ih, w_hh, b_ih, b_hh, emulate_bf16=False):
    """Pure-JAX reference (lax.scan). emulate_bf16 mirrors kernel matmul dtypes."""
    T, B, Din = x.shape
    H = w_hh.shape[1]
    b = (b_ih + b_hh).astype(jnp.float32)
    wih = w_ih.astype(jnp.bfloat16) if emulate_bf16 else w_ih
    whh = w_hh.astype(jnp.bfloat16) if emulate_bf16 else w_hh

    def mm(a, w):
        if emulate_bf16:
            a = a.astype(jnp.bfloat16)
        return jnp.dot(a, w.T, preferred_element_type=jnp.float32)

    def step(carry, x_t):
        h, c = carry
        gates = mm(x_t, wih) + mm(h, whh) + b
        i = jax.nn.sigmoid(gates[:, 0 * H:1 * H])
        f = jax.nn.sigmoid(gates[:, 1 * H:2 * H])
        g = jnp.tanh(gates[:, 2 * H:3 * H])
        o = jax.nn.sigmoid(gates[:, 3 * H:4 * H])
        c = f * c + i * g
        h = o * jnp.tanh(c)
        return (h, c), h

    h0 = jnp.zeros((B, H), jnp.float32)
    c0 = jnp.zeros((B, H), jnp.float32)
    (hN, cN), ys = jax.lax.scan(step, (h0, c0), x.astype(jnp.float32))
    return ys, hN, cN


def _rnn_ref(x, params, emulate_kernel):
    out = x.astype(jnp.float32)
    hs, cs = [], []
    for p in params:
        ys, h, c = _lstm_layer_ref(out, p["w_ih"], p["w_hh"], p["b_ih"],
                                   p["b_hh"], emulate_bf16=emulate_kernel)
        if emulate_kernel:
            # The kernel stores inter-layer / final activations in bf16.
            ys = ys.astype(jnp.bfloat16).astype(jnp.float32)
        hs.append(h)
        cs.append(c)
        out = ys
    return out, hs, cs


if __name__ == "__main__":
    # Module config: cell='LSTM', ninp=16, nhid=32, nout=32, nlayers=2,
    # all dropouts = 0.0 (identity at inference).
    ninp, nhid, nout, nlayers = 16, 32, 32, 2
    T, B = 8, 2

    key = jax.random.PRNGKey(0)
    key, kx = jax.random.split(key)
    x = jax.random.normal(kx, (T, B, ninp), jnp.float32)   # (seq, batch, feat)
    params = init_rnn_params(key, ninp, nhid, nout, nlayers)

    weights, dims = prepare_rnn_params(params, ninp)       # one-time weight prep
    fwd = jax.jit(functools.partial(rnn_forward, dims=dims))

    output, (h_n, c_n) = fwd(x, weights)
    output = jax.block_until_ready(output)
    h_n = [jax.block_until_ready(h) for h in h_n]
    c_n = [jax.block_until_ready(c) for c in c_n]

    # Cross-check: tight tolerance vs a bf16-emulating reference, loose vs f32.
    ref16, h16, c16 = _rnn_ref(x, params, emulate_kernel=True)
    ref32, h32, c32 = _rnn_ref(x, params, emulate_kernel=False)
    assert output.shape == (T, B, nout)
    for l in range(nlayers):
        assert jnp.allclose(h_n[l][0], h16[l], atol=1e-2), f"h_n mismatch (layer {l})"
        assert jnp.allclose(c_n[l][0], c16[l], atol=1e-2), f"c_n mismatch (layer {l})"
        assert jnp.allclose(h_n[l][0], h32[l], atol=5e-2), f"h_n drift vs f32 (layer {l})"
        assert jnp.allclose(c_n[l][0], c32[l], atol=5e-2), f"c_n drift vs f32 (layer {l})"
    assert jnp.allclose(output, ref16, atol=1e-2), "output mismatch (bf16 ref)"
    assert jnp.allclose(output, ref32, atol=5e-2), "output drift vs f32 ref"

    # Second config: awkward sequence length exercising multi-chunk carry and
    # the in-kernel tail masking (T=11, Tc=4 -> T_pad=12, last step masked).
    T2 = 11
    key, kx2 = jax.random.split(key)
    x2 = jax.random.normal(kx2, (T2, B, ninp), jnp.float32)
    fwd2 = jax.jit(functools.partial(rnn_forward, dims=dims, max_time_chunk=4))
    out2, (h2, c2) = fwd2(x2, weights)
    out2 = jax.block_until_ready(out2)
    r16, rh16, rc16 = _rnn_ref(x2, params, emulate_kernel=True)
    assert out2.shape == (T2, B, nout)
    assert jnp.allclose(out2, r16, atol=1e-2), "masked/multi-chunk output mismatch"
    for l in range(nlayers):
        assert jnp.allclose(h2[l][0], rh16[l], atol=1e-2), f"masked h_n mismatch (layer {l})"
        assert jnp.allclose(c2[l][0], rc16[l], atol=1e-2), f"masked c_n mismatch (layer {l})"

    print("KERNEL_OK")
</pallas_src>

<mosaic_0001>
module attributes {stable_mosaic.version = 11 : i64} {
  func.func @kernel(%arg0: i32, %arg1: memref<128x16xbf16, #tpu.memory_space<vmem>>, %arg2: memref<16x512xbf16, #tpu.memory_space<vmem>>, %arg3: memref<128x512xbf16, #tpu.memory_space<vmem>>, %arg4: memref<1x512xf32, #tpu.memory_space<vmem>>, %arg5: memref<128x128xbf16, #tpu.memory_space<vmem>>, %arg6: memref<16x128xf32, #tpu.memory_space<vmem>>, %arg7: memref<16x128xf32, #tpu.memory_space<vmem>>, %arg8: memref<128x512xf32, #tpu.memory_space<vmem>>) attributes {dimension_semantics = [#tpu.dimension_semantics<arbitrary>], iteration_bounds = array<i64: 1>, scalar_prefetch = 0 : i64, scratch_operands = 1 : i64, tpu.core_type = #tpu.core_type<tc>, window_params = [{transform_indices = @transform_0, window_bounds = array<i64: 128, 16>}, {pipeline_mode = #tpu.pipeline_mode<synchronous>, transform_indices = @transform_1, window_bounds = array<i64: 16, 512>}, {pipeline_mode = #tpu.pipeline_mode<synchronous>, transform_indices = @transform_2, window_bounds = array<i64: 128, 512>}, {pipeline_mode = #tpu.pipeline_mode<synchronous>, transform_indices = @transform_3, window_bounds = array<i64: 1, 512>}, {transform_indices = @transform_4, window_bounds = array<i64: 128, 128>}, {pipeline_mode = #tpu.pipeline_mode<synchronous>, transform_indices = @transform_5, window_bounds = array<i64: 16, 128>}, {pipeline_mode = #tpu.pipeline_mode<synchronous>, transform_indices = @transform_6, window_bounds = array<i64: 16, 128>}]} {
    %c0_i32 = arith.constant 0 : i32
    %0 = arith.cmpi eq, %arg0, %c0_i32 : i32
    %1 = arith.extui %0 : i1 to i32
    %c0_i32_0 = arith.constant 0 : i32
    %2 = arith.cmpi ne, %1, %c0_i32_0 : i32
    scf.if %2 {
      %cst_178 = arith.constant 0.000000e+00 : f32
      %371 = vector.broadcast %cst_178 : f32 to vector<16x128xf32>
      %c0_179 = arith.constant 0 : index
      %c0_180 = arith.constant 0 : index
      %372 = vector.load %arg6[%c0_179, %c0_180] : memref<16x128xf32, #tpu.memory_space<vmem>>, vector<16x128xf32>
      tpu.vector_store %arg6[%c0_179, %c0_180], %371 {strides = array<i32>} : memref<16x128xf32, #tpu.memory_space<vmem>>, vector<16x128xf32>,
      %cst_181 = arith.constant 0.000000e+00 : f32
      %373 = vector.broadcast %cst_181 : f32 to vector<16x128xf32>
      %c0_182 = arith.constant 0 : index
      %c0_183 = arith.constant 0 : index
      %374 = vector.load %arg7[%c0_182, %c0_183] : memref<16x128xf32, #tpu.memory_space<vmem>>, vector<16x128xf32>
      tpu.vector_store %arg7[%c0_182, %c0_183], %373 {strides = array<i32>} : memref<16x128xf32, #tpu.memory_space<vmem>>, vector<16x128xf32>,
    } else {
    }
    %c0 = arith.constant 0 : index
    %c0_1 = arith.constant 0 : index
    %3 = vector.load %arg1[%c0, %c0_1] : memref<128x16xbf16, #tpu.memory_space<vmem>>, vector<128x16xbf16>
    %c0_2 = arith.constant 0 : index
    %c0_3 = arith.constant 0 : index
    %4 = vector.load %arg2[%c0_2, %c0_3] : memref<16x512xbf16, #tpu.memory_space<vmem>>, vector<16x512xbf16>
    %cst = arith.constant dense<0.000000e+00> : vector<128x512xf32>
    %5 = tpu.matmul %3, %4, %cst {dimension_numbers = #tpu.dot_dimension_numbers<[1], [0], [0], [1], [0, 0, 1, 1], [], []>} : vector<128x16xbf16>, vector<16x512xbf16>, vector<128x512xf32> -> vector<128x512xf32>
    %c0_4 = arith.constant 0 : index
    %c0_5 = arith.constant 0 : index
    %6 = vector.load %arg4[%c0_4, %c0_5] : memref<1x512xf32, #tpu.memory_space<vmem>>, vector<1x512xf32>
    %7 = vector.broadcast %6 : vector<1x512xf32> to vector<128x512xf32>
    %8 = arith.addf %5, %7 : vector<128x512xf32>
    %c0_6 = arith.constant 0 : index
    %c0_7 = arith.constant 0 : index
    %9 = vector.load %arg8[%c0_6, %c0_7] : memref<128x512xf32, #tpu.memory_space<vmem>>, vector<128x512xf32>
    tpu.vector_store %arg8[%c0_6, %c0_7], %8 {strides = array<i32>} : memref<128x512xf32, #tpu.memory_space<vmem>>, vector<128x512xf32>,
    %c0_8 = arith.constant 0 : index
    %c0_9 = arith.constant 0 : index
    %10 = vector.load %arg3[%c0_8, %c0_9] : memref<128x512xbf16, #tpu.memory_space<vmem>>, vector<128x512xbf16>
    %c0_i32_10 = arith.constant 0 : i32
    %c16_i32 = arith.constant 16 : i32
    %11 = arith.muli %c0_i32_10, %c16_i32 : i32
    %12 = tpu.assume_multiple %11, 16 : i32
    %c0_11 = arith.constant 0 : index
    %c0_12 = arith.constant 0 : index
    %13 = vector.load %arg6[%c0_11, %c0_12] : memref<16x128xf32, #tpu.memory_space<vmem>>, vector<16x128xf32>
    %c0_13 = arith.constant 0 : index
    %c0_14 = arith.constant 0 : index
    %14 = vector.load %arg7[%c0_13, %c0_14] : memref<16x128xf32, #tpu.memory_space<vmem>>, vector<16x128xf32>
    %15 = arith.index_cast %12 : i32 to index
    %c0_15 = arith.constant 0 : index
    %16 = vector.load %arg8[%15, %c0_15] : memref<128x512xf32, #tpu.memory_space<vmem>>, vector<16x512xf32>
    %17 = arith.truncf %13 : vector<16x128xf32> to vector<16x128xbf16>
    %cst_16 = arith.constant dense<0.000000e+00> : vector<16x512xf32>
    %18 = tpu.matmul %17, %10, %cst_16 {dimension_numbers = #tpu.dot_dimension_numbers<[1], [0], [0], [1], [0, 0, 1, 1], [], []>} : vector<16x128xbf16>, vector<128x512xbf16>, vector<16x512xf32> -> vector<16x512xf32>
    %19 = arith.addf %16, %18 : vector<16x512xf32>
    %20 = vector.extract_strided_slice %19 {offsets = [0, 0], sizes = [16, 128], strides = [1, 1]} : vector<16x512xf32> to vector<16x128xf32>
    %cst_17 = arith.constant 5.000000e-01 : f32
    %21 = vector.broadcast %cst_17 : f32 to vector<16x128xf32>
    %22 = arith.mulf %21, %20 : vector<16x128xf32>
    %23 = math.tanh %22 : vector<16x128xf32>
    %cst_18 = arith.constant 5.000000e-01 : f32
    %24 = vector.broadcast %cst_18 : f32 to vector<16x128xf32>
    %25 = arith.mulf %24, %23 : vector<16x128xf32>
    %cst_19 = arith.constant 5.000000e-01 : f32
    %26 = vector.broadcast %cst_19 : f32 to vector<16x128xf32>
    %27 = arith.addf %25, %26 : vector<16x128xf32>
    %28 = vector.extract_strided_slice %19 {offsets = [0, 128], sizes = [16, 128], strides = [1, 1]} : vector<16x512xf32> to vector<16x128xf32>
    %cst_20 = arith.constant 5.000000e-01 : f32
    %29 = vector.broadcast %cst_20 : f32 to vector<16x128xf32>
    %30 = arith.mulf %29, %28 : vector<16x128xf32>
    %31 = math.tanh %30 : vector<16x128xf32>
    %cst_21 = arith.constant 5.000000e-01 : f32
    %32 = vector.broadcast %cst_21 : f32 to vector<16x128xf32>
    %33 = arith.mulf %32, %31 : vector<16x128xf32>
    %cst_22 = arith.constant 5.000000e-01 : f32
    %34 = vector.broadcast %cst_22 : f32 to vector<16x128xf32>
    %35 = arith.addf %33, %34 : vector<16x128xf32>
    %36 = vector.extract_strided_slice %19 {offsets = [0, 256], sizes = [16, 128], strides = [1, 1]} : vector<16x512xf32> to vector<16x128xf32>
    %37 = math.tanh %36 : vector<16x128xf32>
    %38 = vector.extract_strided_slice %19 {offsets = [0, 384], sizes = [16, 128], strides = [1, 1]} : vector<16x512xf32> to vector<16x128xf32>
    %cst_23 = arith.constant 5.000000e-01 : f32
    %39 = vector.broadcast %cst_23 : f32 to vector<16x128xf32>
    %40 = arith.mulf %39, %38 : vector<16x128xf32>
    %41 = math.tanh %40 : vector<16x128xf32>
    %cst_24 = arith.constant 5.000000e-01 : f32
    %42 = vector.broadcast %cst_24 : f32 to vector<16x128xf32>
    %43 = arith.mulf %42, %41 : vector<16x128xf32>
    %cst_25 = arith.constant 5.000000e-01 : f32
    %44 = vector.broadcast %cst_25 : f32 to vector<16x128xf32>
    %45 = arith.addf %43, %44 : vector<16x128xf32>
    %46 = arith.mulf %35, %14 : vector<16x128xf32>
    %47 = arith.mulf %27, %37 : vector<16x128xf32>
    %48 = arith.addf %46, %47 : vector<16x128xf32>
    %49 = math.tanh %48 : vector<16x128xf32>
    %50 = arith.mulf %45, %49 : vector<16x128xf32>
    %c0_26 = arith.constant 0 : index
    %c0_27 = arith.constant 0 : index
    %51 = vector.load %arg7[%c0_26, %c0_27] : memref<16x128xf32, #tpu.memory_space<vmem>>, vector<16x128xf32>
    tpu.vector_store %arg7[%c0_26, %c0_27], %48 {strides = array<i32>} : memref<16x128xf32, #tpu.memory_space<vmem>>, vector<16x128xf32>,
    %c0_28 = arith.constant 0 : index
    %c0_29 = arith.constant 0 : index
    %52 = vector.load %arg6[%c0_28, %c0_29] : memref<16x128xf32, #tpu.memory_space<vmem>>, vector<16x128xf32>
    tpu.vector_store %arg6[%c0_28, %c0_29], %50 {strides = array<i32>} : memref<16x128xf32, #tpu.memory_space<vmem>>, vector<16x128xf32>,
    %53 = arith.truncf %50 : vector<16x128xf32> to vector<16x128xbf16>
    %54 = arith.index_cast %12 : i32 to index
    %c0_30 = arith.constant 0 : index
    %55 = vector.load %arg5[%54, %c0_30] : memref<128x128xbf16, #tpu.memory_space<vmem>>, vector<16x128xbf16>
    tpu.vector_store %arg5[%54, %c0_30], %53 {strides = array<i32>} : memref<128x128xbf16, #tpu.memory_space<vmem>>, vector<16x128xbf16>,
    %c1_i32 = arith.constant 1 : i32
    %c16_i32_31 = arith.constant 16 : i32
    %56 = arith.muli %c1_i32, %c16_i32_31 : i32
    %57 = tpu.assume_multiple %56, 16 : i32
    %c0_32 = arith.constant 0 : index
    %c0_33 = arith.constant 0 : index
    %58 = vector.load %arg6[%c0_32, %c0_33] : memref<16x128xf32, #tpu.memory_space<vmem>>, vector<16x128xf32>
    %c0_34 = arith.constant 0 : index
    %c0_35 = arith.constant 0 : index
    %59 = vector.load %arg7[%c0_34, %c0_35] : memref<16x128xf32, #tpu.memory_space<vmem>>, vector<16x128xf32>
    %60 = arith.index_cast %57 : i32 to index
    %c0_36 = arith.constant 0 : index
    %61 = vector.load %arg8[%60, %c0_36] : memref<128x512xf32, #tpu.memory_space<vmem>>, vector<16x512xf32>
    %62 = arith.truncf %58 : vector<16x128xf32> to vector<16x128xbf16>
    %cst_37 = arith.constant dense<0.000000e+00> : vector<16x512xf32>
    %63 = tpu.matmul %62, %10, %cst_37 {dimension_numbers = #tpu.dot_dimension_numbers<[1], [0], [0], [1], [0, 0, 1, 1], [], []>} : vector<16x128xbf16>, vector<128x512xbf16>, vector<16x512xf32> -> vector<16x512xf32>
    %64 = arith.addf %61, %63 : vector<16x512xf32>
    %65 = vector.extract_strided_slice %64 {offsets = [0, 0], sizes = [16, 128], strides = [1, 1]} : vector<16x512xf32> to vector<16x128xf32>
    %cst_38 = arith.constant 5.000000e-01 : f32
    %66 = vector.broadcast %cst_38 : f32 to vector<16x128xf32>
    %67 = arith.mulf %66, %65 : vector<16x128xf32>
    %68 = math.tanh %67 : vector<16x128xf32>
    %cst_39 = arith.constant 5.000000e-01 : f32
    %69 = vector.broadcast %cst_39 : f32 to vector<16x128xf32>
    %70 = arith.mulf %69, %68 : vector<16x128xf32>
    %cst_40 = arith.constant 5.000000e-01 : f32
    %71 = vector.broadcast %cst_40 : f32 to vector<16x128xf32>
    %72 = arith.addf %70, %71 : vector<16x128xf32>
    %73 = vector.extract_strided_slice %64 {offsets = [0, 128], sizes = [16, 128], strides = [1, 1]} : vector<16x512xf32> to vector<16x128xf32>
    %cst_41 = arith.constant 5.000000e-01 : f32
    %74 = vector.broadcast %cst_41 : f32 to vector<16x128xf32>
    %75 = arith.mulf %74, %73 : vector<16x128xf32>
    %76 = math.tanh %75 : vector<16x128xf32>
    %cst_42 = arith.constant 5.000000e-01 : f32
    %77 = vector.broadcast %cst_42 : f32 to vector<16x128xf32>
    %78 = arith.mulf %77, %76 : vector<16x128xf32>
    %cst_43 = arith.constant 5.000000e-01 : f32
    %79 = vector.broadcast %cst_43 : f32 to vector<16x128xf32>
    %80 = arith.addf %78, %79 : vector<16x128xf32>
    %81 = vector.extract_strided_slice %64 {offsets = [0, 256], sizes = [16, 128], strides = [1, 1]} : vector<16x512xf32> to vector<16x128xf32>
    %82 = math.tanh %81 : vector<16x128xf32>
    %83 = vector.extract_strided_slice %64 {offsets = [0, 384], sizes = [16, 128], strides = [1, 1]} : vector<16x512xf32> to vector<16x128xf32>
    %cst_44 = arith.constant 5.000000e-01 : f32
    %84 = vector.broadcast %cst_44 : f32 to vector<16x128xf32>
    %85 = arith.mulf %84, %83 : vector<16x128xf32>
    %86 = math.tanh %85 : vector<16x128xf32>
    %cst_45 = arith.constant 5.000000e-01 : f32
    %87 = vector.broadcast %cst_45 : f32 to vector<16x128xf32>
    %88 = arith.mulf %87, %86 : vector<16x128xf32>
    %cst_46 = arith.constant 5.000000e-01 : f32
    %89 = vector.broadcast %cst_46 : f32 to vector<16x128xf32>
    %90 = arith.addf %88, %89 : vector<16x128xf32>
    %91 = arith.mulf %80, %59 : vector<16x128xf32>
    %92 = arith.mulf %72, %82 : vector<16x128xf32>
    %93 = arith.addf %91, %92 : vector<16x128xf32>
    %94 = math.tanh %93 : vector<16x128xf32>
    %95 = arith.mulf %90, %94 : vector<16x128xf32>
    %c0_47 = arith.constant 0 : index
    %c0_48 = arith.constant 0 : index
    %96 = vector.load %arg7[%c0_47, %c0_48] : memref<16x128xf32, #tpu.memory_space<vmem>>, vector<16x128xf32>
    tpu.vector_store %arg7[%c0_47, %c0_48], %93 {strides = array<i32>} : memref<16x128xf32, #tpu.memory_space<vmem>>, vector<16x128xf32>,
    %c0_49 = arith.constant 0 : index
    %c0_50 = arith.constant 0 : index
    %97 = vector.load %arg6[%c0_49, %c0_50] : memref<16x128xf32, #tpu.memory_space<vmem>>, vector<16x128xf32>
    tpu.vector_store %arg6[%c0_49, %c0_50], %95 {strides = array<i32>} : memref<16x128xf32, #tpu.memory_space<vmem>>, vector<16x128xf32>,
    %98 = arith.truncf %95 : vector<16x128xf32> to vector<16x128xbf16>
    %99 = arith.index_cast %57 : i32 to index
    %c0_51 = arith.constant 0 : index
    %100 = vector.load %arg5[%99, %c0_51] : memref<128x128xbf16, #tpu.memory_space<vmem>>, vector<16x128xbf16>
    tpu.vector_store %arg5[%99, %c0_51], %98 {strides = array<i32>} : memref<128x128xbf16, #tpu.memory_space<vmem>>, vector<16x128xbf16>,
    %c2_i32 = arith.constant 2 : i32
    %c16_i32_52 = arith.constant 16 : i32
    %101 = arith.muli %c2_i32, %c16_i32_52 : i32
    %102 = tpu.assume_multiple %101, 16 : i32
    %c0_53 = arith.constant 0 : index
    %c0_54 = arith.constant 0 : index
    %103 = vector.load %arg6[%c0_53, %c0_54] : memref<16x128xf32, #tpu.memory_space<vmem>>, vector<16x128xf32>
    %c0_55 = arith.constant 0 : index
    %c0_56 = arith.constant 0 : index
    %104 = vector.load %arg7[%c0_55, %c0_56] : memref<16x128xf32, #tpu.memory_space<vmem>>, vector<16x128xf32>
    %105 = arith.index_cast %102 : i32 to index
    %c0_57 = arith.constant 0 : index
    %106 = vector.load %arg8[%105, %c0_57] : memref<128x512xf32, #tpu.memory_space<vmem>>, vector<16x512xf32>
    %107 = arith.truncf %103 : vector<16x128xf32> to vector<16x128xbf16>
    %cst_58 = arith.constant dense<0.000000e+00> : vector<16x512xf32>
    %108 = tpu.matmul %107, %10, %cst_58 {dimension_numbers = #tpu.dot_dimension_numbers<[1], [0], [0], [1], [0, 0, 1, 1], [], []>} : vector<16x128xbf16>, vector<128x512xbf16>, vector<16x512xf32> -> vector<16x512xf32>
    %109 = arith.addf %106, %108 : vector<16x512xf32>
    %110 = vector.extract_strided_slice %109 {offsets = [0, 0], sizes = [16, 128], strides = [1, 1]} : vector<16x512xf32> to vector<16x128xf32>
    %cst_59 = arith.constant 5.000000e-01 : f32
    %111 = vector.broadcast %cst_59 : f32 to vector<16x128xf32>
    %112 = arith.mulf %111, %110 : vector<16x128xf32>
    %113 = math.tanh %112 : vector<16x128xf32>
    %cst_60 = arith.constant 5.000000e-01 : f32
    %114 = vector.broadcast %cst_60 : f32 to vector<16x128xf32>
    %115 = arith.mulf %114, %113 : vector<16x128xf32>
    %cst_61 = arith.constant 5.000000e-01 : f32
    %116 = vector.broadcast %cst_61 : f32 to vector<16x128xf32>
    %117 = arith.addf %115, %116 : vector<16x128xf32>
    %118 = vector.extract_strided_slice %109 {offsets = [0, 128], sizes = [16, 128], strides = [1, 1]} : vector<16x512xf32> to vector<16x128xf32>
    %cst_62 = arith.constant 5.000000e-01 : f32
    %119 = vector.broadcast %cst_62 : f32 to vector<16x128xf32>
    %120 = arith.mulf %119, %118 : vector<16x128xf32>
    %121 = math.tanh %120 : vector<16x128xf32>
    %cst_63 = arith.constant 5.000000e-01 : f32
    %122 = vector.broadcast %cst_63 : f32 to vector<16x128xf32>
    %123 = arith.mulf %122, %121 : vector<16x128xf32>
    %cst_64 = arith.constant 5.000000e-01 : f32
    %124 = vector.broadcast %cst_64 : f32 to vector<16x128xf32>
    %125 = arith.addf %123, %124 : vector<16x128xf32>
    %126 = vector.extract_strided_slice %109 {offsets = [0, 256], sizes = [16, 128], strides = [1, 1]} : vector<16x512xf32> to vector<16x128xf32>
    %127 = math.tanh %126 : vector<16x128xf32>
    %128 = vector.extract_strided_slice %109 {offsets = [0, 384], sizes = [16, 128], strides = [1, 1]} : vector<16x512xf32> to vector<16x128xf32>
    %cst_65 = arith.constant 5.000000e-01 : f32
    %129 = vector.broadcast %cst_65 : f32 to vector<16x128xf32>
    %130 = arith.mulf %129, %128 : vector<16x128xf32>
    %131 = math.tanh %130 : vector<16x128xf32>
    %cst_66 = arith.constant 5.000000e-01 : f32
    %132 = vector.broadcast %cst_66 : f32 to vector<16x128xf32>
    %133 = arith.mulf %132, %131 : vector<16x128xf32>
    %cst_67 = arith.constant 5.000000e-01 : f32
    %134 = vector.broadcast %cst_67 : f32 to vector<16x128xf32>
    %135 = arith.addf %133, %134 : vector<16x128xf32>
    %136 = arith.mulf %125, %104 : vector<16x128xf32>
    %137 = arith.mulf %117, %127 : vector<16x128xf32>
    %138 = arith.addf %136, %137 : vector<16x128xf32>
    %139 = math.tanh %138 : vector<16x128xf32>
    %140 = arith.mulf %135, %139 : vector<16x128xf32>
    %c0_68 = arith.constant 0 : index
    %c0_69 = arith.constant 0 : index
    %141 = vector.load %arg7[%c0_68, %c0_69] : memref<16x128xf32, #tpu.memory_space<vmem>>, vector<16x128xf32>
    tpu.vector_store %arg7[%c0_68, %c0_69], %138 {strides = array<i32>} : memref<16x128xf32, #tpu.memory_space<vmem>>, vector<16x128xf32>,
    %c0_70 = arith.constant 0 : index
    %c0_71 = arith.constant 0 : index
    %142 = vector.load %arg6[%c0_70, %c0_71] : memref<16x128xf32, #tpu.memory_space<vmem>>, vector<16x128xf32>
    tpu.vector_store %arg6[%c0_70, %c0_71], %140 {strides = array<i32>} : memref<16x128xf32, #tpu.memory_space<vmem>>, vector<16x128xf32>,
    %143 = arith.truncf %140 : vector<16x128xf32> to vector<16x128xbf16>
    %144 = arith.index_cast %102 : i32 to index
    %c0_72 = arith.constant 0 : index
    %145 = vector.load %arg5[%144, %c0_72] : memref<128x128xbf16, #tpu.memory_space<vmem>>, vector<16x128xbf16>
    tpu.vector_store %arg5[%144, %c0_72], %143 {strides = array<i32>} : memref<128x128xbf16, #tpu.memory_space<vmem>>, vector<16x128xbf16>,
    %c3_i32 = arith.constant 3 : i32
    %c16_i32_73 = arith.constant 16 : i32
    %146 = arith.muli %c3_i32, %c16_i32_73 : i32
    %147 = tpu.assume_multiple %146, 16 : i32
    %c0_74 = arith.constant 0 : index
    %c0_75 = arith.constant 0 : index
    %148 = vector.load %arg6[%c0_74, %c0_75] : memref<16x128xf32, #tpu.memory_space<vmem>>, vector<16x128xf32>
    %c0_76 = arith.constant 0 : index
    %c0_77 = arith.constant 0 : index
    %149 = vector.load %arg7[%c0_76, %c0_77] : memref<16x128xf32, #tpu.memory_space<vmem>>, vector<16x128xf32>
    %150 = arith.index_cast %147 : i32 to index
    %c0_78 = arith.constant 0 : index
    %151 = vector.load %arg8[%150, %c0_78] : memref<128x512xf32, #tpu.memory_space<vmem>>, vector<16x512xf32>
    %152 = arith.truncf %148 : vector<16x128xf32> to vector<16x128xbf16>
    %cst_79 = arith.constant dense<0.000000e+00> : vector<16x512xf32>
    %153 = tpu.matmul %152, %10, %cst_79 {dimension_numbers = #tpu.dot_dimension_numbers<[1], [0], [0], [1], [0, 0, 1, 1], [], []>} : vector<16x128xbf16>, vector<128x512xbf16>, vector<16x512xf32> -> vector<16x512xf32>
    %154 = arith.addf %151, %153 : vector<16x512xf32>
    %155 = vector.extract_strided_slice %154 {offsets = [0, 0], sizes = [16, 128], strides = [1, 1]} : vector<16x512xf32> to vector<16x128xf32>
    %cst_80 = arith.constant 5.000000e-01 : f32
    %156 = vector.broadcast %cst_80 : f32 to vector<16x128xf32>
    %157 = arith.mulf %156, %155 : vector<16x128xf32>
    %158 = math.tanh %157 : vector<16x128xf32>
    %cst_81 = arith.constant 5.000000e-01 : f32
    %159 = vector.broadcast %cst_81 : f32 to vector<16x128xf32>
    %160 = arith.mulf %159, %158 : vector<16x128xf32>
    %cst_82 = arith.constant 5.000000e-01 : f32
    %161 = vector.broadcast %cst_82 : f32 to vector<16x128xf32>
    %162 = arith.addf %160, %161 : vector<16x128xf32>
    %163 = vector.extract_strided_slice %154 {offsets = [0, 128], sizes = [16, 128], strides = [1, 1]} : vector<16x512xf32> to vector<16x128xf32>
    %cst_83 = arith.constant 5.000000e-01 : f32
    %164 = vector.broadcast %cst_83 : f32 to vector<16x128xf32>
    %165 = arith.mulf %164, %163 : vector<16x128xf32>
    %166 = math.tanh %165 : vector<16x128xf32>
    %cst_84 = arith.constant 5.000000e-01 : f32
    %167 = vector.broadcast %cst_84 : f32 to vector<16x128xf32>
    %168 = arith.mulf %167, %166 : vector<16x128xf32>
    %cst_85 = arith.constant 5.000000e-01 : f32
    %169 = vector.broadcast %cst_85 : f32 to vector<16x128xf32>
    %170 = arith.addf %168, %169 : vector<16x128xf32>
    %171 = vector.extract_strided_slice %154 {offsets = [0, 256], sizes = [16, 128], strides = [1, 1]} : vector<16x512xf32> to vector<16x128xf32>
    %172 = math.tanh %171 : vector<16x128xf32>
    %173 = vector.extract_strided_slice %154 {offsets = [0, 384], sizes = [16, 128], strides = [1, 1]} : vector<16x512xf32> to vector<16x128xf32>
    %cst_86 = arith.constant 5.000000e-01 : f32
    %174 = vector.broadcast %cst_86 : f32 to vector<16x128xf32>
    %175 = arith.mulf %174, %173 : vector<16x128xf32>
    %176 = math.tanh %175 : vector<16x128xf32>
    %cst_87 = arith.constant 5.000000e-01 : f32
    %177 = vector.broadcast %cst_87 : f32 to vector<16x128xf32>
    %178 = arith.mulf %177, %176 : vector<16x128xf32>
    %cst_88 = arith.constant 5.000000e-01 : f32
    %179 = vector.broadcast %cst_88 : f32 to vector<16x128xf32>
    %180 = arith.addf %178, %179 : vector<16x128xf32>
    %181 = arith.mulf %170, %149 : vector<16x128xf32>
    %182 = arith.mulf %162, %172 : vector<16x128xf32>
    %183 = arith.addf %181, %182 : vector<16x128xf32>
    %184 = math.tanh %183 : vector<16x128xf32>
    %185 = arith.mulf %180, %184 : vector<16x128xf32>
    %c0_89 = arith.constant 0 : index
    %c0_90 = arith.constant 0 : index
    %186 = vector.load %arg7[%c0_89, %c0_90] : memref<16x128xf32, #tpu.memory_space<vmem>>, vector<16x128xf32>
    tpu.vector_store %arg7[%c0_89, %c0_90], %183 {strides = array<i32>} : memref<16x128xf32, #tpu.memory_space<vmem>>, vector<16x128xf32>,
    %c0_91 = arith.constant 0 : index
    %c0_92 = arith.constant 0 : index
    %187 = vector.load %arg6[%c0_91, %c0_92] : memref<16x128xf32, #tpu.memory_space<vmem>>, vector<16x128xf32>
    tpu.vector_store %arg6[%c0_91, %c0_92], %185 {strides = array<i32>} : memref<16x128xf32, #tpu.memory_space<vmem>>, vector<16x128xf32>,
    %188 = arith.truncf %185 : vector<16x128xf32> to vector<16x128xbf16>
    %189 = arith.index_cast %147 : i32 to index
    %c0_93 = arith.constant 0 : index
    %190 = vector.load %arg5[%189, %c0_93] : memref<128x128xbf16, #tpu.memory_space<vmem>>, vector<16x128xbf16>
    tpu.vector_store %arg5[%189, %c0_93], %188 {strides = array<i32>} : memref<128x128xbf16, #tpu.memory_space<vmem>>, vector<16x128xbf16>,
    %c4_i32 = arith.constant 4 : i32
    %c16_i32_94 = arith.constant 16 : i32
    %191 = arith.muli %c4_i32, %c16_i32_94 : i32
    %192 = tpu.assume_multiple %191, 16 : i32
    %c0_95 = arith.constant 0 : index
    %c0_96 = arith.constant 0 : index
    %193 = vector.load %arg6[%c0_95, %c0_96] : memref<16x128xf32, #tpu.memory_space<vmem>>, vector<16x128xf32>
    %c0_97 = arith.constant 0 : index
    %c0_98 = arith.constant 0 : index
    %194 = vector.load %arg7[%c0_97, %c0_98] : memref<16x128xf32, #tpu.memory_space<vmem>>, vector<16x128xf32>
    %195 = arith.index_cast %192 : i32 to index
    %c0_99 = arith.constant 0 : index
    %196 = vector.load %arg8[%195, %c0_99] : memref<128x512xf32, #tpu.memory_space<vmem>>, vector<16x512xf32>
    %197 = arith.truncf %193 : vector<16x128xf32> to vector<16x128xbf16>
    %cst_100 = arith.constant dense<0.000000e+00> : vector<16x512xf32>
    %198 = tpu.matmul %197, %10, %cst_100 {dimension_numbers = #tpu.dot_dimension_numbers<[1], [0], [0], [1], [0, 0, 1, 1], [], []>} : vector<16x128xbf16>, vector<128x512xbf16>, vector<16x512xf32> -> vector<16x512xf32>
    %199 = arith.addf %196, %198 : vector<16x512xf32>
    %200 = vector.extract_strided_slice %199 {offsets = [0, 0], sizes = [16, 128], strides = [1, 1]} : vector<16x512xf32> to vector<16x128xf32>
    %cst_101 = arith.constant 5.000000e-01 : f32
    %201 = vector.broadcast %cst_101 : f32 to vector<16x128xf32>
    %202 = arith.mulf %201, %200 : vector<16x128xf32>
    %203 = math.tanh %202 : vector<16x128xf32>
    %cst_102 = arith.constant 5.000000e-01 : f32
    %204 = vector.broadcast %cst_102 : f32 to vector<16x128xf32>
    %205 = arith.mulf %204, %203 : vector<16x128xf32>
    %cst_103 = arith.constant 5.000000e-01 : f32
    %206 = vector.broadcast %cst_103 : f32 to vector<16x128xf32>
    %207 = arith.addf %205, %206 : vector<16x128xf32>
    %208 = vector.extract_strided_slice %199 {offsets = [0, 128], sizes = [16, 128], strides = [1, 1]} : vector<16x512xf32> to vector<16x128xf32>
    %cst_104 = arith.constant 5.000000e-01 : f32
    %209 = vector.broadcast %cst_104 : f32 to vector<16x128xf32>
    %210 = arith.mulf %209, %208 : vector<16x128xf32>
    %211 = math.tanh %210 : vector<16x128xf32>
    %cst_105 = arith.constant 5.000000e-01 : f32
    %212 = vector.broadcast %cst_105 : f32 to vector<16x128xf32>
    %213 = arith.mulf %212, %211 : vector<16x128xf32>
    %cst_106 = arith.constant 5.000000e-01 : f32
    %214 = vector.broadcast %cst_106 : f32 to vector<16x128xf32>
    %215 = arith.addf %213, %214 : vector<16x128xf32>
    %216 = vector.extract_strided_slice %199 {offsets = [0, 256], sizes = [16, 128], strides = [1, 1]} : vector<16x512xf32> to vector<16x128xf32>
    %217 = math.tanh %216 : vector<16x128xf32>
    %218 = vector.extract_strided_slice %199 {offsets = [0, 384], sizes = [16, 128], strides = [1, 1]} : vector<16x512xf32> to vector<16x128xf32>
    %cst_107 = arith.constant 5.000000e-01 : f32
    %219 = vector.broadcast %cst_107 : f32 to vector<16x128xf32>
    %220 = arith.mulf %219, %218 : vector<16x128xf32>
    %221 = math.tanh %220 : vector<16x128xf32>
    %cst_108 = arith.constant 5.000000e-01 : f32
    %222 = vector.broadcast %cst_108 : f32 to vector<16x128xf32>
    %223 = arith.mulf %222, %221 : vector<16x128xf32>
    %cst_109 = arith.constant 5.000000e-01 : f32
    %224 = vector.broadcast %cst_109 : f32 to vector<16x128xf32>
    %225 = arith.addf %223, %224 : vector<16x128xf32>
    %226 = arith.mulf %215, %194 : vector<16x128xf32>
    %227 = arith.mulf %207, %217 : vector<16x128xf32>
    %228 = arith.addf %226, %227 : vector<16x128xf32>
    %229 = math.tanh %228 : vector<16x128xf32>
    %230 = arith.mulf %225, %229 : vector<16x128xf32>
    %c0_110 = arith.constant 0 : index
    %c0_111 = arith.constant 0 : index
    %231 = vector.load %arg7[%c0_110, %c0_111] : memref<16x128xf32, #tpu.memory_space<vmem>>, vector<16x128xf32>
    tpu.vector_store %arg7[%c0_110, %c0_111], %228 {strides = array<i32>} : memref<16x128xf32, #tpu.memory_space<vmem>>, vector<16x128xf32>,
    %c0_112 = arith.constant 0 : index
    %c0_113 = arith.constant 0 : index
    %232 = vector.load %arg6[%c0_112, %c0_113] : memref<16x128xf32, #tpu.memory_space<vmem>>, vector<16x128xf32>
    tpu.vector_store %arg6[%c0_112, %c0_113], %230 {strides = array<i32>} : memref<16x128xf32, #tpu.memory_space<vmem>>, vector<16x128xf32>,
    %233 = arith.truncf %230 : vector<16x128xf32> to vector<16x128xbf16>
    %234 = arith.index_cast %192 : i32 to index
    %c0_114 = arith.constant 0 : index
    %235 = vector.load %arg5[%234, %c0_114] : memref<128x128xbf16, #tpu.memory_space<vmem>>, vector<16x128xbf16>
    tpu.vector_store %arg5[%234, %c0_114], %233 {strides = array<i32>} : memref<128x128xbf16, #tpu.memory_space<vmem>>, vector<16x128xbf16>,
    %c5_i32 = arith.constant 5 : i32
    %c16_i32_115 = arith.constant 16 : i32
    %236 = arith.muli %c5_i32, %c16_i32_115 : i32
    %237 = tpu.assume_multiple %236, 16 : i32
    %c0_116 = arith.constant 0 : index
    %c0_117 = arith.constant 0 : index
    %238 = vector.load %arg6[%c0_116, %c0_117] : memref<16x128xf32, #tpu.memory_space<vmem>>, vector<16x128xf32>
    %c0_118 = arith.constant 0 : index
    %c0_119 = arith.constant 0 : index
    %239 = vector.load %arg7[%c0_118, %c0_119] : memref<16x128xf32, #tpu.memory_space<vmem>>, vector<16x128xf32>
    %240 = arith.index_cast %237 : i32 to index
    %c0_120 = arith.constant 0 : index
    %241 = vector.load %arg8[%240, %c0_120] : memref<128x512xf32, #tpu.memory_space<vmem>>, vector<16x512xf32>
    %242 = arith.truncf %238 : vector<16x128xf32> to vector<16x128xbf16>
    %cst_121 = arith.constant dense<0.000000e+00> : vector<16x512xf32>
    %243 = tpu.matmul %242, %10, %cst_121 {dimension_numbers = #tpu.dot_dimension_numbers<[1], [0], [0], [1], [0, 0, 1, 1], [], []>} : vector<16x128xbf16>, vector<128x512xbf16>, vector<16x512xf32> -> vector<16x512xf32>
    %244 = arith.addf %241, %243 : vector<16x512xf32>
    %245 = vector.extract_strided_slice %244 {offsets = [0, 0], sizes = [16, 128], strides = [1, 1]} : vector<16x512xf32> to vector<16x128xf32>
    %cst_122 = arith.constant 5.000000e-01 : f32
    %246 = vector.broadcast %cst_122 : f32 to vector<16x128xf32>
    %247 = arith.mulf %246, %245 : vector<16x128xf32>
    %248 = math.tanh %247 : vector<16x128xf32>
    %cst_123 = arith.constant 5.000000e-01 : f32
    %249 = vector.broadcast %cst_123 : f32 to vector<16x128xf32>
    %250 = arith.mulf %249, %248 : vector<16x128xf32>
    %cst_124 = arith.constant 5.000000e-01 : f32
    %251 = vector.broadcast %cst_124 : f32 to vector<16x128xf32>
    %252 = arith.addf %250, %251 : vector<16x128xf32>
    %253 = vector.extract_strided_slice %244 {offsets = [0, 128], sizes = [16, 128], strides = [1, 1]} : vector<16x512xf32> to vector<16x128xf32>
    %cst_125 = arith.constant 5.000000e-01 : f32
    %254 = vector.broadcast %cst_125 : f32 to vector<16x128xf32>
    %255 = arith.mulf %254, %253 : vector<16x128xf32>
    %256 = math.tanh %255 : vector<16x128xf32>
    %cst_126 = arith.constant 5.000000e-01 : f32
    %257 = vector.broadcast %cst_126 : f32 to vector<16x128xf32>
    %258 = arith.mulf %257, %256 : vector<16x128xf32>
    %cst_127 = arith.constant 5.000000e-01 : f32
    %259 = vector.broadcast %cst_127 : f32 to vector<16x128xf32>
    %260 = arith.addf %258, %259 : vector<16x128xf32>
    %261 = vector.extract_strided_slice %244 {offsets = [0, 256], sizes = [16, 128], strides = [1, 1]} : vector<16x512xf32> to vector<16x128xf32>
    %262 = math.tanh %261 : vector<16x128xf32>
    %263 = vector.extract_strided_slice %244 {offsets = [0, 384], sizes = [16, 128], strides = [1, 1]} : vector<16x512xf32> to vector<16x128xf32>
    %cst_128 = arith.constant 5.000000e-01 : f32
    %264 = vector.broadcast %cst_128 : f32 to vector<16x128xf32>
    %265 = arith.mulf %264, %263 : vector<16x128xf32>
    %266 = math.tanh %265 : vector<16x128xf32>
    %cst_129 = arith.constant 5.000000e-01 : f32
    %267 = vector.broadcast %cst_129 : f32 to vector<16x128xf32>
    %268 = arith.mulf %267, %266 : vector<16x128xf32>
    %cst_130 = arith.constant 5.000000e-01 : f32
    %269 = vector.broadcast %cst_130 : f32 to vector<16x128xf32>
    %270 = arith.addf %268, %269 : vector<16x128xf32>
    %271 = arith.mulf %260, %239 : vector<16x128xf32>
    %272 = arith.mulf %252, %262 : vector<16x128xf32>
    %273 = arith.addf %271, %272 : vector<16x128xf32>
    %274 = math.tanh %273 : vector<16x128xf32>
    %275 = arith.mulf %270, %274 : vector<16x128xf32>
    %c0_131 = arith.constant 0 : index
    %c0_132 = arith.constant 0 : index
    %276 = vector.load %arg7[%c0_131, %c0_132] : memref<16x128xf32, #tpu.memory_space<vmem>>, vector<16x128xf32>
    tpu.vector_store %arg7[%c0_131, %c0_132], %273 {strides = array<i32>} : memref<16x128xf32, #tpu.memory_space<vmem>>, vector<16x128xf32>,
    %c0_133 = arith.constant 0 : index
    %c0_134 = arith.constant 0 : index
    %277 = vector.load %arg6[%c0_133, %c0_134] : memref<16x128xf32, #tpu.memory_space<vmem>>, vector<16x128xf32>
    tpu.vector_store %arg6[%c0_133, %c0_134], %275 {strides = array<i32>} : memref<16x128xf32, #tpu.memory_space<vmem>>, vector<16x128xf32>,
    %278 = arith.truncf %275 : vector<16x128xf32> to vector<16x128xbf16>
    %279 = arith.index_cast %237 : i32 to index
    %c0_135 = arith.constant 0 : index
    %280 = vector.load %arg5[%279, %c0_135] : memref<128x128xbf16, #tpu.memory_space<vmem>>, vector<16x128xbf16>
    tpu.vector_store %arg5[%279, %c0_135], %278 {strides = array<i32>} : memref<128x128xbf16, #tpu.memory_space<vmem>>, vector<16x128xbf16>,
    %c6_i32 = arith.constant 6 : i32
    %c16_i32_136 = arith.constant 16 : i32
    %281 = arith.muli %c6_i32, %c16_i32_136 : i32
    %282 = tpu.assume_multiple %281, 16 : i32
    %c0_137 = arith.constant 0 : index
    %c0_138 = arith.constant 0 : index
    %283 = vector.load %arg6[%c0_137, %c0_138] : memref<16x128xf32, #tpu.memory_space<vmem>>, vector<16x128xf32>
    %c0_139 = arith.constant 0 : index
    %c0_140 = arith.constant 0 : index
    %284 = vector.load %arg7[%c0_139, %c0_140] : memref<16x128xf32, #tpu.memory_space<vmem>>, vector<16x128xf32>
    %285 = arith.index_cast %282 : i32 to index
    %c0_141 = arith.constant 0 : index
    %286 = vector.load %arg8[%285, %c0_141] : memref<128x512xf32, #tpu.memory_space<vmem>>, vector<16x512xf32>
    %287 = arith.truncf %283 : vector<16x128xf32> to vector<16x128xbf16>
    %cst_142 = arith.constant dense<0.000000e+00> : vector<16x512xf32>
    %288 = tpu.matmul %287, %10, %cst_142 {dimension_numbers = #tpu.dot_dimension_numbers<[1], [0], [0], [1], [0, 0, 1, 1], [], []>} : vector<16x128xbf16>, vector<128x512xbf16>, vector<16x512xf32> -> vector<16x512xf32>
    %289 = arith.addf %286, %288 : vector<16x512xf32>
    %290 = vector.extract_strided_slice %289 {offsets = [0, 0], sizes = [16, 128], strides = [1, 1]} : vector<16x512xf32> to vector<16x128xf32>
    %cst_143 = arith.constant 5.000000e-01 : f32
    %291 = vector.broadcast %cst_143 : f32 to vector<16x128xf32>
    %292 = arith.mulf %291, %290 : vector<16x128xf32>
    %293 = math.tanh %292 : vector<16x128xf32>
    %cst_144 = arith.constant 5.000000e-01 : f32
    %294 = vector.broadcast %cst_144 : f32 to vector<16x128xf32>
    %295 = arith.mulf %294, %293 : vector<16x128xf32>
    %cst_145 = arith.constant 5.000000e-01 : f32
    %296 = vector.broadcast %cst_145 : f32 to vector<16x128xf32>
    %297 = arith.addf %295, %296 : vector<16x128xf32>
    %298 = vector.extract_strided_slice %289 {offsets = [0, 128], sizes = [16, 128], strides = [1, 1]} : vector<16x512xf32> to vector<16x128xf32>
    %cst_146 = arith.constant 5.000000e-01 : f32
    %299 = vector.broadcast %cst_146 : f32 to vector<16x128xf32>
    %300 = arith.mulf %299, %298 : vector<16x128xf32>
    %301 = math.tanh %300 : vector<16x128xf32>
    %cst_147 = arith.constant 5.000000e-01 : f32
    %302 = vector.broadcast %cst_147 : f32 to vector<16x128xf32>
    %303 = arith.mulf %302, %301 : vector<16x128xf32>
    %cst_148 = arith.constant 5.000000e-01 : f32
    %304 = vector.broadcast %cst_148 : f32 to vector<16x128xf32>
    %305 = arith.addf %303, %304 : vector<16x128xf32>
    %306 = vector.extract_strided_slice %289 {offsets = [0, 256], sizes = [16, 128], strides = [1, 1]} : vector<16x512xf32> to vector<16x128xf32>
    %307 = math.tanh %306 : vector<16x128xf32>
    %308 = vector.extract_strided_slice %289 {offsets = [0, 384], sizes = [16, 128], strides = [1, 1]} : vector<16x512xf32> to vector<16x128xf32>
    %cst_149 = arith.constant 5.000000e-01 : f32
    %309 = vector.broadcast %cst_149 : f32 to vector<16x128xf32>
    %310 = arith.mulf %309, %308 : vector<16x128xf32>
    %311 = math.tanh %310 : vector<16x128xf32>
    %cst_150 = arith.constant 5.000000e-01 : f32
    %312 = vector.broadcast %cst_150 : f32 to vector<16x128xf32>
    %313 = arith.mulf %312, %311 : vector<16x128xf32>
    %cst_151 = arith.constant 5.000000e-01 : f32
    %314 = vector.broadcast %cst_151 : f32 to vector<16x128xf32>
    %315 = arith.addf %313, %314 : vector<16x128xf32>
    %316 = arith.mulf %305, %284 : vector<16x128xf32>
    %317 = arith.mulf %297, %307 : vector<16x128xf32>
    %318 = arith.addf %316, %317 : vector<16x128xf32>
    %319 = math.tanh %318 : vector<16x128xf32>
    %320 = arith.mulf %315, %319 : vector<16x128xf32>
    %c0_152 = arith.constant 0 : index
    %c0_153 = arith.constant 0 : index
    %321 = vector.load %arg7[%c0_152, %c0_153] : memref<16x128xf32, #tpu.memory_space<vmem>>, vector<16x128xf32>
    tpu.vector_store %arg7[%c0_152, %c0_153], %318 {strides = array<i32>} : memref<16x128xf32, #tpu.memory_space<vmem>>, vector<16x128xf32>,
    %c0_154 = arith.constant 0 : index
    %c0_155 = arith.constant 0 : index
    %322 = vector.load %arg6[%c0_154, %c0_155] : memref<16x128xf32, #tpu.memory_space<vmem>>, vector<16x128xf32>
    tpu.vector_store %arg6[%c0_154, %c0_155], %320 {strides = array<i32>} : memref<16x128xf32, #tpu.memory_space<vmem>>, vector<16x128xf32>,
    %323 = arith.truncf %320 : vector<16x128xf32> to vector<16x128xbf16>
    %324 = arith.index_cast %282 : i32 to index
    %c0_156 = arith.constant 0 : index
    %325 = vector.load %arg5[%324, %c0_156] : memref<128x128xbf16, #tpu.memory_space<vmem>>, vector<16x128xbf16>
    tpu.vector_store %arg5[%324, %c0_156], %323 {strides = array<i32>} : memref<128x128xbf16, #tpu.memory_space<vmem>>, vector<16x128xbf16>,
    %c7_i32 = arith.constant 7 : i32
    %c16_i32_157 = arith.constant 16 : i32
    %326 = arith.muli %c7_i32, %c16_i32_157 : i32
    %327 = tpu.assume_multiple %326, 16 : i32
    %c0_158 = arith.constant 0 : index
    %c0_159 = arith.constant 0 : index
    %328 = vector.load %arg6[%c0_158, %c0_159] : memref<16x128xf32, #tpu.memory_space<vmem>>, vector<16x128xf32>
    %c0_160 = arith.constant 0 : index
    %c0_161 = arith.constant 0 : index
    %329 = vector.load %arg7[%c0_160, %c0_161] : memref<16x128xf32, #tpu.memory_space<vmem>>, vector<16x128xf32>
    %330 = arith.index_cast %327 : i32 to index
    %c0_162 = arith.constant 0 : index
    %331 = vector.load %arg8[%330, %c0_162] : memref<128x512xf32, #tpu.memory_space<vmem>>, vector<16x512xf32>
    %332 = arith.truncf %328 : vector<16x128xf32> to vector<16x128xbf16>
    %cst_163 = arith.constant dense<0.000000e+00> : vector<16x512xf32>
    %333 = tpu.matmul %332, %10, %cst_163 {dimension_numbers = #tpu.dot_dimension_numbers<[1], [0], [0], [1], [0, 0, 1, 1], [], []>} : vector<16x128xbf16>, vector<128x512xbf16>, vector<16x512xf32> -> vector<16x512xf32>
    %334 = arith.addf %331, %333 : vector<16x512xf32>
    %335 = vector.extract_strided_slice %334 {offsets = [0, 0], sizes = [16, 128], strides = [1, 1]} : vector<16x512xf32> to vector<16x128xf32>
    %cst_164 = arith.constant 5.000000e-01 : f32
    %336 = vector.broadcast %cst_164 : f32 to vector<16x128xf32>
    %337 = arith.mulf %336, %335 : vector<16x128xf32>
    %338 = math.tanh %337 : vector<16x128xf32>
    %cst_165 = arith.constant 5.000000e-01 : f32
    %339 = vector.broadcast %cst_165 : f32 to vector<16x128xf32>
    %340 = arith.mulf %339, %338 : vector<16x128xf32>
    %cst_166 = arith.constant 5.000000e-01 : f32
    %341 = vector.broadcast %cst_166 : f32 to vector<16x128xf32>
    %342 = arith.addf %340, %341 : vector<16x128xf32>
    %343 = vector.extract_strided_slice %334 {offsets = [0, 128], sizes = [16, 128], strides = [1, 1]} : vector<16x512xf32> to vector<16x128xf32>
    %cst_167 = arith.constant 5.000000e-01 : f32
    %344 = vector.broadcast %cst_167 : f32 to vector<16x128xf32>
    %345 = arith.mulf %344, %343 : vector<16x128xf32>
    %346 = math.tanh %345 : vector<16x128xf32>
    %cst_168 = arith.constant 5.000000e-01 : f32
    %347 = vector.broadcast %cst_168 : f32 to vector<16x128xf32>
    %348 = arith.mulf %347, %346 : vector<16x128xf32>
    %cst_169 = arith.constant 5.000000e-01 : f32
    %349 = vector.broadcast %cst_169 : f32 to vector<16x128xf32>
    %350 = arith.addf %348, %349 : vector<16x128xf32>
    %351 = vector.extract_strided_slice %334 {offsets = [0, 256], sizes = [16, 128], strides = [1, 1]} : vector<16x512xf32> to vector<16x128xf32>
    %352 = math.tanh %351 : vector<16x128xf32>
    %353 = vector.extract_strided_slice %334 {offsets = [0, 384], sizes = [16, 128], strides = [1, 1]} : vector<16x512xf32> to vector<16x128xf32>
    %cst_170 = arith.constant 5.000000e-01 : f32
    %354 = vector.broadcast %cst_170 : f32 to vector<16x128xf32>
    %355 = arith.mulf %354, %353 : vector<16x128xf32>
    %356 = math.tanh %355 : vector<16x128xf32>
    %cst_171 = arith.constant 5.000000e-01 : f32
    %357 = vector.broadcast %cst_171 : f32 to vector<16x128xf32>
    %358 = arith.mulf %357, %356 : vector<16x128xf32>
    %cst_172 = arith.constant 5.000000e-01 : f32
    %359 = vector.broadcast %cst_172 : f32 to vector<16x128xf32>
    %360 = arith.addf %358, %359 : vector<16x128xf32>
    %361 = arith.mulf %350, %329 : vector<16x128xf32>
    %362 = arith.mulf %342, %352 : vector<16x128xf32>
    %363 = arith.addf %361, %362 : vector<16x128xf32>
    %364 = math.tanh %363 : vector<16x128xf32>
    %365 = arith.mulf %360, %364 : vector<16x128xf32>
    %c0_173 = arith.constant 0 : index
    %c0_174 = arith.constant 0 : index
    %366 = vector.load %arg7[%c0_173, %c0_174] : memref<16x128xf32, #tpu.memory_space<vmem>>, vector<16x128xf32>
    tpu.vector_store %arg7[%c0_173, %c0_174], %363 {strides = array<i32>} : memref<16x128xf32, #tpu.memory_space<vmem>>, vector<16x128xf32>,
    %c0_175 = arith.constant 0 : index
    %c0_176 = arith.constant 0 : index
    %367 = vector.load %arg6[%c0_175, %c0_176] : memref<16x128xf32, #tpu.memory_space<vmem>>, vector<16x128xf32>
    tpu.vector_store %arg6[%c0_175, %c0_176], %365 {strides = array<i32>} : memref<16x128xf32, #tpu.memory_space<vmem>>, vector<16x128xf32>,
    %368 = arith.truncf %365 : vector<16x128xf32> to vector<16x128xbf16>
    %369 = arith.index_cast %327 : i32 to index
    %c0_177 = arith.constant 0 : index
    %370 = vector.load %arg5[%369, %c0_177] : memref<128x128xbf16, #tpu.memory_space<vmem>>, vector<16x128xbf16>
    tpu.vector_store %arg5[%369, %c0_177], %368 {strides = array<i32>} : memref<128x128xbf16, #tpu.memory_space<vmem>>, vector<16x128xbf16>,
    %c8_i32 = arith.constant 8 : i32
    return
  }
  func.func @transform_0(%arg0: i32) -> (i32, i32) {
    %c0_i32 = arith.constant 0 : i32
    %c0_i32_0 = arith.constant 0 : i32
    return %arg0, %c0_i32 : i32, i32
  }
  func.func @transform_1(%arg0: i32) -> (i32, i32) {
    %c0_i32 = arith.constant 0 : i32
    %c0_i32_0 = arith.constant 0 : i32
    %c0_i32_1 = arith.constant 0 : i32
    return %c0_i32, %c0_i32_0 : i32, i32
  }
  func.func @transform_2(%arg0: i32) -> (i32, i32) {
    %c0_i32 = arith.constant 0 : i32
    %c0_i32_0 = arith.constant 0 : i32
    %c0_i32_1 = arith.constant 0 : i32
    return %c0_i32, %c0_i32_0 : i32, i32
  }
  func.func @transform_3(%arg0: i32) -> (i32, i32) {
    %c0_i32 = arith.constant 0 : i32
    %c0_i32_0 = arith.constant 0 : i32
    %c0_i32_1 = arith.constant 0 : i32
    return %c0_i32, %c0_i32_0 : i32, i32
  }
  func.func @transform_4(%arg0: i32) -> (i32, i32) {
    %c0_i32 = arith.constant 0 : i32
    %c0_i32_0 = arith.constant 0 : i32
    return %arg0, %c0_i32 : i32, i32
  }
  func.func @transform_5(%arg0: i32) -> (i32, i32) {
    %c0_i32 = arith.constant 0 : i32
    %c0_i32_0 = arith.constant 0 : i32
    %c0_i32_1 = arith.constant 0 : i32
    return %c0_i32, %c0_i32_0 : i32, i32
  }
  func.func @transform_6(%arg0: i32) -> (i32, i32) {
    %c0_i32 = arith.constant 0 : i32
    %c0_i32_0 = arith.constant 0 : i32
    %c0_i32_1 = arith.constant 0 : i32
    return %c0_i32, %c0_i32_0 : i32, i32
  }
}

module attributes {stable_mosaic.version = 11 : i64} {
  func.func @kernel(%arg0: i32, %arg1: memref<128x128xbf16, #tpu.memory_space<vmem>>, %arg2: memref<128x512xbf16, #tpu.memory_space<vmem>>, %arg3: memref<128x512xbf16, #tpu.memory_space<vmem>>, %arg4: memref<1x512xf32, #tpu.memory_space<vmem>>, %arg5: memref<128x128xbf16, #tpu.memory_space<vmem>>, %arg6: memref<16x128xf32, #tpu.memory_space<vmem>>, %arg7: memref<16x128xf32, #tpu.memory_space<vmem>>, %arg8: memref<128x512xf32, #tpu.memory_space<vmem>>) attributes {dimension_semantics = [#tpu.dimension_semantics<arbitrary>], iteration_bounds = array<i64: 1>, scalar_prefetch = 0 : i64, scratch_operands = 1 : i64, tpu.core_type = #tpu.core_type<tc>, window_params = [{transform_indices = @transform_0, window_bounds = array<i64: 128, 128>}, {pipeline_mode = #tpu.pipeline_mode<synchronous>, transform_indices = @transform_1, window_bounds = array<i64: 128, 512>}, {pipeline_mode = #tpu.pipeline_mode<synchronous>, transform_indices = @transform_2, window_bounds = array<i64: 128, 512>}, {pipeline_mode = #tpu.pipeline_mode<synchronous>, transform_indices = @transform_3, window_bounds = array<i64: 1, 512>}, {transform_indices = @transform_4, window_bounds = array<i64: 128, 128>}, {pipeline_mode = #tpu.pipeline_mode<synchronous>, transform_indices = @transform_5, window_bounds = array<i64: 16, 128>}, {pipeline_mode = #tpu.pipeline_mode<synchronous>, transform_indices = @transform_6, window_bounds = array<i64: 16, 128>}]} {
    %c0_i32 = arith.constant 0 : i32
    %0 = arith.cmpi eq, %arg0, %c0_i32 : i32
    %1 = arith.extui %0 : i1 to i32
    %c0_i32_0 = arith.constant 0 : i32
    %2 = arith.cmpi ne, %1, %c0_i32_0 : i32
    scf.if %2 {
      %cst_178 = arith.constant 0.000000e+00 : f32
      %371 = vector.broadcast %cst_178 : f32 to vector<16x128xf32>
      %c0_179 = arith.constant 0 : index
      %c0_180 = arith.constant 0 : index
      %372 = vector.load %arg6[%c0_179, %c0_180] : memref<16x128xf32, #tpu.memory_space<vmem>>, vector<16x128xf32>
      tpu.vector_store %arg6[%c0_179, %c0_180], %371 {strides = array<i32>} : memref<16x128xf32, #tpu.memory_space<vmem>>, vector<16x128xf32>,
      %cst_181 = arith.constant 0.000000e+00 : f32
      %373 = vector.broadcast %cst_181 : f32 to vector<16x128xf32>
      %c0_182 = arith.constant 0 : index
      %c0_183 = arith.constant 0 : index
      %374 = vector.load %arg7[%c0_182, %c0_183] : memref<16x128xf32, #tpu.memory_space<vmem>>, vector<16x128xf32>
      tpu.vector_store %arg7[%c0_182, %c0_183], %373 {strides = array<i32>} : memref<16x128xf32, #tpu.memory_space<vmem>>, vector<16x128xf32>,
    } else {
    }
    %c0 = arith.constant 0 : index
    %c0_1 = arith.constant 0 : index
    %3 = vector.load %arg1[%c0, %c0_1] : memref<128x128xbf16, #tpu.memory_space<vmem>>, vector<128x128xbf16>
    %c0_2 = arith.constant 0 : index
    %c0_3 = arith.constant 0 : index
    %4 = vector.load %arg2[%c0_2, %c0_3] : memref<128x512xbf16, #tpu.memory_space<vmem>>, vector<128x512xbf16>
    %cst = arith.constant dense<0.000000e+00> : vector<128x512xf32>
    %5 = tpu.matmul %3, %4, %cst {dimension_numbers = #tpu.dot_dimension_numbers<[1], [0], [0], [1], [0, 0, 1, 1], [], []>} : vector<128x128xbf16>, vector<128x512xbf16>, vector<128x512xf32> -> vector<128x512xf32>
    %c0_4 = arith.constant 0 : index
    %c0_5 = arith.constant 0 : index
    %6 = vector.load %arg4[%c0_4, %c0_5] : memref<1x512xf32, #tpu.memory_space<vmem>>, vector<1x512xf32>
    %7 = vector.broadcast %6 : vector<1x512xf32> to vector<128x512xf32>
    %8 = arith.addf %5, %7 : vector<128x512xf32>
    %c0_6 = arith.constant 0 : index
    %c0_7 = arith.constant 0 : index
    %9 = vector.load %arg8[%c0_6, %c0_7] : memref<128x512xf32, #tpu.memory_space<vmem>>, vector<128x512xf32>
    tpu.vector_store %arg8[%c0_6, %c0_7], %8 {strides = array<i32>} : memref<128x512xf32, #tpu.memory_space<vmem>>, vector<128x512xf32>,
    %c0_8 = arith.constant 0 : index
    %c0_9 = arith.constant 0 : index
    %10 = vector.load %arg3[%c0_8, %c0_9] : memref<128x512xbf16, #tpu.memory_space<vmem>>, vector<128x512xbf16>
    %c0_i32_10 = arith.constant 0 : i32
    %c16_i32 = arith.constant 16 : i32
    %11 = arith.muli %c0_i32_10, %c16_i32 : i32
    %12 = tpu.assume_multiple %11, 16 : i32
    %c0_11 = arith.constant 0 : index
    %c0_12 = arith.constant 0 : index
    %13 = vector.load %arg6[%c0_11, %c0_12] : memref<16x128xf32, #tpu.memory_space<vmem>>, vector<16x128xf32>
    %c0_13 = arith.constant 0 : index
    %c0_14 = arith.constant 0 : index
    %14 = vector.load %arg7[%c0_13, %c0_14] : memref<16x128xf32, #tpu.memory_space<vmem>>, vector<16x128xf32>
    %15 = arith.index_cast %12 : i32 to index
    %c0_15 = arith.constant 0 : index
    %16 = vector.load %arg8[%15, %c0_15] : memref<128x512xf32, #tpu.memory_space<vmem>>, vector<16x512xf32>
    %17 = arith.truncf %13 : vector<16x128xf32> to vector<16x128xbf16>
    %cst_16 = arith.constant dense<0.000000e+00> : vector<16x512xf32>
    %18 = tpu.matmul %17, %10, %cst_16 {dimension_numbers = #tpu.dot_dimension_numbers<[1], [0], [0], [1], [0, 0, 1, 1], [], []>} : vector<16x128xbf16>, vector<128x512xbf16>, vector<16x512xf32> -> vector<16x512xf32>
    %19 = arith.addf %16, %18 : vector<16x512xf32>
    %20 = vector.extract_strided_slice %19 {offsets = [0, 0], sizes = [16, 128], strides = [1, 1]} : vector<16x512xf32> to vector<16x128xf32>
    %cst_17 = arith.constant 5.000000e-01 : f32
    %21 = vector.broadcast %cst_17 : f32 to vector<16x128xf32>
    %22 = arith.mulf %21, %20 : vector<16x128xf32>
    %23 = math.tanh %22 : vector<16x128xf32>
    %cst_18 = arith.constant 5.000000e-01 : f32
    %24 = vector.broadcast %cst_18 : f32 to vector<16x128xf32>
    %25 = arith.mulf %24, %23 : vector<16x128xf32>
    %cst_19 = arith.constant 5.000000e-01 : f32
    %26 = vector.broadcast %cst_19 : f32 to vector<16x128xf32>
    %27 = arith.addf %25, %26 : vector<16x128xf32>
    %28 = vector.extract_strided_slice %19 {offsets = [0, 128], sizes = [16, 128], strides = [1, 1]} : vector<16x512xf32> to vector<16x128xf32>
    %cst_20 = arith.constant 5.000000e-01 : f32
    %29 = vector.broadcast %cst_20 : f32 to vector<16x128xf32>
    %30 = arith.mulf %29, %28 : vector<16x128xf32>
    %31 = math.tanh %30 : vector<16x128xf32>
    %cst_21 = arith.constant 5.000000e-01 : f32
    %32 = vector.broadcast %cst_21 : f32 to vector<16x128xf32>
    %33 = arith.mulf %32, %31 : vector<16x128xf32>
    %cst_22 = arith.constant 5.000000e-01 : f32
    %34 = vector.broadcast %cst_22 : f32 to vector<16x128xf32>
    %35 = arith.addf %33, %34 : vector<16x128xf32>
    %36 = vector.extract_strided_slice %19 {offsets = [0, 256], sizes = [16, 128], strides = [1, 1]} : vector<16x512xf32> to vector<16x128xf32>
    %37 = math.tanh %36 : vector<16x128xf32>
    %38 = vector.extract_strided_slice %19 {offsets = [0, 384], sizes = [16, 128], strides = [1, 1]} : vector<16x512xf32> to vector<16x128xf32>
    %cst_23 = arith.constant 5.000000e-01 : f32
    %39 = vector.broadcast %cst_23 : f32 to vector<16x128xf32>
    %40 = arith.mulf %39, %38 : vector<16x128xf32>
    %41 = math.tanh %40 : vector<16x128xf32>
    %cst_24 = arith.constant 5.000000e-01 : f32
    %42 = vector.broadcast %cst_24 : f32 to vector<16x128xf32>
    %43 = arith.mulf %42, %41 : vector<16x128xf32>
    %cst_25 = arith.constant 5.000000e-01 : f32
    %44 = vector.broadcast %cst_25 : f32 to vector<16x128xf32>
    %45 = arith.addf %43, %44 : vector<16x128xf32>
    %46 = arith.mulf %35, %14 : vector<16x128xf32>
    %47 = arith.mulf %27, %37 : vector<16x128xf32>
    %48 = arith.addf %46, %47 : vector<16x128xf32>
    %49 = math.tanh %48 : vector<16x128xf32>
    %50 = arith.mulf %45, %49 : vector<16x128xf32>
    %c0_26 = arith.constant 0 : index
    %c0_27 = arith.constant 0 : index
    %51 = vector.load %arg7[%c0_26, %c0_27] : memref<16x128xf32, #tpu.memory_space<vmem>>, vector<16x128xf32>
    tpu.vector_store %arg7[%c0_26, %c0_27], %48 {strides = array<i32>} : memref<16x128xf32, #tpu.memory_space<vmem>>, vector<16x128xf32>,
    %c0_28 = arith.constant 0 : index
    %c0_29 = arith.constant 0 : index
    %52 = vector.load %arg6[%c0_28, %c0_29] : memref<16x128xf32, #tpu.memory_space<vmem>>, vector<16x128xf32>
    tpu.vector_store %arg6[%c0_28, %c0_29], %50 {strides = array<i32>} : memref<16x128xf32, #tpu.memory_space<vmem>>, vector<16x128xf32>,
    %53 = arith.truncf %50 : vector<16x128xf32> to vector<16x128xbf16>
    %54 = arith.index_cast %12 : i32 to index
    %c0_30 = arith.constant 0 : index
    %55 = vector.load %arg5[%54, %c0_30] : memref<128x128xbf16, #tpu.memory_space<vmem>>, vector<16x128xbf16>
    tpu.vector_store %arg5[%54, %c0_30], %53 {strides = array<i32>} : memref<128x128xbf16, #tpu.memory_space<vmem>>, vector<16x128xbf16>,
    %c1_i32 = arith.constant 1 : i32
    %c16_i32_31 = arith.constant 16 : i32
    %56 = arith.muli %c1_i32, %c16_i32_31 : i32
    %57 = tpu.assume_multiple %56, 16 : i32
    %c0_32 = arith.constant 0 : index
    %c0_33 = arith.constant 0 : index
    %58 = vector.load %arg6[%c0_32, %c0_33] : memref<16x128xf32, #tpu.memory_space<vmem>>, vector<16x128xf32>
    %c0_34 = arith.constant 0 : index
    %c0_35 = arith.constant 0 : index
    %59 = vector.load %arg7[%c0_34, %c0_35] : memref<16x128xf32, #tpu.memory_space<vmem>>, vector<16x128xf32>
    %60 = arith.index_cast %57 : i32 to index
    %c0_36 = arith.constant 0 : index
    %61 = vector.load %arg8[%60, %c0_36] : memref<128x512xf32, #tpu.memory_space<vmem>>, vector<16x512xf32>
    %62 = arith.truncf %58 : vector<16x128xf32> to vector<16x128xbf16>
    %cst_37 = arith.constant dense<0.000000e+00> : vector<16x512xf32>
    %63 = tpu.matmul %62, %10, %cst_37 {dimension_numbers = #tpu.dot_dimension_numbers<[1], [0], [0], [1], [0, 0, 1, 1], [], []>} : vector<16x128xbf16>, vector<128x512xbf16>, vector<16x512xf32> -> vector<16x512xf32>
    %64 = arith.addf %61, %63 : vector<16x512xf32>
    %65 = vector.extract_strided_slice %64 {offsets = [0, 0], sizes = [16, 128], strides = [1, 1]} : vector<16x512xf32> to vector<16x128xf32>
    %cst_38 = arith.constant 5.000000e-01 : f32
    %66 = vector.broadcast %cst_38 : f32 to vector<16x128xf32>
    %67 = arith.mulf %66, %65 : vector<16x128xf32>
    %68 = math.tanh %67 : vector<16x128xf32>
    %cst_39 = arith.constant 5.000000e-01 : f32
    %69 = vector.broadcast %cst_39 : f32 to vector<16x128xf32>
    %70 = arith.mulf %69, %68 : vector<16x128xf32>
    %cst_40 = arith.constant 5.000000e-01 : f32
    %71 = vector.broadcast %cst_40 : f32 to vector<16x128xf32>
    %72 = arith.addf %70, %71 : vector<16x128xf32>
    %73 = vector.extract_strided_slice %64 {offsets = [0, 128], sizes = [16, 128], strides = [1, 1]} : vector<16x512xf32> to vector<16x128xf32>
    %cst_41 = arith.constant 5.000000e-01 : f32
    %74 = vector.broadcast %cst_41 : f32 to vector<16x128xf32>
    %75 = arith.mulf %74, %73 : vector<16x128xf32>
    %76 = math.tanh %75 : vector<16x128xf32>
    %cst_42 = arith.constant 5.000000e-01 : f32
    %77 = vector.broadcast %cst_42 : f32 to vector<16x128xf32>
    %78 = arith.mulf %77, %76 : vector<16x128xf32>
    %cst_43 = arith.constant 5.000000e-01 : f32
    %79 = vector.broadcast %cst_43 : f32 to vector<16x128xf32>
    %80 = arith.addf %78, %79 : vector<16x128xf32>
    %81 = vector.extract_strided_slice %64 {offsets = [0, 256], sizes = [16, 128], strides = [1, 1]} : vector<16x512xf32> to vector<16x128xf32>
    %82 = math.tanh %81 : vector<16x128xf32>
    %83 = vector.extract_strided_slice %64 {offsets = [0, 384], sizes = [16, 128], strides = [1, 1]} : vector<16x512xf32> to vector<16x128xf32>
    %cst_44 = arith.constant 5.000000e-01 : f32
    %84 = vector.broadcast %cst_44 : f32 to vector<16x128xf32>
    %85 = arith.mulf %84, %83 : vector<16x128xf32>
    %86 = math.tanh %85 : vector<16x128xf32>
    %cst_45 = arith.constant 5.000000e-01 : f32
    %87 = vector.broadcast %cst_45 : f32 to vector<16x128xf32>
    %88 = arith.mulf %87, %86 : vector<16x128xf32>
    %cst_46 = arith.constant 5.000000e-01 : f32
    %89 = vector.broadcast %cst_46 : f32 to vector<16x128xf32>
    %90 = arith.addf %88, %89 : vector<16x128xf32>
    %91 = arith.mulf %80, %59 : vector<16x128xf32>
    %92 = arith.mulf %72, %82 : vector<16x128xf32>
    %93 = arith.addf %91, %92 : vector<16x128xf32>
    %94 = math.tanh %93 : vector<16x128xf32>
    %95 = arith.mulf %90, %94 : vector<16x128xf32>
    %c0_47 = arith.constant 0 : index
    %c0_48 = arith.constant 0 : index
    %96 = vector.load %arg7[%c0_47, %c0_48] : memref<16x128xf32, #tpu.memory_space<vmem>>, vector<16x128xf32>
    tpu.vector_store %arg7[%c0_47, %c0_48], %93 {strides = array<i32>} : memref<16x128xf32, #tpu.memory_space<vmem>>, vector<16x128xf32>,
    %c0_49 = arith.constant 0 : index
    %c0_50 = arith.constant 0 : index
    %97 = vector.load %arg6[%c0_49, %c0_50] : memref<16x128xf32, #tpu.memory_space<vmem>>, vector<16x128xf32>
    tpu.vector_store %arg6[%c0_49, %c0_50], %95 {strides = array<i32>} : memref<16x128xf32, #tpu.memory_space<vmem>>, vector<16x128xf32>,
    %98 = arith.truncf %95 : vector<16x128xf32> to vector<16x128xbf16>
    %99 = arith.index_cast %57 : i32 to index
    %c0_51 = arith.constant 0 : index
    %100 = vector.load %arg5[%99, %c0_51] : memref<128x128xbf16, #tpu.memory_space<vmem>>, vector<16x128xbf16>
    tpu.vector_store %arg5[%99, %c0_51], %98 {strides = array<i32>} : memref<128x128xbf16, #tpu.memory_space<vmem>>, vector<16x128xbf16>,
    %c2_i32 = arith.constant 2 : i32
    %c16_i32_52 = arith.constant 16 : i32
    %101 = arith.muli %c2_i32, %c16_i32_52 : i32
    %102 = tpu.assume_multiple %101, 16 : i32
    %c0_53 = arith.constant 0 : index
    %c0_54 = arith.constant 0 : index
    %103 = vector.load %arg6[%c0_53, %c0_54] : memref<16x128xf32, #tpu.memory_space<vmem>>, vector<16x128xf32>
    %c0_55 = arith.constant 0 : index
    %c0_56 = arith.constant 0 : index
    %104 = vector.load %arg7[%c0_55, %c0_56] : memref<16x128xf32, #tpu.memory_space<vmem>>, vector<16x128xf32>
    %105 = arith.index_cast %102 : i32 to index
    %c0_57 = arith.constant 0 : index
    %106 = vector.load %arg8[%105, %c0_57] : memref<128x512xf32, #tpu.memory_space<vmem>>, vector<16x512xf32>
    %107 = arith.truncf %103 : vector<16x128xf32> to vector<16x128xbf16>
    %cst_58 = arith.constant dense<0.000000e+00> : vector<16x512xf32>
    %108 = tpu.matmul %107, %10, %cst_58 {dimension_numbers = #tpu.dot_dimension_numbers<[1], [0], [0], [1], [0, 0, 1, 1], [], []>} : vector<16x128xbf16>, vector<128x512xbf16>, vector<16x512xf32> -> vector<16x512xf32>
    %109 = arith.addf %106, %108 : vector<16x512xf32>
    %110 = vector.extract_strided_slice %109 {offsets = [0, 0], sizes = [16, 128], strides = [1, 1]} : vector<16x512xf32> to vector<16x128xf32>
    %cst_59 = arith.constant 5.000000e-01 : f32
    %111 = vector.broadcast %cst_59 : f32 to vector<16x128xf32>
    %112 = arith.mulf %111, %110 : vector<16x128xf32>
    %113 = math.tanh %112 : vector<16x128xf32>
    %cst_60 = arith.constant 5.000000e-01 : f32
    %114 = vector.broadcast %cst_60 : f32 to vector<16x128xf32>
    %115 = arith.mulf %114, %113 : vector<16x128xf32>
    %cst_61 = arith.constant 5.000000e-01 : f32
    %116 = vector.broadcast %cst_61 : f32 to vector<16x128xf32>
    %117 = arith.addf %115, %116 : vector<16x128xf32>
    %118 = vector.extract_strided_slice %109 {offsets = [0, 128], sizes = [16, 128], strides = [1, 1]} : vector<16x512xf32> to vector<16x128xf32>
    %cst_62 = arith.constant 5.000000e-01 : f32
    %119 = vector.broadcast %cst_62 : f32 to vector<16x128xf32>
    %120 = arith.mulf %119, %118 : vector<16x128xf32>
    %121 = math.tanh %120 : vector<16x128xf32>
    %cst_63 = arith.constant 5.000000e-01 : f32
    %122 = vector.broadcast %cst_63 : f32 to vector<16x128xf32>
    %123 = arith.mulf %122, %121 : vector<16x128xf32>
    %cst_64 = arith.constant 5.000000e-01 : f32
    %124 = vector.broadcast %cst_64 : f32 to vector<16x128xf32>
    %125 = arith.addf %123, %124 : vector<16x128xf32>
    %126 = vector.extract_strided_slice %109 {offsets = [0, 256], sizes = [16, 128], strides = [1, 1]} : vector<16x512xf32> to vector<16x128xf32>
    %127 = math.tanh %126 : vector<16x128xf32>
    %128 = vector.extract_strided_slice %109 {offsets = [0, 384], sizes = [16, 128], strides = [1, 1]} : vector<16x512xf32> to vector<16x128xf32>
    %cst_65 = arith.constant 5.000000e-01 : f32
    %129 = vector.broadcast %cst_65 : f32 to vector<16x128xf32>
    %130 = arith.mulf %129, %128 : vector<16x128xf32>
    %131 = math.tanh %130 : vector<16x128xf32>
    %cst_66 = arith.constant 5.000000e-01 : f32
    %132 = vector.broadcast %cst_66 : f32 to vector<16x128xf32>
    %133 = arith.mulf %132, %131 : vector<16x128xf32>
    %cst_67 = arith.constant 5.000000e-01 : f32
    %134 = vector.broadcast %cst_67 : f32 to vector<16x128xf32>
    %135 = arith.addf %133, %134 : vector<16x128xf32>
    %136 = arith.mulf %125, %104 : vector<16x128xf32>
    %137 = arith.mulf %117, %127 : vector<16x128xf32>
    %138 = arith.addf %136, %137 : vector<16x128xf32>
    %139 = math.tanh %138 : vector<16x128xf32>
    %140 = arith.mulf %135, %139 : vector<16x128xf32>
    %c0_68 = arith.constant 0 : index
    %c0_69 = arith.constant 0 : index
    %141 = vector.load %arg7[%c0_68, %c0_69] : memref<16x128xf32, #tpu.memory_space<vmem>>, vector<16x128xf32>
    tpu.vector_store %arg7[%c0_68, %c0_69], %138 {strides = array<i32>} : memref<16x128xf32, #tpu.memory_space<vmem>>, vector<16x128xf32>,
    %c0_70 = arith.constant 0 : index
    %c0_71 = arith.constant 0 : index
    %142 = vector.load %arg6[%c0_70, %c0_71] : memref<16x128xf32, #tpu.memory_space<vmem>>, vector<16x128xf32>
    tpu.vector_store %arg6[%c0_70, %c0_71], %140 {strides = array<i32>} : memref<16x128xf32, #tpu.memory_space<vmem>>, vector<16x128xf32>,
    %143 = arith.truncf %140 : vector<16x128xf32> to vector<16x128xbf16>
    %144 = arith.index_cast %102 : i32 to index
    %c0_72 = arith.constant 0 : index
    %145 = vector.load %arg5[%144, %c0_72] : memref<128x128xbf16, #tpu.memory_space<vmem>>, vector<16x128xbf16>
    tpu.vector_store %arg5[%144, %c0_72], %143 {strides = array<i32>} : memref<128x128xbf16, #tpu.memory_space<vmem>>, vector<16x128xbf16>,
    %c3_i32 = arith.constant 3 : i32
    %c16_i32_73 = arith.constant 16 : i32
    %146 = arith.muli %c3_i32, %c16_i32_73 : i32
    %147 = tpu.assume_multiple %146, 16 : i32
    %c0_74 = arith.constant 0 : index
    %c0_75 = arith.constant 0 : index
    %148 = vector.load %arg6[%c0_74, %c0_75] : memref<16x128xf32, #tpu.memory_space<vmem>>, vector<16x128xf32>
    %c0_76 = arith.constant 0 : index
    %c0_77 = arith.constant 0 : index
    %149 = vector.load %arg7[%c0_76, %c0_77] : memref<16x128xf32, #tpu.memory_space<vmem>>, vector<16x128xf32>
    %150 = arith.index_cast %147 : i32 to index
    %c0_78 = arith.constant 0 : index
    %151 = vector.load %arg8[%150, %c0_78] : memref<128x512xf32, #tpu.memory_space<vmem>>, vector<16x512xf32>
    %152 = arith.truncf %148 : vector<16x128xf32> to vector<16x128xbf16>
    %cst_79 = arith.constant dense<0.000000e+00> : vector<16x512xf32>
    %153 = tpu.matmul %152, %10, %cst_79 {dimension_numbers = #tpu.dot_dimension_numbers<[1], [0], [0], [1], [0, 0, 1, 1], [], []>} : vector<16x128xbf16>, vector<128x512xbf16>, vector<16x512xf32> -> vector<16x512xf32>
    %154 = arith.addf %151, %153 : vector<16x512xf32>
    %155 = vector.extract_strided_slice %154 {offsets = [0, 0], sizes = [16, 128], strides = [1, 1]} : vector<16x512xf32> to vector<16x128xf32>
    %cst_80 = arith.constant 5.000000e-01 : f32
    %156 = vector.broadcast %cst_80 : f32 to vector<16x128xf32>
    %157 = arith.mulf %156, %155 : vector<16x128xf32>
    %158 = math.tanh %157 : vector<16x128xf32>
    %cst_81 = arith.constant 5.000000e-01 : f32
    %159 = vector.broadcast %cst_81 : f32 to vector<16x128xf32>
    %160 = arith.mulf %159, %158 : vector<16x128xf32>
    %cst_82 = arith.constant 5.000000e-01 : f32
    %161 = vector.broadcast %cst_82 : f32 to vector<16x128xf32>
    %162 = arith.addf %160, %161 : vector<16x128xf32>
    %163 = vector.extract_strided_slice %154 {offsets = [0, 128], sizes = [16, 128], strides = [1, 1]} : vector<16x512xf32> to vector<16x128xf32>
    %cst_83 = arith.constant 5.000000e-01 : f32
    %164 = vector.broadcast %cst_83 : f32 to vector<16x128xf32>
    %165 = arith.mulf %164, %163 : vector<16x128xf32>
    %166 = math.tanh %165 : vector<16x128xf32>
    %cst_84 = arith.constant 5.000000e-01 : f32
    %167 = vector.broadcast %cst_84 : f32 to vector<16x128xf32>
    %168 = arith.mulf %167, %166 : vector<16x128xf32>
    %cst_85 = arith.constant 5.000000e-01 : f32
    %169 = vector.broadcast %cst_85 : f32 to vector<16x128xf32>
    %170 = arith.addf %168, %169 : vector<16x128xf32>
    %171 = vector.extract_strided_slice %154 {offsets = [0, 256], sizes = [16, 128], strides = [1, 1]} : vector<16x512xf32> to vector<16x128xf32>
    %172 = math.tanh %171 : vector<16x128xf32>
    %173 = vector.extract_strided_slice %154 {offsets = [0, 384], sizes = [16, 128], strides = [1, 1]} : vector<16x512xf32> to vector<16x128xf32>
    %cst_86 = arith.constant 5.000000e-01 : f32
    %174 = vector.broadcast %cst_86 : f32 to vector<16x128xf32>
    %175 = arith.mulf %174, %173 : vector<16x128xf32>
    %176 = math.tanh %175 : vector<16x128xf32>
    %cst_87 = arith.constant 5.000000e-01 : f32
    %177 = vector.broadcast %cst_87 : f32 to vector<16x128xf32>
    %178 = arith.mulf %177, %176 : vector<16x128xf32>
    %cst_88 = arith.constant 5.000000e-01 : f32
    %179 = vector.broadcast %cst_88 : f32 to vector<16x128xf32>
    %180 = arith.addf %178, %179 : vector<16x128xf32>
    %181 = arith.mulf %170, %149 : vector<16x128xf32>
    %182 = arith.mulf %162, %172 : vector<16x128xf32>
    %183 = arith.addf %181, %182 : vector<16x128xf32>
    %184 = math.tanh %183 : vector<16x128xf32>
    %185 = arith.mulf %180, %184 : vector<16x128xf32>
    %c0_89 = arith.constant 0 : index
    %c0_90 = arith.constant 0 : index
    %186 = vector.load %arg7[%c0_89, %c0_90] : memref<16x128xf32, #tpu.memory_space<vmem>>, vector<16x128xf32>
    tpu.vector_store %arg7[%c0_89, %c0_90], %183 {strides = array<i32>} : memref<16x128xf32, #tpu.memory_space<vmem>>, vector<16x128xf32>,
    %c0_91 = arith.constant 0 : index
    %c0_92 = arith.constant 0 : index
    %187 = vector.load %arg6[%c0_91, %c0_92] : memref<16x128xf32, #tpu.memory_space<vmem>>, vector<16x128xf32>
    tpu.vector_store %arg6[%c0_91, %c0_92], %185 {strides = array<i32>} : memref<16x128xf32, #tpu.memory_space<vmem>>, vector<16x128xf32>,
    %188 = arith.truncf %185 : vector<16x128xf32> to vector<16x128xbf16>
    %189 = arith.index_cast %147 : i32 to index
    %c0_93 = arith.constant 0 : index
    %190 = vector.load %arg5[%189, %c0_93] : memref<128x128xbf16, #tpu.memory_space<vmem>>, vector<16x128xbf16>
    tpu.vector_store %arg5[%189, %c0_93], %188 {strides = array<i32>} : memref<128x128xbf16, #tpu.memory_space<vmem>>, vector<16x128xbf16>,
    %c4_i32 = arith.constant 4 : i32
    %c16_i32_94 = arith.constant 16 : i32
    %191 = arith.muli %c4_i32, %c16_i32_94 : i32
    %192 = tpu.assume_multiple %191, 16 : i32
    %c0_95 = arith.constant 0 : index
    %c0_96 = arith.constant 0 : index
    %193 = vector.load %arg6[%c0_95, %c0_96] : memref<16x128xf32, #tpu.memory_space<vmem>>, vector<16x128xf32>
    %c0_97 = arith.constant 0 : index
    %c0_98 = arith.constant 0 : index
    %194 = vector.load %arg7[%c0_97, %c0_98] : memref<16x128xf32, #tpu.memory_space<vmem>>, vector<16x128xf32>
    %195 = arith.index_cast %192 : i32 to index
    %c0_99 = arith.constant 0 : index
    %196 = vector.load %arg8[%195, %c0_99] : memref<128x512xf32, #tpu.memory_space<vmem>>, vector<16x512xf32>
    %197 = arith.truncf %193 : vector<16x128xf32> to vector<16x128xbf16>
    %cst_100 = arith.constant dense<0.000000e+00> : vector<16x512xf32>
    %198 = tpu.matmul %197, %10, %cst_100 {dimension_numbers = #tpu.dot_dimension_numbers<[1], [0], [0], [1], [0, 0, 1, 1], [], []>} : vector<16x128xbf16>, vector<128x512xbf16>, vector<16x512xf32> -> vector<16x512xf32>
    %199 = arith.addf %196, %198 : vector<16x512xf32>
    %200 = vector.extract_strided_slice %199 {offsets = [0, 0], sizes = [16, 128], strides = [1, 1]} : vector<16x512xf32> to vector<16x128xf32>
    %cst_101 = arith.constant 5.000000e-01 : f32
    %201 = vector.broadcast %cst_101 : f32 to vector<16x128xf32>
    %202 = arith.mulf %201, %200 : vector<16x128xf32>
    %203 = math.tanh %202 : vector<16x128xf32>
    %cst_102 = arith.constant 5.000000e-01 : f32
    %204 = vector.broadcast %cst_102 : f32 to vector<16x128xf32>
    %205 = arith.mulf %204, %203 : vector<16x128xf32>
    %cst_103 = arith.constant 5.000000e-01 : f32
    %206 = vector.broadcast %cst_103 : f32 to vector<16x128xf32>
    %207 = arith.addf %205, %206 : vector<16x128xf32>
    %208 = vector.extract_strided_slice %199 {offsets = [0, 128], sizes = [16, 128], strides = [1, 1]} : vector<16x512xf32> to vector<16x128xf32>
    %cst_104 = arith.constant 5.000000e-01 : f32
    %209 = vector.broadcast %cst_104 : f32 to vector<16x128xf32>
    %210 = arith.mulf %209, %208 : vector<16x128xf32>
    %211 = math.tanh %210 : vector<16x128xf32>
    %cst_105 = arith.constant 5.000000e-01 : f32
    %212 = vector.broadcast %cst_105 : f32 to vector<16x128xf32>
    %213 = arith.mulf %212, %211 : vector<16x128xf32>
    %cst_106 = arith.constant 5.000000e-01 : f32
    %214 = vector.broadcast %cst_106 : f32 to vector<16x128xf32>
    %215 = arith.addf %213, %214 : vector<16x128xf32>
    %216 = vector.extract_strided_slice %199 {offsets = [0, 256], sizes = [16, 128], strides = [1, 1]} : vector<16x512xf32> to vector<16x128xf32>
    %217 = math.tanh %216 : vector<16x128xf32>
    %218 = vector.extract_strided_slice %199 {offsets = [0, 384], sizes = [16, 128], strides = [1, 1]} : vector<16x512xf32> to vector<16x128xf32>
    %cst_107 = arith.constant 5.000000e-01 : f32
    %219 = vector.broadcast %cst_107 : f32 to vector<16x128xf32>
    %220 = arith.mulf %219, %218 : vector<16x128xf32>
    %221 = math.tanh %220 : vector<16x128xf32>
    %cst_108 = arith.constant 5.000000e-01 : f32
    %222 = vector.broadcast %cst_108 : f32 to vector<16x128xf32>
    %223 = arith.mulf %222, %221 : vector<16x128xf32>
    %cst_109 = arith.constant 5.000000e-01 : f32
    %224 = vector.broadcast %cst_109 : f32 to vector<16x128xf32>
    %225 = arith.addf %223, %224 : vector<16x128xf32>
    %226 = arith.mulf %215, %194 : vector<16x128xf32>
    %227 = arith.mulf %207, %217 : vector<16x128xf32>
    %228 = arith.addf %226, %227 : vector<16x128xf32>
    %229 = math.tanh %228 : vector<16x128xf32>
    %230 = arith.mulf %225, %229 : vector<16x128xf32>
    %c0_110 = arith.constant 0 : index
    %c0_111 = arith.constant 0 : index
    %231 = vector.load %arg7[%c0_110, %c0_111] : memref<16x128xf32, #tpu.memory_space<vmem>>, vector<16x128xf32>
    tpu.vector_store %arg7[%c0_110, %c0_111], %228 {strides = array<i32>} : memref<16x128xf32, #tpu.memory_space<vmem>>, vector<16x128xf32>,
    %c0_112 = arith.constant 0 : index
    %c0_113 = arith.constant 0 : index
    %232 = vector.load %arg6[%c0_112, %c0_113] : memref<16x128xf32, #tpu.memory_space<vmem>>, vector<16x128xf32>
    tpu.vector_store %arg6[%c0_112, %c0_113], %230 {strides = array<i32>} : memref<16x128xf32, #tpu.memory_space<vmem>>, vector<16x128xf32>,
    %233 = arith.truncf %230 : vector<16x128xf32> to vector<16x128xbf16>
    %234 = arith.index_cast %192 : i32 to index
    %c0_114 = arith.constant 0 : index
    %235 = vector.load %arg5[%234, %c0_114] : memref<128x128xbf16, #tpu.memory_space<vmem>>, vector<16x128xbf16>
    tpu.vector_store %arg5[%234, %c0_114], %233 {strides = array<i32>} : memref<128x128xbf16, #tpu.memory_space<vmem>>, vector<16x128xbf16>,
    %c5_i32 = arith.constant 5 : i32
    %c16_i32_115 = arith.constant 16 : i32
    %236 = arith.muli %c5_i32, %c16_i32_115 : i32
    %237 = tpu.assume_multiple %236, 16 : i32
    %c0_116 = arith.constant 0 : index
    %c0_117 = arith.constant 0 : index
    %238 = vector.load %arg6[%c0_116, %c0_117] : memref<16x128xf32, #tpu.memory_space<vmem>>, vector<16x128xf32>
    %c0_118 = arith.constant 0 : index
    %c0_119 = arith.constant 0 : index
    %239 = vector.load %arg7[%c0_118, %c0_119] : memref<16x128xf32, #tpu.memory_space<vmem>>, vector<16x128xf32>
    %240 = arith.index_cast %237 : i32 to index
    %c0_120 = arith.constant 0 : index
    %241 = vector.load %arg8[%240, %c0_120] : memref<128x512xf32, #tpu.memory_space<vmem>>, vector<16x512xf32>
    %242 = arith.truncf %238 : vector<16x128xf32> to vector<16x128xbf16>
    %cst_121 = arith.constant dense<0.000000e+00> : vector<16x512xf32>
    %243 = tpu.matmul %242, %10, %cst_121 {dimension_numbers = #tpu.dot_dimension_numbers<[1], [0], [0], [1], [0, 0, 1, 1], [], []>} : vector<16x128xbf16>, vector<128x512xbf16>, vector<16x512xf32> -> vector<16x512xf32>
    %244 = arith.addf %241, %243 : vector<16x512xf32>
    %245 = vector.extract_strided_slice %244 {offsets = [0, 0], sizes = [16, 128], strides = [1, 1]} : vector<16x512xf32> to vector<16x128xf32>
    %cst_122 = arith.constant 5.000000e-01 : f32
    %246 = vector.broadcast %cst_122 : f32 to vector<16x128xf32>
    %247 = arith.mulf %246, %245 : vector<16x128xf32>
    %248 = math.tanh %247 : vector<16x128xf32>
    %cst_123 = arith.constant 5.000000e-01 : f32
    %249 = vector.broadcast %cst_123 : f32 to vector<16x128xf32>
    %250 = arith.mulf %249, %248 : vector<16x128xf32>
    %cst_124 = arith.constant 5.000000e-01 : f32
    %251 = vector.broadcast %cst_124 : f32 to vector<16x128xf32>
    %252 = arith.addf %250, %251 : vector<16x128xf32>
    %253 = vector.extract_strided_slice %244 {offsets = [0, 128], sizes = [16, 128], strides = [1, 1]} : vector<16x512xf32> to vector<16x128xf32>
    %cst_125 = arith.constant 5.000000e-01 : f32
    %254 = vector.broadcast %cst_125 : f32 to vector<16x128xf32>
    %255 = arith.mulf %254, %253 : vector<16x128xf32>
    %256 = math.tanh %255 : vector<16x128xf32>
    %cst_126 = arith.constant 5.000000e-01 : f32
    %257 = vector.broadcast %cst_126 : f32 to vector<16x128xf32>
    %258 = arith.mulf %257, %256 : vector<16x128xf32>
    %cst_127 = arith.constant 5.000000e-01 : f32
    %259 = vector.broadcast %cst_127 : f32 to vector<16x128xf32>
    %260 = arith.addf %258, %259 : vector<16x128xf32>
    %261 = vector.extract_strided_slice %244 {offsets = [0, 256], sizes = [16, 128], strides = [1, 1]} : vector<16x512xf32> to vector<16x128xf32>
    %262 = math.tanh %261 : vector<16x128xf32>
    %263 = vector.extract_strided_slice %244 {offsets = [0, 384], sizes = [16, 128], strides = [1, 1]} : vector<16x512xf32> to vector<16x128xf32>
    %cst_128 = arith.constant 5.000000e-01 : f32
    %264 = vector.broadcast %cst_128 : f32 to vector<16x128xf32>
    %265 = arith.mulf %264, %263 : vector<16x128xf32>
    %266 = math.tanh %265 : vector<16x128xf32>
    %cst_129 = arith.constant 5.000000e-01 : f32
    %267 = vector.broadcast %cst_129 : f32 to vector<16x128xf32>
    %268 = arith.mulf %267, %266 : vector<16x128xf32>
    %cst_130 = arith.constant 5.000000e-01 : f32
    %269 = vector.broadcast %cst_130 : f32 to vector<16x128xf32>
    %270 = arith.addf %268, %269 : vector<16x128xf32>
    %271 = arith.mulf %260, %239 : vector<16x128xf32>
    %272 = arith.mulf %252, %262 : vector<16x128xf32>
    %273 = arith.addf %271, %272 : vector<16x128xf32>
    %274 = math.tanh %273 : vector<16x128xf32>
    %275 = arith.mulf %270, %274 : vector<16x128xf32>
    %c0_131 = arith.constant 0 : index
    %c0_132 = arith.constant 0 : index
    %276 = vector.load %arg7[%c0_131, %c0_132] : memref<16x128xf32, #tpu.memory_space<vmem>>, vector<16x128xf32>
    tpu.vector_store %arg7[%c0_131, %c0_132], %273 {strides = array<i32>} : memref<16x128xf32, #tpu.memory_space<vmem>>, vector<16x128xf32>,
    %c0_133 = arith.constant 0 : index
    %c0_134 = arith.constant 0 : index
    %277 = vector.load %arg6[%c0_133, %c0_134] : memref<16x128xf32, #tpu.memory_space<vmem>>, vector<16x128xf32>
    tpu.vector_store %arg6[%c0_133, %c0_134], %275 {strides = array<i32>} : memref<16x128xf32, #tpu.memory_space<vmem>>, vector<16x128xf32>,
    %278 = arith.truncf %275 : vector<16x128xf32> to vector<16x128xbf16>
    %279 = arith.index_cast %237 : i32 to index
    %c0_135 = arith.constant 0 : index
    %280 = vector.load %arg5[%279, %c0_135] : memref<128x128xbf16, #tpu.memory_space<vmem>>, vector<16x128xbf16>
    tpu.vector_store %arg5[%279, %c0_135], %278 {strides = array<i32>} : memref<128x128xbf16, #tpu.memory_space<vmem>>, vector<16x128xbf16>,
    %c6_i32 = arith.constant 6 : i32
    %c16_i32_136 = arith.constant 16 : i32
    %281 = arith.muli %c6_i32, %c16_i32_136 : i32
    %282 = tpu.assume_multiple %281, 16 : i32
    %c0_137 = arith.constant 0 : index
    %c0_138 = arith.constant 0 : index
    %283 = vector.load %arg6[%c0_137, %c0_138] : memref<16x128xf32, #tpu.memory_space<vmem>>, vector<16x128xf32>
    %c0_139 = arith.constant 0 : index
    %c0_140 = arith.constant 0 : index
    %284 = vector.load %arg7[%c0_139, %c0_140] : memref<16x128xf32, #tpu.memory_space<vmem>>, vector<16x128xf32>
    %285 = arith.index_cast %282 : i32 to index
    %c0_141 = arith.constant 0 : index
    %286 = vector.load %arg8[%285, %c0_141] : memref<128x512xf32, #tpu.memory_space<vmem>>, vector<16x512xf32>
    %287 = arith.truncf %283 : vector<16x128xf32> to vector<16x128xbf16>
    %cst_142 = arith.constant dense<0.000000e+00> : vector<16x512xf32>
    %288 = tpu.matmul %287, %10, %cst_142 {dimension_numbers = #tpu.dot_dimension_numbers<[1], [0], [0], [1], [0, 0, 1, 1], [], []>} : vector<16x128xbf16>, vector<128x512xbf16>, vector<16x512xf32> -> vector<16x512xf32>
    %289 = arith.addf %286, %288 : vector<16x512xf32>
    %290 = vector.extract_strided_slice %289 {offsets = [0, 0], sizes = [16, 128], strides = [1, 1]} : vector<16x512xf32> to vector<16x128xf32>
    %cst_143 = arith.constant 5.000000e-01 : f32
    %291 = vector.broadcast %cst_143 : f32 to vector<16x128xf32>
    %292 = arith.mulf %291, %290 : vector<16x128xf32>
    %293 = math.tanh %292 : vector<16x128xf32>
    %cst_144 = arith.constant 5.000000e-01 : f32
    %294 = vector.broadcast %cst_144 : f32 to vector<16x128xf32>
    %295 = arith.mulf %294, %293 : vector<16x128xf32>
    %cst_145 = arith.constant 5.000000e-01 : f32
    %296 = vector.broadcast %cst_145 : f32 to vector<16x128xf32>
    %297 = arith.addf %295, %296 : vector<16x128xf32>
    %298 = vector.extract_strided_slice %289 {offsets = [0, 128], sizes = [16, 128], strides = [1, 1]} : vector<16x512xf32> to vector<16x128xf32>
    %cst_146 = arith.constant 5.000000e-01 : f32
    %299 = vector.broadcast %cst_146 : f32 to vector<16x128xf32>
    %300 = arith.mulf %299, %298 : vector<16x128xf32>
    %301 = math.tanh %300 : vector<16x128xf32>
    %cst_147 = arith.constant 5.000000e-01 : f32
    %302 = vector.broadcast %cst_147 : f32 to vector<16x128xf32>
    %303 = arith.mulf %302, %301 : vector<16x128xf32>
    %cst_148 = arith.constant 5.000000e-01 : f32
    %304 = vector.broadcast %cst_148 : f32 to vector<16x128xf32>
    %305 = arith.addf %303, %304 : vector<16x128xf32>
    %306 = vector.extract_strided_slice %289 {offsets = [0, 256], sizes = [16, 128], strides = [1, 1]} : vector<16x512xf32> to vector<16x128xf32>
    %307 = math.tanh %306 : vector<16x128xf32>
    %308 = vector.extract_strided_slice %289 {offsets = [0, 384], sizes = [16, 128], strides = [1, 1]} : vector<16x512xf32> to vector<16x128xf32>
    %cst_149 = arith.constant 5.000000e-01 : f32
    %309 = vector.broadcast %cst_149 : f32 to vector<16x128xf32>
    %310 = arith.mulf %309, %308 : vector<16x128xf32>
    %311 = math.tanh %310 : vector<16x128xf32>
    %cst_150 = arith.constant 5.000000e-01 : f32
    %312 = vector.broadcast %cst_150 : f32 to vector<16x128xf32>
    %313 = arith.mulf %312, %311 : vector<16x128xf32>
    %cst_151 = arith.constant 5.000000e-01 : f32
    %314 = vector.broadcast %cst_151 : f32 to vector<16x128xf32>
    %315 = arith.addf %313, %314 : vector<16x128xf32>
    %316 = arith.mulf %305, %284 : vector<16x128xf32>
    %317 = arith.mulf %297, %307 : vector<16x128xf32>
    %318 = arith.addf %316, %317 : vector<16x128xf32>
    %319 = math.tanh %318 : vector<16x128xf32>
    %320 = arith.mulf %315, %319 : vector<16x128xf32>
    %c0_152 = arith.constant 0 : index
    %c0_153 = arith.constant 0 : index
    %321 = vector.load %arg7[%c0_152, %c0_153] : memref<16x128xf32, #tpu.memory_space<vmem>>, vector<16x128xf32>
    tpu.vector_store %arg7[%c0_152, %c0_153], %318 {strides = array<i32>} : memref<16x128xf32, #tpu.memory_space<vmem>>, vector<16x128xf32>,
    %c0_154 = arith.constant 0 : index
    %c0_155 = arith.constant 0 : index
    %322 = vector.load %arg6[%c0_154, %c0_155] : memref<16x128xf32, #tpu.memory_space<vmem>>, vector<16x128xf32>
    tpu.vector_store %arg6[%c0_154, %c0_155], %320 {strides = array<i32>} : memref<16x128xf32, #tpu.memory_space<vmem>>, vector<16x128xf32>,
    %323 = arith.truncf %320 : vector<16x128xf32> to vector<16x128xbf16>
    %324 = arith.index_cast %282 : i32 to index
    %c0_156 = arith.constant 0 : index
    %325 = vector.load %arg5[%324, %c0_156] : memref<128x128xbf16, #tpu.memory_space<vmem>>, vector<16x128xbf16>
    tpu.vector_store %arg5[%324, %c0_156], %323 {strides = array<i32>} : memref<128x128xbf16, #tpu.memory_space<vmem>>, vector<16x128xbf16>,
    %c7_i32 = arith.constant 7 : i32
    %c16_i32_157 = arith.constant 16 : i32
    %326 = arith.muli %c7_i32, %c16_i32_157 : i32
    %327 = tpu.assume_multiple %326, 16 : i32
    %c0_158 = arith.constant 0 : index
    %c0_159 = arith.constant 0 : index
    %328 = vector.load %arg6[%c0_158, %c0_159] : memref<16x128xf32, #tpu.memory_space<vmem>>, vector<16x128xf32>
    %c0_160 = arith.constant 0 : index
    %c0_161 = arith.constant 0 : index
    %329 = vector.load %arg7[%c0_160, %c0_161] : memref<16x128xf32, #tpu.memory_space<vmem>>, vector<16x128xf32>
    %330 = arith.index_cast %327 : i32 to index
    %c0_162 = arith.constant 0 : index
    %331 = vector.load %arg8[%330, %c0_162] : memref<128x512xf32, #tpu.memory_space<vmem>>, vector<16x512xf32>
    %332 = arith.truncf %328 : vector<16x128xf32> to vector<16x128xbf16>
    %cst_163 = arith.constant dense<0.000000e+00> : vector<16x512xf32>
    %333 = tpu.matmul %332, %10, %cst_163 {dimension_numbers = #tpu.dot_dimension_numbers<[1], [0], [0], [1], [0, 0, 1, 1], [], []>} : vector<16x128xbf16>, vector<128x512xbf16>, vector<16x512xf32> -> vector<16x512xf32>
    %334 = arith.addf %331, %333 : vector<16x512xf32>
    %335 = vector.extract_strided_slice %334 {offsets = [0, 0], sizes = [16, 128], strides = [1, 1]} : vector<16x512xf32> to vector<16x128xf32>
    %cst_164 = arith.constant 5.000000e-01 : f32
    %336 = vector.broadcast %cst_164 : f32 to vector<16x128xf32>
    %337 = arith.mulf %336, %335 : vector<16x128xf32>
    %338 = math.tanh %337 : vector<16x128xf32>
    %cst_165 = arith.constant 5.000000e-01 : f32
    %339 = vector.broadcast %cst_165 : f32 to vector<16x128xf32>
    %340 = arith.mulf %339, %338 : vector<16x128xf32>
    %cst_166 = arith.constant 5.000000e-01 : f32
    %341 = vector.broadcast %cst_166 : f32 to vector<16x128xf32>
    %342 = arith.addf %340, %341 : vector<16x128xf32>
    %343 = vector.extract_strided_slice %334 {offsets = [0, 128], sizes = [16, 128], strides = [1, 1]} : vector<16x512xf32> to vector<16x128xf32>
    %cst_167 = arith.constant 5.000000e-01 : f32
    %344 = vector.broadcast %cst_167 : f32 to vector<16x128xf32>
    %345 = arith.mulf %344, %343 : vector<16x128xf32>
    %346 = math.tanh %345 : vector<16x128xf32>
    %cst_168 = arith.constant 5.000000e-01 : f32
    %347 = vector.broadcast %cst_168 : f32 to vector<16x128xf32>
    %348 = arith.mulf %347, %346 : vector<16x128xf32>
    %cst_169 = arith.constant 5.000000e-01 : f32
    %349 = vector.broadcast %cst_169 : f32 to vector<16x128xf32>
    %350 = arith.addf %348, %349 : vector<16x128xf32>
    %351 = vector.extract_strided_slice %334 {offsets = [0, 256], sizes = [16, 128], strides = [1, 1]} : vector<16x512xf32> to vector<16x128xf32>
    %352 = math.tanh %351 : vector<16x128xf32>
    %353 = vector.extract_strided_slice %334 {offsets = [0, 384], sizes = [16, 128], strides = [1, 1]} : vector<16x512xf32> to vector<16x128xf32>
    %cst_170 = arith.constant 5.000000e-01 : f32
    %354 = vector.broadcast %cst_170 : f32 to vector<16x128xf32>
    %355 = arith.mulf %354, %353 : vector<16x128xf32>
    %356 = math.tanh %355 : vector<16x128xf32>
    %cst_171 = arith.constant 5.000000e-01 : f32
    %357 = vector.broadcast %cst_171 : f32 to vector<16x128xf32>
    %358 = arith.mulf %357, %356 : vector<16x128xf32>
    %cst_172 = arith.constant 5.000000e-01 : f32
    %359 = vector.broadcast %cst_172 : f32 to vector<16x128xf32>
    %360 = arith.addf %358, %359 : vector<16x128xf32>
    %361 = arith.mulf %350, %329 : vector<16x128xf32>
    %362 = arith.mulf %342, %352 : vector<16x128xf32>
    %363 = arith.addf %361, %362 : vector<16x128xf32>
    %364 = math.tanh %363 : vector<16x128xf32>
    %365 = arith.mulf %360, %364 : vector<16x128xf32>
    %c0_173 = arith.constant 0 : index
    %c0_174 = arith.constant 0 : index
    %366 = vector.load %arg7[%c0_173, %c0_174] : memref<16x128xf32, #tpu.memory_space<vmem>>, vector<16x128xf32>
    tpu.vector_store %arg7[%c0_173, %c0_174], %363 {strides = array<i32>} : memref<16x128xf32, #tpu.memory_space<vmem>>, vector<16x128xf32>,
    %c0_175 = arith.constant 0 : index
    %c0_176 = arith.constant 0 : index
    %367 = vector.load %arg6[%c0_175, %c0_176] : memref<16x128xf32, #tpu.memory_space<vmem>>, vector<16x128xf32>
    tpu.vector_store %arg6[%c0_175, %c0_176], %365 {strides = array<i32>} : memref<16x128xf32, #tpu.memory_space<vmem>>, vector<16x128xf32>,
    %368 = arith.truncf %365 : vector<16x128xf32> to vector<16x128xbf16>
    %369 = arith.index_cast %327 : i32 to index
    %c0_177 = arith.constant 0 : index
    %370 = vector.load %arg5[%369, %c0_177] : memref<128x128xbf16, #tpu.memory_space<vmem>>, vector<16x128xbf16>
    tpu.vector_store %arg5[%369, %c0_177], %368 {strides = array<i32>} : memref<128x128xbf16, #tpu.memory_space<vmem>>, vector<16x128xbf16>,
    %c8_i32 = arith.constant 8 : i32
    return
  }
  func.func @transform_0(%arg0: i32) -> (i32, i32) {
    %c0_i32 = arith.constant 0 : i32
    %c0_i32_0 = arith.constant 0 : i32
    return %arg0, %c0_i32 : i32, i32
  }
  func.func @transform_1(%arg0: i32) -> (i32, i32) {
    %c0_i32 = arith.constant 0 : i32
    %c0_i32_0 = arith.constant 0 : i32
    %c0_i32_1 = arith.constant 0 : i32
    return %c0_i32, %c0_i32_0 : i32, i32
  }
  func.func @transform_2(%arg0: i32) -> (i32, i32) {
    %c0_i32 = arith.constant 0 : i32
    %c0_i32_0 = arith.constant 0 : i32
    %c0_i32_1 = arith.constant 0 : i32
    return %c0_i32, %c0_i32_0 : i32, i32
  }
  func.func @transform_3(%arg0: i32) -> (i32, i32) {
    %c0_i32 = arith.constant 0 : i32
    %c0_i32_0 = arith.constant 0 : i32
    %c0_i32_1 = arith.constant 0 : i32
    return %c0_i32, %c0_i32_0 : i32, i32
  }
  func.func @transform_4(%arg0: i32) -> (i32, i32) {
    %c0_i32 = arith.constant 0 : i32
    %c0_i32_0 = arith.constant 0 : i32
    return %arg0, %c0_i32 : i32, i32
  }
  func.func @transform_5(%arg0: i32) -> (i32, i32) {
    %c0_i32 = arith.constant 0 : i32
    %c0_i32_0 = arith.constant 0 : i32
    %c0_i32_1 = arith.constant 0 : i32
    return %c0_i32, %c0_i32_0 : i32, i32
  }
  func.func @transform_6(%arg0: i32) -> (i32, i32) {
    %c0_i32 = arith.constant 0 : i32
    %c0_i32_0 = arith.constant 0 : i32
    %c0_i32_1 = arith.constant 0 : i32
    return %c0_i32, %c0_i32_0 : i32, i32
  }
}

</mosaic_0001>

<llo_original>
// kernel: rnn_forward.2
$region0: #{rnn_forward.2}
  #allocation0 [shape = 'u32[]', space=smem, size = 0x4, offset = 0x4, fixed_abs, tag = 'smem constant byte address 0x4 - core index']
  #allocation1 [shape = 'u32[144,128]{1,0:T(1,128)}', space=vmem, size = 0x12000, scoped, tag = 'internal scratch']
  #allocation2 [shape = 'f32[128,512]{1,0:T(8,128)}', space=vmem, size = 0x40000, scoped, tag = 'scratch operand']
  %s0 = inlined_call_operand.vmem [shape: bf16[128,16], index: 0, kind: input, shape index: {}]
  %s1 = inlined_call_operand.hbm [shape: bf16[16,512], index: 1, kind: input, shape index: {}]
  %s2 = inlined_call_operand.hbm [shape: bf16[128,512], index: 2, kind: input, shape index: {}]
  %s3 = inlined_call_operand.hbm [shape: f32[1,512], index: 3, kind: input, shape index: {}]
  %s4 = inlined_call_operand.vmem [shape: bf16[128,128], index: 4, kind: output, shape index: {0}]
  %s5 = inlined_call_operand.vmem [shape: f32[16,128], index: 5, kind: output, shape index: {1}]
  %s6 = inlined_call_operand.vmem [shape: f32[16,128], index: 6, kind: output, shape index: {2}]
  %7 = xla_tuple %s4, %s5, %s6
  %s8 = sld [smem:[#allocation0]]
  $region58: #{rnn_forward.2} parent=0
    _
  %s10 = ssub.s32 1, %s8
  %s11 = scalar_select 0, %s10, %s8
  $region1: #{rnn_forward.2} parent=0
    #allocation3 [shape = 'u8[16384]{0}', space=vmem, size = 0x4000, scoped, tag = 'input window, operand 1, single buffered']
    #allocation4 [shape = 's32[1]{0}', space=sflag, size = 0x4, scoped, tag = 'scoped memory for rnn_forward.2']
    #allocation5 [shape = 'u8[131072]{0}', space=vmem, size = 0x20000, scoped, tag = 'input window, operand 2, single buffered']
    #allocation6 [shape = 's32[1]{0}', space=sflag, size = 0x4, scoped, tag = 'scoped memory for rnn_forward.2']
    #allocation7 [shape = 'u8[2048]{0}', space=vmem, size = 0x800, scoped, tag = 'input window, operand 3, single buffered']
    %12 = vsyncpa [#allocation4], 0
    %13 = vsyncpa [#allocation6], 0
    // Predicated region
    $region2: #{rnn_forward.2} parent=1 // pred_check
      _
    $region3: #{rnn_forward.2} parent=1 // pred_check_branch
      %15 = sbr.rel (0) target = $region5
    $region4: #{rnn_forward.2} parent=1 // pred_region
      _
    $region5: #{rnn_forward.2} parent=1 // pred_fallthru
      _
    // Predicated region
    $region6: #{rnn_forward.2} parent=1 // pred_check
      _
    $region7: #{rnn_forward.2} parent=1 // pred_check_branch
      %17 = sbr.rel (0) target = $region9
    $region8: #{rnn_forward.2} parent=1 // pred_region
      %s19 = ssub.s32 512, 512
      %20 = vsyncadd [#allocation4], %s19
      %s21 = sshll.u32 [#allocation3], 4
      %s22 = int_to_ptr.vmem [resolvable:$true] %s21
      %27 = dma.hbm_to_vmem [thread:$0]  %s1, 512, %s22, [#allocation4], 256, 256, 16
    $region9: #{rnn_forward.2} parent=1 // pred_fallthru
      _
    // Predicated region
    $region10: #{rnn_forward.2} parent=1 // pred_check
      _
    $region11: #{rnn_forward.2} parent=1 // pred_check_branch
      %29 = sbr.rel (0) target = $region13
    $region12: #{rnn_forward.2} parent=1 // pred_region
      %s31 = ssub.s32 4096, 4096
      %32 = vsyncadd [#allocation6], %s31
      %s33 = sshll.u32 [#allocation5], 4
      %s34 = int_to_ptr.vmem [resolvable:$true] %s33
      %39 = dma.hbm_to_vmem [thread:$0]  %s2, 4096, %s34, [#allocation6], 256, 256, 16
    $region13: #{rnn_forward.2} parent=1 // pred_fallthru
      _
    // Predicated region
    $region14: #{rnn_forward.2} parent=1 // pred_check
      _
    $region15: #{rnn_forward.2} parent=1 // pred_check_branch
      %41 = sbr.rel (0) target = $region17
    $region16: #{rnn_forward.2} parent=1 // pred_region
      %s43 = ssub.s32 64, 64
      %44 = vsyncadd [#allocation6], %s43
      %s46 = sshll.u32 [#allocation7], 4
      %s47 = int_to_ptr.vmem [resolvable:$true] %s46
      %49 = dma.hbm_to_vmem [thread:$0]  %s3, 64, %s47, [#allocation6]
    $region17: #{rnn_forward.2} parent=1 // pred_fallthru
      _
    // Predicated region
    $region18: #{rnn_forward.2} parent=1 // pred_check
      _
    $region19: #{rnn_forward.2} parent=1 // pred_check_branch
      %51 = sbr.rel (0) target = $region21
    $region20: #{rnn_forward.2} parent=1 // pred_region
      %52 = dma.done [#allocation4], 512
    $region21: #{rnn_forward.2} parent=1 // pred_fallthru
      _
    // Predicated region
    $region22: #{rnn_forward.2} parent=1 // pred_check
      _
    $region23: #{rnn_forward.2} parent=1 // pred_check_branch
      %54 = sbr.rel (0) target = $region25
    $region24: #{rnn_forward.2} parent=1 // pred_region
      %55 = dma.done [#allocation6], 4096
    $region25: #{rnn_forward.2} parent=1 // pred_fallthru
      _
    // Predicated region
    $region26: #{rnn_forward.2} parent=1 // pred_check
      _
    $region27: #{rnn_forward.2} parent=1 // pred_check_branch
      %57 = sbr.rel (0) target = $region29
    $region28: #{rnn_forward.2} parent=1 // pred_region
      %58 = dma.done [#allocation6], 64
    $region29: #{rnn_forward.2} parent=1 // pred_fallthru
      _
    %p60 = scmp.eq.s32.totalorder 0, 0
    // Predicated region
    $region30: #{rnn_forward.2} parent=1 // pred_check
      %p61 = pneg %p60
    $region31: #{rnn_forward.2} parent=1 // pred_check_branch
      %63 = sbr.rel (%p61) target = $region33
    $region32: #{rnn_forward.2} parent=1 // pred_region
      %64 = vst [vmem:[%s5] sm:$0xff] 0.0
      %65 = vst [vmem:[%s5 + $0x8] sm:$0xff] 0.0
      %66 = vst [vmem:[%s6] sm:$0xff] 0.0
      %67 = vst [vmem:[%s6 + $0x8] sm:$0xff] 0.0
    $region33: #{rnn_forward.2} parent=1 // pred_fallthru
      _
    %v68 = vld [vmem:[%s0] sm:$0xf]
    %v69 = vld [vmem:[%s0 + $0x4] sm:$0xf]
    %v70 = vld [vmem:[%s0 + $0x8] sm:$0xf]
    %v71 = vld [vmem:[%s0 + $0xc] sm:$0xf]
    %v72 = vld [vmem:[%s0 + $0x10] sm:$0xf]
    %v73 = vld [vmem:[%s0 + $0x14] sm:$0xf]
    %v74 = vld [vmem:[%s0 + $0x18] sm:$0xf]
    %v75 = vld [vmem:[%s0 + $0x1c] sm:$0xf]
    %v76 = vld [vmem:[%s0 + $0x20] sm:$0xf]
    %v77 = vld [vmem:[%s0 + $0x24] sm:$0xf]
    %v78 = vld [vmem:[%s0 + $0x28] sm:$0xf]
    %v79 = vld [vmem:[%s0 + $0x2c] sm:$0xf]
    %v80 = vld [vmem:[%s0 + $0x30] sm:$0xf]
    %v81 = vld [vmem:[%s0 + $0x34] sm:$0xf]
    %v82 = vld [vmem:[%s0 + $0x38] sm:$0xf]
    %v83 = vld [vmem:[%s0 + $0x3c] sm:$0xf]
    %v84 = vld [vmem:[#allocation3] sm:$0xff]
    %v85 = vld [vmem:[#allocation3 + $0x8] sm:$0xff]
    %v86 = vld [vmem:[#allocation3 + $0x10] sm:$0xff]
    %v87 = vld [vmem:[#allocation3 + $0x18] sm:$0xff]
    %v88 = vld [vmem:[#allocation7] sm:$0xf]
    %v90 = vlaneseq
    %v91 = vshrl.u32 %v90, 7
    %v92 = vsub.s32 0, %v91
    %v93 = vrot.slane %v88, %v92
    %v94 = vlaneseq
    %v95 = vshrl.u32 %v94, 7
    %v96 = vsub.s32 1, %v95
    %v97 = vrot.slane %v88, %v96
    %v98 = vlaneseq
    %v99 = vshrl.u32 %v98, 7
    %v100 = vsub.s32 2, %v99
    %v101 = vrot.slane %v88, %v100
    %v102 = vlaneseq
    %v103 = vshrl.u32 %v102, 7
    %v104 = vsub.s32 3, %v103
    %v105 = vrot.slane %v88, %v104
    %v126 = vunpack.c.l.b16 %v68
    %v127 = vunpack.c.l.b16 %v69
    %v128 = vunpack.c.l.b16 %v70
    %v129 = vunpack.c.l.b16 %v71
    %v130 = vunpack.c.l.b16 %v72
    %v131 = vunpack.c.l.b16 %v73
    %v132 = vunpack.c.l.b16 %v74
    %v133 = vunpack.c.l.b16 %v75
    %v134 = vunpack.c.l.b16 %v76
    %v135 = vunpack.c.l.b16 %v77
    %v136 = vunpack.c.l.b16 %v78
    %v137 = vunpack.c.l.b16 %v79
    %v138 = vunpack.c.l.b16 %v80
    %v139 = vunpack.c.l.b16 %v81
    %v140 = vunpack.c.l.b16 %v82
    %v141 = vunpack.c.l.b16 %v83
    %v142 = vpack.c.b16 %v127, %v126
    %v143 = vpack.c.b16 %v129, %v128
    %v144 = vpack.c.b16 %v131, %v130
    %v145 = vpack.c.b16 %v133, %v132
    %v146 = vpack.c.b16 %v135, %v134
    %v147 = vpack.c.b16 %v137, %v136
    %v148 = vpack.c.b16 %v139, %v138
    %v149 = vpack.c.b16 %v141, %v140
    %v154 = vunpack.c.l.b16 %v84
    %v155 = vunpack.c.h.b16 %v84
    %v156 = vunpack.c.l.b16 %v85
    %v157 = vunpack.c.h.b16 %v85
    %v158 = vunpack.c.l.b16 %v86
    %v159 = vunpack.c.h.b16 %v86
    %v160 = vunpack.c.l.b16 %v87
    %v161 = vunpack.c.h.b16 %v87
    %v162 = vpack.c.b16 %v158, %v154
    %v163 = vpack.c.b16 %v159, %v155
    %v164 = vpack.c.b16 %v160, %v156
    %v165 = vpack.c.b16 %v161, %v157
    %vm170 = vcmask 130048
    %v172 = vsel %vm170, %v142, 0
    %v175 = vsel %vm170, %v143, 0
    %v178 = vsel %vm170, %v144, 0
    %v181 = vsel %vm170, %v145, 0
    %v184 = vsel %vm170, %v146, 0
    %v187 = vsel %vm170, %v147, 0
    %v190 = vsel %vm170, %v148, 0
    %v193 = vsel %vm170, %v149, 0
    %195 = vmatprep.subr.bf16.mxu0 %v163
    %196 = vmatpush1.bf16.msra.mxu0 %v162
    %197 = vmatprep.subr.bf16.mxu0 0
    %198 = vmatpush1.bf16.msra.mxu0 0
    %199 = vmatprep.subr.bf16.mxu0 0
    %200 = vmatpush1.bf16.msra.mxu0 0
    %201 = vmatprep.subr.bf16.mxu0 0
    %202 = vmatpush1.bf16.msra.mxu0 0
    %203 = vmatprep.subr.bf16.mxu0 0
    %204 = vmatpush1.bf16.msra.mxu0 0
    %205 = vmatprep.subr.bf16.mxu0 0
    %206 = vmatpush1.bf16.msra.mxu0 0
    %207 = vmatprep.subr.bf16.mxu0 0
    %208 = vmatpush1.bf16.msra.mxu0 0
    %209 = vmatprep.subr.bf16.mxu0 0
    %210 = vmatpush1.bf16.msra.mxu0 0
    %211 = vmatprep.subr.bf16.mxu0 0
    %212 = vmatpush1.bf16.msra.mxu0 0
    %213 = vmatprep.subr.bf16.mxu0 0
    %214 = vmatpush1.bf16.msra.mxu0 0
    %215 = vmatprep.subr.bf16.mxu0 0
    %216 = vmatpush1.bf16.msra.mxu0 0
    %217 = vmatprep.subr.bf16.mxu0 0
    %218 = vmatpush1.bf16.msra.mxu0 0
    %219 = vmatprep.subr.bf16.mxu0 0
    %220 = vmatpush1.bf16.msra.mxu0 0
    %221 = vmatprep.subr.bf16.mxu0 0
    %222 = vmatpush1.bf16.msra.mxu0 0
    %223 = vmatprep.subr.bf16.mxu0 0
    %224 = vmatpush1.bf16.msra.mxu0 0
    %225 = vmatprep.subr.bf16.mxu0 0
    %226 = vmatpush1.bf16.msra.mxu0 0
    %227 = vmatprep.mubr.bf16.mxu0 0
    %228 = vmatmul.mubr.bf16.gmra.mrb[0].mxu0 %v172
    %v229 = vpop.f32.mrb[0].mxu0
    %v230 = vadd.f32 %v93, %v229
    %v231 = vpop.f32.mrb[0].mxu0
    %v232 = vadd.f32 %v97, %v231
    %v233 = vpop.f32.mrb[0].mxu0
    %v234 = vadd.f32 %v93, %v233
    %v235 = vpop.f32.mrb[0].mxu0
    %v236 = vadd.f32 %v97, %v235
    %237 = vmatprep.mubr.bf16.mxu0 0
    %238 = vmatmul.mubr.bf16.gmra.mrb[0].mxu0 %v175
    %v239 = vpop.f32.mrb[0].mxu0
    %v240 = vadd.f32 %v93, %v239
    %v241 = vpop.f32.mrb[0].mxu0
    %v242 = vadd.f32 %v97, %v241
    %v243 = vpop.f32.mrb[0].mxu0
    %v244 = vadd.f32 %v93, %v243
    %v245 = vpop.f32.mrb[0].mxu0
    %v246 = vadd.f32 %v97, %v245
    %247 = vmatprep.mubr.bf16.mxu0 0
    %248 = vmatmul.mubr.bf16.gmra.mrb[0].mxu0 %v178
    %v249 = vpop.f32.mrb[0].mxu0
    %v250 = vadd.f32 %v93, %v249
    %v251 = vpop.f32.mrb[0].mxu0
    %v252 = vadd.f32 %v97, %v251
    %v253 = vpop.f32.mrb[0].mxu0
    %v254 = vadd.f32 %v93, %v253
    %v255 = vpop.f32.mrb[0].mxu0
    %v256 = vadd.f32 %v97, %v255
    %257 = vmatprep.mubr.bf16.mxu0 0
    %258 = vmatmul.mubr.bf16.gmra.mrb[0].mxu0 %v181
    %v259 = vpop.f32.mrb[0].mxu0
    %v260 = vadd.f32 %v93, %v259
    %v261 = vpop.f32.mrb[0].mxu0
    %v262 = vadd.f32 %v97, %v261
    %v263 = vpop.f32.mrb[0].mxu0
    %v264 = vadd.f32 %v93, %v263
    %v265 = vpop.f32.mrb[0].mxu0
    %v266 = vadd.f32 %v97, %v265
    %267 = vmatprep.mubr.bf16.mxu0 0
    %268 = vmatmul.mubr.bf16.gmra.mrb[0].mxu0 %v184
    %v269 = vpop.f32.mrb[0].mxu0
    %v270 = vadd.f32 %v93, %v269
    %v271 = vpop.f32.mrb[0].mxu0
    %v272 = vadd.f32 %v97, %v271
    %v273 = vpop.f32.mrb[0].mxu0
    %v274 = vadd.f32 %v93, %v273
    %v275 = vpop.f32.mrb[0].mxu0
    %v276 = vadd.f32 %v97, %v275
    %277 = vmatprep.mubr.bf16.mxu0 0
    %278 = vmatmul.mubr.bf16.gmra.mrb[0].mxu0 %v187
    %v279 = vpop.f32.mrb[0].mxu0
    %v280 = vadd.f32 %v93, %v279
    %v281 = vpop.f32.mrb[0].mxu0
    %v282 = vadd.f32 %v97, %v281
    %v283 = vpop.f32.mrb[0].mxu0
    %v284 = vadd.f32 %v93, %v283
    %v285 = vpop.f32.mrb[0].mxu0
    %v286 = vadd.f32 %v97, %v285
    %287 = vmatprep.mubr.bf16.mxu0 0
    %288 = vmatmul.mubr.bf16.gmra.mrb[0].mxu0 %v190
    %v289 = vpop.f32.mrb[0].mxu0
    %v290 = vadd.f32 %v93, %v289
    %v291 = vpop.f32.mrb[0].mxu0
    %v292 = vadd.f32 %v97, %v291
    %v293 = vpop.f32.mrb[0].mxu0
    %v294 = vadd.f32 %v93, %v293
    %v295 = vpop.f32.mrb[0].mxu0
    %v296 = vadd.f32 %v97, %v295
    %297 = vmatprep.mubr.bf16.mxu0 0
    %298 = vmatmul.mubr.bf16.gmra.mrb[0].mxu0 %v193
    %v299 = vpop.f32.mrb[0].mxu0
    %v300 = vadd.f32 %v93, %v299
    %v301 = vpop.f32.mrb[0].mxu0
    %v302 = vadd.f32 %v97, %v301
    %v303 = vpop.f32.mrb[0].mxu0
    %v304 = vadd.f32 %v93, %v303
    %v305 = vpop.f32.mrb[0].mxu0
    %v306 = vadd.f32 %v97, %v305
    %307 = vdwg.mxu0
    %308 = vmatprep.subr.bf16.mxu0 %v165
    %309 = vmatpush1.bf16.msra.mxu0 %v164
    %310 = vmatprep.subr.bf16.mxu0 0
    %311 = vmatpush1.bf16.msra.mxu0 0
    %312 = vmatprep.subr.bf16.mxu0 0
    %313 = vmatpush1.bf16.msra.mxu0 0
    %314 = vmatprep.subr.bf16.mxu0 0
    %315 = vmatpush1.bf16.msra.mxu0 0
    %316 = vmatprep.subr.bf16.mxu0 0
    %317 = vmatpush1.bf16.msra.mxu0 0
    %318 = vmatprep.subr.bf16.mxu0 0
    %319 = vmatpush1.bf16.msra.mxu0 0
    %320 = vmatprep.subr.bf16.mxu0 0
    %321 = vmatpush1.bf16.msra.mxu0 0
    %322 = vmatprep.subr.bf16.mxu0 0
    %323 = vmatpush1.bf16.msra.mxu0 0
    %324 = vmatprep.subr.bf16.mxu0 0
    %325 = vmatpush1.bf16.msra.mxu0 0
    %326 = vmatprep.subr.bf16.mxu0 0
    %327 = vmatpush1.bf16.msra.mxu0 0
    %328 = vmatprep.subr.bf16.mxu0 0
    %329 = vmatpush1.bf16.msra.mxu0 0
    %330 = vmatprep.subr.bf16.mxu0 0
    %331 = vmatpush1.bf16.msra.mxu0 0
    %332 = vmatprep.subr.bf16.mxu0 0
    %333 = vmatpush1.bf16.msra.mxu0 0
    %334 = vmatprep.subr.bf16.mxu0 0
    %335 = vmatpush1.bf16.msra.mxu0 0
    %336 = vmatprep.subr.bf16.mxu0 0
    %337 = vmatpush1.bf16.msra.mxu0 0
    %338 = vmatprep.subr.bf16.mxu0 0
    %339 = vmatpush1.bf16.msra.mxu0 0
    %340 = vmatprep.mubr.bf16.mxu0 0
    %341 = vmatmul.mubr.bf16.gmra.mrb[0].mxu0 %v172
    %v342 = vpop.f32.mrb[0].mxu0
    %v343 = vadd.f32 %v101, %v342
    %v344 = vpop.f32.mrb[0].mxu0
    %v345 = vadd.f32 %v105, %v344
    %v346 = vpop.f32.mrb[0].mxu0
    %v347 = vadd.f32 %v101, %v346
    %v348 = vpop.f32.mrb[0].mxu0
    %v349 = vadd.f32 %v105, %v348
    %350 = vmatprep.mubr.bf16.mxu0 0
    %351 = vmatmul.mubr.bf16.gmra.mrb[0].mxu0 %v175
    %v352 = vpop.f32.mrb[0].mxu0
    %v353 = vadd.f32 %v101, %v352
    %v354 = vpop.f32.mrb[0].mxu0
    %v355 = vadd.f32 %v105, %v354
    %v356 = vpop.f32.mrb[0].mxu0
    %v357 = vadd.f32 %v101, %v356
    %v358 = vpop.f32.mrb[0].mxu0
    %v359 = vadd.f32 %v105, %v358
    %360 = vmatprep.mubr.bf16.mxu0 0
    %361 = vmatmul.mubr.bf16.gmra.mrb[0].mxu0 %v178
    %v362 = vpop.f32.mrb[0].mxu0
    %v363 = vadd.f32 %v101, %v362
    %v364 = vpop.f32.mrb[0].mxu0
    %v365 = vadd.f32 %v105, %v364
    %v366 = vpop.f32.mrb[0].mxu0
    %v367 = vadd.f32 %v101, %v366
    %v368 = vpop.f32.mrb[0].mxu0
    %v369 = vadd.f32 %v105, %v368
    %370 = vmatprep.mubr.bf16.mxu0 0
    %371 = vmatmul.mubr.bf16.gmra.mrb[0].mxu0 %v181
    %v372 = vpop.f32.mrb[0].mxu0
    %v373 = vadd.f32 %v101, %v372
    %v374 = vpop.f32.mrb[0].mxu0
    %v375 = vadd.f32 %v105, %v374
    %v376 = vpop.f32.mrb[0].mxu0
    %v377 = vadd.f32 %v101, %v376
    %v378 = vpop.f32.mrb[0].mxu0
    %v379 = vadd.f32 %v105, %v378
    %380 = vmatprep.mubr.bf16.mxu0 0
    %381 = vmatmul.mubr.bf16.gmra.mrb[0].mxu0 %v184
    %v382 = vpop.f32.mrb[0].mxu0
    %v383 = vadd.f32 %v101, %v382
    %v384 = vpop.f32.mrb[0].mxu0
    %v385 = vadd.f32 %v105, %v384
    %v386 = vpop.f32.mrb[0].mxu0
    %v387 = vadd.f32 %v101, %v386
    %v388 = vpop.f32.mrb[0].mxu0
    %v389 = vadd.f32 %v105, %v388
    %390 = vmatprep.mubr.bf16.mxu0 0
    %391 = vmatmul.mubr.bf16.gmra.mrb[0].mxu0 %v187
    %v392 = vpop.f32.mrb[0].mxu0
    %v393 = vadd.f32 %v101, %v392
    %v394 = vpop.f32.mrb[0].mxu0
    %v395 = vadd.f32 %v105, %v394
    %v396 = vpop.f32.mrb[0].mxu0
    %v397 = vadd.f32 %v101, %v396
    %v398 = vpop.f32.mrb[0].mxu0
    %v399 = vadd.f32 %v105, %v398
    %400 = vmatprep.mubr.bf16.mxu0 0
    %401 = vmatmul.mubr.bf16.gmra.mrb[0].mxu0 %v190
    %v402 = vpop.f32.mrb[0].mxu0
    %v403 = vadd.f32 %v101, %v402
    %v404 = vpop.f32.mrb[0].mxu0
    %v405 = vadd.f32 %v105, %v404
    %v406 = vpop.f32.mrb[0].mxu0
    %v407 = vadd.f32 %v101, %v406
    %v408 = vpop.f32.mrb[0].mxu0
    %v409 = vadd.f32 %v105, %v408
    %410 = vmatprep.mubr.bf16.mxu0 0
    %411 = vmatmul.mubr.bf16.gmra.mrb[0].mxu0 %v193
    %v412 = vpop.f32.mrb[0].mxu0
    %v413 = vadd.f32 %v101, %v412
    %v414 = vpop.f32.mrb[0].mxu0
    %v415 = vadd.f32 %v105, %v414
    %v416 = vpop.f32.mrb[0].mxu0
    %v417 = vadd.f32 %v101, %v416
    %v418 = vpop.f32.mrb[0].mxu0
    %v419 = vadd.f32 %v105, %v418
    %420 = vdwg.mxu0
    %421 = vst [vmem:[#allocation2] sm:$0xff] %v230
    %422 = vst [vmem:[#allocation2 + $0x8] sm:$0xff] %v232
    %423 = vst [vmem:[#allocation2 + $0x10] sm:$0xff] %v343
    %424 = vst [vmem:[#allocation2 + $0x18] sm:$0xff] %v345
    %425 = vst [vmem:[#allocation2 + $0x20] sm:$0xff] %v234
    %426 = vst [vmem:[#allocation2 + $0x28] sm:$0xff] %v236
    %427 = vst [vmem:[#allocation2 + $0x30] sm:$0xff] %v347
    %428 = vst [vmem:[#allocation2 + $0x38] sm:$0xff] %v349
    %429 = vst [vmem:[#allocation2 + $0x40] sm:$0xff] %v240
    %430 = vst [vmem:[#allocation2 + $0x48] sm:$0xff] %v242
    %431 = vst [vmem:[#allocation2 + $0x50] sm:$0xff] %v353
    %432 = vst [vmem:[#allocation2 + $0x58] sm:$0xff] %v355
    %433 = vst [vmem:[#allocation2 + $0x60] sm:$0xff] %v244
    %434 = vst [vmem:[#allocation2 + $0x68] sm:$0xff] %v246
    %435 = vst [vmem:[#allocation2 + $0x70] sm:$0xff] %v357
    %436 = vst [vmem:[#allocation2 + $0x78] sm:$0xff] %v359
    %437 = vst [vmem:[#allocation2 + $0x80] sm:$0xff] %v250
    %438 = vst [vmem:[#allocation2 + $0x88] sm:$0xff] %v252
    %439 = vst [vmem:[#allocation2 + $0x90] sm:$0xff] %v363
    %440 = vst [vmem:[#allocation2 + $0x98] sm:$0xff] %v365
    %441 = vst [vmem:[#allocation2 + $0xa0] sm:$0xff] %v254
    %442 = vst [vmem:[#allocation2 + $0xa8] sm:$0xff] %v256
    %443 = vst [vmem:[#allocation2 + $0xb0] sm:$0xff] %v367
    %444 = vst [vmem:[#allocation2 + $0xb8] sm:$0xff] %v369
    %445 = vst [vmem:[#allocation2 + $0xc0] sm:$0xff] %v260
    %446 = vst [vmem:[#allocation2 + $0xc8] sm:$0xff] %v262
    %447 = vst [vmem:[#allocation2 + $0xd0] sm:$0xff] %v373
    %448 = vst [vmem:[#allocation2 + $0xd8] sm:$0xff] %v375
    %449 = vst [vmem:[#allocation2 + $0xe0] sm:$0xff] %v264
    %450 = vst [vmem:[#allocation2 + $0xe8] sm:$0xff] %v266
    %451 = vst [vmem:[#allocation2 + $0xf0] sm:$0xff] %v377
    %452 = vst [vmem:[#allocation2 + $0xf8] sm:$0xff] %v379
    %453 = vst [vmem:[#allocation2 + $0x100] sm:$0xff] %v270
    %454 = vst [vmem:[#allocation2 + $0x108] sm:$0xff] %v272
    %455 = vst [vmem:[#allocation2 + $0x110] sm:$0xff] %v383
    %456 = vst [vmem:[#allocation2 + $0x118] sm:$0xff] %v385
    %457 = vst [vmem:[#allocation2 + $0x120] sm:$0xff] %v274
    %458 = vst [vmem:[#allocation2 + $0x128] sm:$0xff] %v276
    %459 = vst [vmem:[#allocation2 + $0x130] sm:$0xff] %v387
    %460 = vst [vmem:[#allocation2 + $0x138] sm:$0xff] %v389
    %461 = vst [vmem:[#allocation2 + $0x140] sm:$0xff] %v280
    %462 = vst [vmem:[#allocation2 + $0x148] sm:$0xff] %v282
    %463 = vst [vmem:[#allocation2 + $0x150] sm:$0xff] %v393
    %464 = vst [vmem:[#allocation2 + $0x158] sm:$0xff] %v395
    %465 = vst [vmem:[#allocation2 + $0x160] sm:$0xff] %v284
    %466 = vst [vmem:[#allocation2 + $0x168] sm:$0xff] %v286
    %467 = vst [vmem:[#allocation2 + $0x170] sm:$0xff] %v397
    %468 = vst [vmem:[#allocation2 + $0x178] sm:$0xff] %v399
    %469 = vst [vmem:[#allocation2 + $0x180] sm:$0xff] %v290
    %470 = vst [vmem:[#allocation2 + $0x188] sm:$0xff] %v292
    %471 = vst [vmem:[#allocation2 + $0x190] sm:$0xff] %v403
    %472 = vst [vmem:[#allocation2 + $0x198] sm:$0xff] %v405
    %473 = vst [vmem:[#allocation2 + $0x1a0] sm:$0xff] %v294
    %474 = vst [vmem:[#allocation2 + $0x1a8] sm:$0xff] %v296
    %475 = vst [vmem:[#allocation2 + $0x1b0] sm:$0xff] %v407
    %476 = vst [vmem:[#allocation2 + $0x1b8] sm:$0xff] %v409
    %477 = vst [vmem:[#allocation2 + $0x1c0] sm:$0xff] %v300
    %478 = vst [vmem:[#allocation2 + $0x1c8] sm:$0xff] %v302
    %479 = vst [vmem:[#allocation2 + $0x1d0] sm:$0xff] %v413
    %480 = vst [vmem:[#allocation2 + $0x1d8] sm:$0xff] %v415
    %481 = vst [vmem:[#allocation2 + $0x1e0] sm:$0xff] %v304
    %482 = vst [vmem:[#allocation2 + $0x1e8] sm:$0xff] %v306
    %483 = vst [vmem:[#allocation2 + $0x1f0] sm:$0xff] %v417
    %484 = vst [vmem:[#allocation2 + $0x1f8] sm:$0xff] %v419
    %v485 = vld [vmem:[#allocation5] sm:$0xff]
    %v486 = vld [vmem:[#allocation5 + $0x8] sm:$0xff]
    %v487 = vld [vmem:[#allocation5 + $0x10] sm:$0xff]
    %v488 = vld [vmem:[#allocation5 + $0x18] sm:$0xff]
    %v489 = vld [vmem:[#allocation5 + $0x20] sm:$0xff]
    %v490 = vld [vmem:[#allocation5 + $0x28] sm:$0xff]
    %v491 = vld [vmem:[#allocation5 + $0x30] sm:$0xff]
    %v492 = vld [vmem:[#allocation5 + $0x38] sm:$0xff]
    %v493 = vld [vmem:[#allocation5 + $0x40] sm:$0xff]
    %v494 = vld [vmem:[#allocation5 + $0x48] sm:$0xff]
    %v495 = vld [vmem:[#allocation5 + $0x50] sm:$0xff]
    %v496 = vld [vmem:[#allocation5 + $0x58] sm:$0xff]
    %v497 = vld [vmem:[#allocation5 + $0x60] sm:$0xff]
    %v498 = vld [vmem:[#allocation5 + $0x68] sm:$0xff]
    %v499 = vld [vmem:[#allocation5 + $0x70] sm:$0xff]
    %v500 = vld [vmem:[#allocation5 + $0x78] sm:$0xff]
    %v501 = vld [vmem:[#allocation5 + $0x80] sm:$0xff]
    %v502 = vld [vmem:[#allocation5 + $0x88] sm:$0xff]
    %v503 = vld [vmem:[#allocation5 + $0x90] sm:$0xff]
    %v504 = vld [vmem:[#allocation5 + $0x98] sm:$0xff]
    %v505 = vld [vmem:[#allocation5 + $0xa0] sm:$0xff]
    %v506 = vld [vmem:[#allocation5 + $0xa8] sm:$0xff]
    %v507 = vld [vmem:[#allocation5 + $0xb0] sm:$0xff]
    %v508 = vld [vmem:[#allocation5 + $0xb8] sm:$0xff]
    %v509 = vld [vmem:[#allocation5 + $0xc0] sm:$0xff]
    %v510 = vld [vmem:[#allocation5 + $0xc8] sm:$0xff]
    %v511 = vld [vmem:[#allocation5 + $0xd0] sm:$0xff]
    %v512 = vld [vmem:[#allocation5 + $0xd8] sm:$0xff]
    %v513 = vld [vmem:[#allocation5 + $0xe0] sm:$0xff]
    %v514 = vld [vmem:[#allocation5 + $0xe8] sm:$0xff]
    %v515 = vld [vmem:[#allocation5 + $0xf0] sm:$0xff]
    %v516 = vld [vmem:[#allocation5 + $0xf8] sm:$0xff]
    %v517 = vld [vmem:[%s5] sm:$0xff]
    %v518 = vld [vmem:[%s5 + $0x8] sm:$0xff]
    %v519 = vld [vmem:[%s6] sm:$0xff]
    %v520 = vld [vmem:[%s6 + $0x8] sm:$0xff]
    %s521 = smul.u32 0, 4
    %s522 = smul.addr %s521, 8
    %s523 = scalar_lea.vmem [#allocation2], %s522
    %v524 = vld [vmem:[%s523] sm:$0xff]
    %v525 = vld [vmem:[%s523 + $0x8] sm:$0xff]
    %v526 = vld [vmem:[%s523 + $0x10] sm:$0xff]
    %v527 = vld [vmem:[%s523 + $0x18] sm:$0xff]
    %v528 = vld [vmem:[%s523 + $0x20] sm:$0xff]
    %v529 = vld [vmem:[%s523 + $0x28] sm:$0xff]
    %v530 = vld [vmem:[%s523 + $0x30] sm:$0xff]
    %v531 = vld [vmem:[%s523 + $0x38] sm:$0xff]
    %v532 = vpack.c.bf16 %v518, %v517
    %v565 = vunpack.c.l.b16 %v485
    %v566 = vunpack.c.h.b16 %v485
    %v567 = vunpack.c.l.b16 %v486
    %v568 = vunpack.c.h.b16 %v486
    %v569 = vunpack.c.l.b16 %v487
    %v570 = vunpack.c.h.b16 %v487
    %v571 = vunpack.c.l.b16 %v488
    %v572 = vunpack.c.h.b16 %v488
    %v573 = vunpack.c.l.b16 %v489
    %v574 = vunpack.c.h.b16 %v489
    %v575 = vunpack.c.l.b16 %v490
    %v576 = vunpack.c.h.b16 %v490
    %v577 = vunpack.c.l.b16 %v491
    %v578 = vunpack.c.h.b16 %v491
    %v579 = vunpack.c.l.b16 %v492
    %v580 = vunpack.c.h.b16 %v492
    %v581 = vunpack.c.l.b16 %v493
    %v582 = vunpack.c.h.b16 %v493
    %v583 = vunpack.c.l.b16 %v494
    %v584 = vunpack.c.h.b16 %v494
    %v585 = vunpack.c.l.b16 %v495
    %v586 = vunpack.c.h.b16 %v495
    %v587 = vunpack.c.l.b16 %v496
    %v588 = vunpack.c.h.b16 %v496
    %v589 = vunpack.c.l.b16 %v497
    %v590 = vunpack.c.h.b16 %v497
    %v591 = vunpack.c.l.b16 %v498
    %v592 = vunpack.c.h.b16 %v498
    %v593 = vunpack.c.l.b16 %v499
    %v594 = vunpack.c.h.b16 %v499
    %v595 = vunpack.c.l.b16 %v500
    %v596 = vunpack.c.h.b16 %v500
    %v597 = vunpack.c.l.b16 %v501
    %v598 = vunpack.c.h.b16 %v501
    %v599 = vunpack.c.l.b16 %v502
    %v600 = vunpack.c.h.b16 %v502
    %v601 = vunpack.c.l.b16 %v503
    %v602 = vunpack.c.h.b16 %v503
    %v603 = vunpack.c.l.b16 %v504
    %v604 = vunpack.c.h.b16 %v504
    %v605 = vunpack.c.l.b16 %v505
    %v606 = vunpack.c.h.b16 %v505
    %v607 = vunpack.c.l.b16 %v506
    %v608 = vunpack.c.h.b16 %v506
    %v609 = vunpack.c.l.b16 %v507
    %v610 = vunpack.c.h.b16 %v507
    %v611 = vunpack.c.l.b16 %v508
    %v612 = vunpack.c.h.b16 %v508
    %v613 = vunpack.c.l.b16 %v509
    %v614 = vunpack.c.h.b16 %v509
    %v615 = vunpack.c.l.b16 %v510
    %v616 = vunpack.c.h.b16 %v510
    %v617 = vunpack.c.l.b16 %v511
    %v618 = vunpack.c.h.b16 %v511
    %v619 = vunpack.c.l.b16 %v512
    %v620 = vunpack.c.h.b16 %v512
    %v621 = vunpack.c.l.b16 %v513
    %v622 = vunpack.c.h.b16 %v513
    %v623 = vunpack.c.l.b16 %v514
    %v624 = vunpack.c.h.b16 %v514
    %v625 = vunpack.c.l.b16 %v515
    %v626 = vunpack.c.h.b16 %v515
    %v627 = vunpack.c.l.b16 %v516
    %v628 = vunpack.c.h.b16 %v516
    %v629 = vpack.c.b16 %v569, %v565
    %v630 = vpack.c.b16 %v570, %v566
    %v631 = vpack.c.b16 %v571, %v567
    %v632 = vpack.c.b16 %v572, %v568
    %v633 = vpack.c.b16 %v577, %v573
    %v634 = vpack.c.b16 %v578, %v574
    %v635 = vpack.c.b16 %v579, %v575
    %v636 = vpack.c.b16 %v580, %v576
    %v637 = vpack.c.b16 %v585, %v581
    %v638 = vpack.c.b16 %v586, %v582
    %v639 = vpack.c.b16 %v587, %v583
    %v640 = vpack.c.b16 %v588, %v584
    %v641 = vpack.c.b16 %v593, %v589
    %v642 = vpack.c.b16 %v594, %v590
    %v643 = vpack.c.b16 %v595, %v591
    %v644 = vpack.c.b16 %v596, %v592
    %v645 = vpack.c.b16 %v601, %v597
    %v646 = vpack.c.b16 %v602, %v598
    %v647 = vpack.c.b16 %v603, %v599
    %v648 = vpack.c.b16 %v604, %v600
    %v649 = vpack.c.b16 %v609, %v605
    %v650 = vpack.c.b16 %v610, %v606
    %v651 = vpack.c.b16 %v611, %v607
    %v652 = vpack.c.b16 %v612, %v608
    %v653 = vpack.c.b16 %v617, %v613
    %v654 = vpack.c.b16 %v618, %v614
    %v655 = vpack.c.b16 %v619, %v615
    %v656 = vpack.c.b16 %v620, %v616
    %v657 = vpack.c.b16 %v625, %v621
    %v658 = vpack.c.b16 %v626, %v622
    %v659 = vpack.c.b16 %v627, %v623
    %v660 = vpack.c.b16 %v628, %v624
    %693 = vmatprep.subr.bf16.mxu0 %v630
    %694 = vmatpush1.bf16.msra.mxu0 %v629
    %695 = vmatprep.subr.bf16.mxu0 %v634
    %696 = vmatpush1.bf16.msra.mxu0 %v633
    %697 = vmatprep.subr.bf16.mxu0 %v638
    %698 = vmatpush1.bf16.msra.mxu0 %v637
    %699 = vmatprep.subr.bf16.mxu0 %v642
    %700 = vmatpush1.bf16.msra.mxu0 %v641
    %701 = vmatprep.subr.bf16.mxu0 %v646
    %702 = vmatpush1.bf16.msra.mxu0 %v645
    %703 = vmatprep.subr.bf16.mxu0 %v650
    %704 = vmatpush1.bf16.msra.mxu0 %v649
    %705 = vmatprep.subr.bf16.mxu0 %v654
    %706 = vmatpush1.bf16.msra.mxu0 %v653
    %707 = vmatprep.subr.bf16.mxu0 %v658
    %708 = vmatpush1.bf16.msra.mxu0 %v657
    %709 = vmatprep.subr.bf16.mxu0 0
    %710 = vmatpush1.bf16.msra.mxu0 0
    %711 = vmatprep.subr.bf16.mxu0 0
    %712 = vmatpush1.bf16.msra.mxu0 0
    %713 = vmatprep.subr.bf16.mxu0 0
    %714 = vmatpush1.bf16.msra.mxu0 0
    %715 = vmatprep.subr.bf16.mxu0 0
    %716 = vmatpush1.bf16.msra.mxu0 0
    %717 = vmatprep.subr.bf16.mxu0 0
    %718 = vmatpush1.bf16.msra.mxu0 0
    %719 = vmatprep.subr.bf16.mxu0 0
    %720 = vmatpush1.bf16.msra.mxu0 0
    %721 = vmatprep.subr.bf16.mxu0 0
    %722 = vmatpush1.bf16.msra.mxu0 0
    %723 = vmatprep.subr.bf16.mxu0 0
    %724 = vmatpush1.bf16.msra.mxu0 0
    %725 = vmatprep.mubr.bf16.mxu0 0
    %726 = vmatmul.mubr.bf16.gmra.mrb[0].mxu0 %v532
    %v727 = vpop.f32.mrb[0].mxu0
    %v728 = vadd.f32 0.0, %v727
    %v729 = vpop.f32.mrb[0].mxu0
    %v730 = vadd.f32 0.0, %v729
    %v731 = vpop.f32.mrb[0].mxu0
    %v732 = vadd.f32 0.0, %v731
    %v733 = vpop.f32.mrb[0].mxu0
    %v734 = vadd.f32 0.0, %v733
    %735 = vdwg.mxu0
    %736 = vmatprep.subr.bf16.mxu0 %v632
    %737 = vmatpush1.bf16.msra.mxu0 %v631
    %738 = vmatprep.subr.bf16.mxu0 %v636
    %739 = vmatpush1.bf16.msra.mxu0 %v635
    %740 = vmatprep.subr.bf16.mxu0 %v640
    %741 = vmatpush1.bf16.msra.mxu0 %v639
    %742 = vmatprep.subr.bf16.mxu0 %v644
    %743 = vmatpush1.bf16.msra.mxu0 %v643
    %744 = vmatprep.subr.bf16.mxu0 %v648
    %745 = vmatpush1.bf16.msra.mxu0 %v647
    %746 = vmatprep.subr.bf16.mxu0 %v652
    %747 = vmatpush1.bf16.msra.mxu0 %v651
    %748 = vmatprep.subr.bf16.mxu0 %v656
    %749 = vmatpush1.bf16.msra.mxu0 %v655
    %750 = vmatprep.subr.bf16.mxu0 %v660
    %751 = vmatpush1.bf16.msra.mxu0 %v659
    %752 = vmatprep.subr.bf16.mxu0 0
    %753 = vmatpush1.bf16.msra.mxu0 0
    %754 = vmatprep.subr.bf16.mxu0 0
    %755 = vmatpush1.bf16.msra.mxu0 0
    %756 = vmatprep.subr.bf16.mxu0 0
    %757 = vmatpush1.bf16.msra.mxu0 0
    %758 = vmatprep.subr.bf16.mxu0 0
    %759 = vmatpush1.bf16.msra.mxu0 0
    %760 = vmatprep.subr.bf16.mxu0 0
    %761 = vmatpush1.bf16.msra.mxu0 0
    %762 = vmatprep.subr.bf16.mxu0 0
    %763 = vmatpush1.bf16.msra.mxu0 0
    %764 = vmatprep.subr.bf16.mxu0 0
    %765 = vmatpush1.bf16.msra.mxu0 0
    %766 = vmatprep.subr.bf16.mxu0 0
    %767 = vmatpush1.bf16.msra.mxu0 0
    %768 = vmatprep.mubr.bf16.mxu0 0
    %769 = vmatmul.mubr.bf16.gmra.mrb[0].mxu0 %v532
    %v770 = vpop.f32.mrb[0].mxu0
    %v771 = vadd.f32 0.0, %v770
    %v772 = vpop.f32.mrb[0].mxu0
    %v773 = vadd.f32 0.0, %v772
    %v774 = vpop.f32.mrb[0].mxu0
    %v775 = vadd.f32 0.0, %v774
    %v776 = vpop.f32.mrb[0].mxu0
    %v777 = vadd.f32 0.0, %v776
    %778 = vdwg.mxu0
    %v779 = vadd.f32 %v524, %v728
    %v780 = vadd.f32 %v525, %v730
    %v781 = vadd.f32 %v526, %v771
    %v782 = vadd.f32 %v527, %v773
    %v783 = vadd.f32 %v528, %v732
    %v784 = vadd.f32 %v529, %v734
    %v785 = vadd.f32 %v530, %v775
    %v786 = vadd.f32 %v531, %v777
    %v787 = vmul.f32 %v779, 0.5
    %v788 = vmul.f32 %v783, 0.5
    %v789 = vtanh.pop %v787
    %v790 = vtanh.pop %v788
    %v791 = vmul.f32 %v789, 0.5
    %v792 = vmul.f32 %v790, 0.5
    %v793 = vadd.f32 %v791, 0.5
    %v794 = vadd.f32 %v792, 0.5
    %v795 = vmul.f32 %v780, 0.5
    %v796 = vmul.f32 %v784, 0.5
    %v797 = vtanh.pop %v795
    %v798 = vtanh.pop %v796
    %v799 = vmul.f32 %v797, 0.5
    %v800 = vmul.f32 %v798, 0.5
    %v801 = vadd.f32 %v799, 0.5
    %v802 = vadd.f32 %v800, 0.5
    %v803 = vtanh.pop %v781
    %v804 = vtanh.pop %v785
    %v805 = vmul.f32 %v782, 0.5
    %v806 = vmul.f32 %v786, 0.5
    %v807 = vtanh.pop %v805
    %v808 = vtanh.pop %v806
    %v809 = vmul.f32 %v807, 0.5
    %v810 = vmul.f32 %v808, 0.5
    %v811 = vadd.f32 %v809, 0.5
    %v812 = vadd.f32 %v810, 0.5
    %v813 = vmul.f32 %v801, %v519
    %v814 = vmul.f32 %v802, %v520
    %v815 = vmul.f32 %v793, %v803
    %v816 = vmul.f32 %v794, %v804
    %v817 = vadd.f32 %v813, %v815
    %v818 = vadd.f32 %v814, %v816
    %v819 = vtanh.pop %v817
    %v820 = vtanh.pop %v818
    %v821 = vmul.f32 %v811, %v819
    %v822 = vmul.f32 %v812, %v820
    %823 = vst [vmem:[%s6] sm:$0xff] %v817
    %824 = vst [vmem:[%s6 + $0x8] sm:$0xff] %v818
    %825 = vst [vmem:[%s5] sm:$0xff] %v821
    %826 = vst [vmem:[%s5 + $0x8] sm:$0xff] %v822
    %v827 = vpack.c.bf16 %v822, %v821
    %v829 = vunpack.c.l.b16 %v827
    %v830 = vunpack.c.h.b16 %v827
    %v831 = vpack.c.b16 %v829, %v829
    %v832 = vpack.c.b16 %v830, %v830
    %835 = vst [vmem:[%s4] sm:$0xf] %v831
    %836 = vst [vmem:[%s4 + $0x4] sm:$0xf] %v832
    %v837 = vld [vmem:[%s5] sm:$0xff]
    %v838 = vld [vmem:[%s5 + $0x8] sm:$0xff]
    %v839 = vld [vmem:[%s6] sm:$0xff]
    %v840 = vld [vmem:[%s6 + $0x8] sm:$0xff]
    %s841 = smul.u32 2, 4
    %s842 = smul.addr %s841, 8
    %s843 = scalar_lea.vmem [#allocation2], %s842
    %v844 = vld [vmem:[%s843] sm:$0xff]
    %v845 = vld [vmem:[%s843 + $0x8] sm:$0xff]
    %v846 = vld [vmem:[%s843 + $0x10] sm:$0xff]
    %v847 = vld [vmem:[%s843 + $0x18] sm:$0xff]
    %v848 = vld [vmem:[%s843 + $0x20] sm:$0xff]
    %v849 = vld [vmem:[%s843 + $0x28] sm:$0xff]
    %v850 = vld [vmem:[%s843 + $0x30] sm:$0xff]
    %v851 = vld [vmem:[%s843 + $0x38] sm:$0xff]
    %v852 = vpack.c.bf16 %v838, %v837
    %853 = vmatprep.subr.bf16.mxu0 %v630
    %854 = vmatpush1.bf16.msra.mxu0 %v629
    %855 = vmatprep.subr.bf16.mxu0 %v634
    %856 = vmatpush1.bf16.msra.mxu0 %v633
    %857 = vmatprep.subr.bf16.mxu0 %v638
    %858 = vmatpush1.bf16.msra.mxu0 %v637
    %859 = vmatprep.subr.bf16.mxu0 %v642
    %860 = vmatpush1.bf16.msra.mxu0 %v641
    %861 = vmatprep.subr.bf16.mxu0 %v646
    %862 = vmatpush1.bf16.msra.mxu0 %v645
    %863 = vmatprep.subr.bf16.mxu0 %v650
    %864 = vmatpush1.bf16.msra.mxu0 %v649
    %865 = vmatprep.subr.bf16.mxu0 %v654
    %866 = vmatpush1.bf16.msra.mxu0 %v653
    %867 = vmatprep.subr.bf16.mxu0 %v658
    %868 = vmatpush1.bf16.msra.mxu0 %v657
    %869 = vmatprep.subr.bf16.mxu0 0
    %870 = vmatpush1.bf16.msra.mxu0 0
    %871 = vmatprep.subr.bf16.mxu0 0
    %872 = vmatpush1.bf16.msra.mxu0 0
    %873 = vmatprep.subr.bf16.mxu0 0
    %874 = vmatpush1.bf16.msra.mxu0 0
    %875 = vmatprep.subr.bf16.mxu0 0
    %876 = vmatpush1.bf16.msra.mxu0 0
    %877 = vmatprep.subr.bf16.mxu0 0
    %878 = vmatpush1.bf16.msra.mxu0 0
    %879 = vmatprep.subr.bf16.mxu0 0
    %880 = vmatpush1.bf16.msra.mxu0 0
    %881 = vmatprep.subr.bf16.mxu0 0
    %882 = vmatpush1.bf16.msra.mxu0 0
    %883 = vmatprep.subr.bf16.mxu0 0
    %884 = vmatpush1.bf16.msra.mxu0 0
    %885 = vmatprep.mubr.bf16.mxu0 0
    %886 = vmatmul.mubr.bf16.gmra.mrb[0].mxu0 %v852
    %v887 = vpop.f32.mrb[0].mxu0
    %v888 = vadd.f32 0.0, %v887
    %v889 = vpop.f32.mrb[0].mxu0
    %v890 = vadd.f32 0.0, %v889
    %v891 = vpop.f32.mrb[0].mxu0
    %v892 = vadd.f32 0.0, %v891
    %v893 = vpop.f32.mrb[0].mxu0
    %v894 = vadd.f32 0.0, %v893
    %895 = vdwg.mxu0
    %896 = vmatprep.subr.bf16.mxu0 %v632
    %897 = vmatpush1.bf16.msra.mxu0 %v631
    %898 = vmatprep.subr.bf16.mxu0 %v636
    %899 = vmatpush1.bf16.msra.mxu0 %v635
    %900 = vmatprep.subr.bf16.mxu0 %v640
    %901 = vmatpush1.bf16.msra.mxu0 %v639
    %902 = vmatprep.subr.bf16.mxu0 %v644
    %903 = vmatpush1.bf16.msra.mxu0 %v643
    %904 = vmatprep.subr.bf16.mxu0 %v648
    %905 = vmatpush1.bf16.msra.mxu0 %v647
    %906 = vmatprep.subr.bf16.mxu0 %v652
    %907 = vmatpush1.bf16.msra.mxu0 %v651
    %908 = vmatprep.subr.bf16.mxu0 %v656
    %909 = vmatpush1.bf16.msra.mxu0 %v655
    %910 = vmatprep.subr.bf16.mxu0 %v660
    %911 = vmatpush1.bf16.msra.mxu0 %v659
    %912 = vmatprep.subr.bf16.mxu0 0
    %913 = vmatpush1.bf16.msra.mxu0 0
    %914 = vmatprep.subr.bf16.mxu0 0
    %915 = vmatpush1.bf16.msra.mxu0 0
    %916 = vmatprep.subr.bf16.mxu0 0
    %917 = vmatpush1.bf16.msra.mxu0 0
    %918 = vmatprep.subr.bf16.mxu0 0
    %919 = vmatpush1.bf16.msra.mxu0 0
    %920 = vmatprep.subr.bf16.mxu0 0
    %921 = vmatpush1.bf16.msra.mxu0 0
    %922 = vmatprep.subr.bf16.mxu0 0
    %923 = vmatpush1.bf16.msra.mxu0 0
    %924 = vmatprep.subr.bf16.mxu0 0
    %925 = vmatpush1.bf16.msra.mxu0 0
    %926 = vmatprep.subr.bf16.mxu0 0
    %927 = vmatpush1.bf16.msra.mxu0 0
    %928 = vmatprep.mubr.bf16.mxu0 0
    %929 = vmatmul.mubr.bf16.gmra.mrb[0].mxu0 %v852
    %v930 = vpop.f32.mrb[0].mxu0
    %v931 = vadd.f32 0.0, %v930
    %v932 = vpop.f32.mrb[0].mxu0
    %v933 = vadd.f32 0.0, %v932
    %v934 = vpop.f32.mrb[0].mxu0
    %v935 = vadd.f32 0.0, %v934
    %v936 = vpop.f32.mrb[0].mxu0
    %v937 = vadd.f32 0.0, %v936
    %938 = vdwg.mxu0
    %v939 = vadd.f32 %v844, %v888
    %v940 = vadd.f32 %v845, %v890
    %v941 = vadd.f32 %v846, %v931
    %v942 = vadd.f32 %v847, %v933
    %v943 = vadd.f32 %v848, %v892
    %v944 = vadd.f32 %v849, %v894
    %v945 = vadd.f32 %v850, %v935
    %v946 = vadd.f32 %v851, %v937
    %v947 = vmul.f32 %v939, 0.5
    %v948 = vmul.f32 %v943, 0.5
    %v949 = vtanh.pop %v947
    %v950 = vtanh.pop %v948
    %v951 = vmul.f32 %v949, 0.5
    %v952 = vmul.f32 %v950, 0.5
    %v953 = vadd.f32 %v951, 0.5
    %v954 = vadd.f32 %v952, 0.5
    %v955 = vmul.f32 %v940, 0.5
    %v956 = vmul.f32 %v944, 0.5
    %v957 = vtanh.pop %v955
    %v958 = vtanh.pop %v956
    %v959 = vmul.f32 %v957, 0.5
    %v960 = vmul.f32 %v958, 0.5
    %v961 = vadd.f32 %v959, 0.5
    %v962 = vadd.f32 %v960, 0.5
    %v963 = vtanh.pop %v941
    %v964 = vtanh.pop %v945
    %v965 = vmul.f32 %v942, 0.5
    %v966 = vmul.f32 %v946, 0.5
    %v967 = vtanh.pop %v965
    %v968 = vtanh.pop %v966
    %v969 = vmul.f32 %v967, 0.5
    %v970 = vmul.f32 %v968, 0.5
    %v971 = vadd.f32 %v969, 0.5
    %v972 = vadd.f32 %v970, 0.5
    %v973 = vmul.f32 %v961, %v839
    %v974 = vmul.f32 %v962, %v840
    %v975 = vmul.f32 %v953, %v963
    %v976 = vmul.f32 %v954, %v964
    %v977 = vadd.f32 %v973, %v975
    %v978 = vadd.f32 %v974, %v976
    %v979 = vtanh.pop %v977
    %v980 = vtanh.pop %v978
    %v981 = vmul.f32 %v971, %v979
    %v982 = vmul.f32 %v972, %v980
    %983 = vst [vmem:[%s6] sm:$0xff] %v977
    %984 = vst [vmem:[%s6 + $0x8] sm:$0xff] %v978
    %985 = vst [vmem:[%s5] sm:$0xff] %v981
    %986 = vst [vmem:[%s5 + $0x8] sm:$0xff] %v982
    %v987 = vpack.c.bf16 %v982, %v981
    %v989 = vunpack.c.l.b16 %v987
    %v990 = vunpack.c.h.b16 %v987
    %v991 = vpack.c.b16 %v989, %v989
    %v992 = vpack.c.b16 %v990, %v990
    %s995 = scalar_lea.vmem %s4, 8
    %996 = vst [vmem:[%s995] sm:$0xf] %v991
    %997 = vst [vmem:[%s995 + $0x4] sm:$0xf] %v992
    %v998 = vld [vmem:[%s5] sm:$0xff]
    %v999 = vld [vmem:[%s5 + $0x8] sm:$0xff]
    %v1000 = vld [vmem:[%s6] sm:$0xff]
    %v1001 = vld [vmem:[%s6 + $0x8] sm:$0xff]
    %s1002 = smul.u32 4, 4
    %s1003 = smul.addr %s1002, 8
    %s1004 = scalar_lea.vmem [#allocation2], %s1003
    %v1005 = vld [vmem:[%s1004] sm:$0xff]
    %v1006 = vld [vmem:[%s1004 + $0x8] sm:$0xff]
    %v1007 = vld [vmem:[%s1004 + $0x10] sm:$0xff]
    %v1008 = vld [vmem:[%s1004 + $0x18] sm:$0xff]
    %v1009 = vld [vmem:[%s1004 + $0x20] sm:$0xff]
    %v1010 = vld [vmem:[%s1004 + $0x28] sm:$0xff]
    %v1011 = vld [vmem:[%s1004 + $0x30] sm:$0xff]
    %v1012 = vld [vmem:[%s1004 + $0x38] sm:$0xff]
    %v1013 = vpack.c.bf16 %v999, %v998
    %1014 = vmatprep.subr.bf16.mxu0 %v630
    %1015 = vmatpush1.bf16.msra.mxu0 %v629
    %1016 = vmatprep.subr.bf16.mxu0 %v634
    %1017 = vmatpush1.bf16.msra.mxu0 %v633
    %1018 = vmatprep.subr.bf16.mxu0 %v638
    %1019 = vmatpush1.bf16.msra.mxu0 %v637
    %1020 = vmatprep.subr.bf16.mxu0 %v642
    %1021 = vmatpush1.bf16.msra.mxu0 %v641
    %1022 = vmatprep.subr.bf16.mxu0 %v646
    %1023 = vmatpush1.bf16.msra.mxu0 %v645
    %1024 = vmatprep.subr.bf16.mxu0 %v650
    %1025 = vmatpush1.bf16.msra.mxu0 %v649
    %1026 = vmatprep.subr.bf16.mxu0 %v654
    %1027 = vmatpush1.bf16.msra.mxu0 %v653
    %1028 = vmatprep.subr.bf16.mxu0 %v658
    %1029 = vmatpush1.bf16.msra.mxu0 %v657
    %1030 = vmatprep.subr.bf16.mxu0 0
    %1031 = vmatpush1.bf16.msra.mxu0 0
    %1032 = vmatprep.subr.bf16.mxu0 0
    %1033 = vmatpush1.bf16.msra.mxu0 0
    %1034 = vmatprep.subr.bf16.mxu0 0
    %1035 = vmatpush1.bf16.msra.mxu0 0
    %1036 = vmatprep.subr.bf16.mxu0 0
    %1037 = vmatpush1.bf16.msra.mxu0 0
    %1038 = vmatprep.subr.bf16.mxu0 0
    %1039 = vmatpush1.bf16.msra.mxu0 0
    %1040 = vmatprep.subr.bf16.mxu0 0
    %1041 = vmatpush1.bf16.msra.mxu0 0
    %1042 = vmatprep.subr.bf16.mxu0 0
    %1043 = vmatpush1.bf16.msra.mxu0 0
    %1044 = vmatprep.subr.bf16.mxu0 0
    %1045 = vmatpush1.bf16.msra.mxu0 0
    %1046 = vmatprep.mubr.bf16.mxu0 0
    %1047 = vmatmul.mubr.bf16.gmra.mrb[0].mxu0 %v1013
    %v1048 = vpop.f32.mrb[0].mxu0
    %v1049 = vadd.f32 0.0, %v1048
    %v1050 = vpop.f32.mrb[0].mxu0
    %v1051 = vadd.f32 0.0, %v1050
    %v1052 = vpop.f32.mrb[0].mxu0
    %v1053 = vadd.f32 0.0, %v1052
    %v1054 = vpop.f32.mrb[0].mxu0
    %v1055 = vadd.f32 0.0, %v1054
    %1056 = vdwg.mxu0
    %1057 = vmatprep.subr.bf16.mxu0 %v632
    %1058 = vmatpush1.bf16.msra.mxu0 %v631
    %1059 = vmatprep.subr.bf16.mxu0 %v636
    %1060 = vmatpush1.bf16.msra.mxu0 %v635
    %1061 = vmatprep.subr.bf16.mxu0 %v640
    %1062 = vmatpush1.bf16.msra.mxu0 %v639
    %1063 = vmatprep.subr.bf16.mxu0 %v644
    %1064 = vmatpush1.bf16.msra.mxu0 %v643
    %1065 = vmatprep.subr.bf16.mxu0 %v648
    %1066 = vmatpush1.bf16.msra.mxu0 %v647
    %1067 = vmatprep.subr.bf16.mxu0 %v652
    %1068 = vmatpush1.bf16.msra.mxu0 %v651
    %1069 = vmatprep.subr.bf16.mxu0 %v656
    %1070 = vmatpush1.bf16.msra.mxu0 %v655
    %1071 = vmatprep.subr.bf16.mxu0 %v660
    %1072 = vmatpush1.bf16.msra.mxu0 %v659
    %1073 = vmatprep.subr.bf16.mxu0 0
    %1074 = vmatpush1.bf16.msra.mxu0 0
    %1075 = vmatprep.subr.bf16.mxu0 0
    %1076 = vmatpush1.bf16.msra.mxu0 0
    %1077 = vmatprep.subr.bf16.mxu0 0
    %1078 = vmatpush1.bf16.msra.mxu0 0
    %1079 = vmatprep.subr.bf16.mxu0 0
    %1080 = vmatpush1.bf16.msra.mxu0 0
    %1081 = vmatprep.subr.bf16.mxu0 0
    %1082 = vmatpush1.bf16.msra.mxu0 0
    %1083 = vmatprep.subr.bf16.mxu0 0
    %1084 = vmatpush1.bf16.msra.mxu0 0
    %1085 = vmatprep.subr.bf16.mxu0 0
    %1086 = vmatpush1.bf16.msra.mxu0 0
    %1087 = vmatprep.subr.bf16.mxu0 0
    %1088 = vmatpush1.bf16.msra.mxu0 0
    %1089 = vmatprep.mubr.bf16.mxu0 0
    %1090 = vmatmul.mubr.bf16.gmra.mrb[0].mxu0 %v1013
    %v1091 = vpop.f32.mrb[0].mxu0
    %v1092 = vadd.f32 0.0, %v1091
    %v1093 = vpop.f32.mrb[0].mxu0
    %v1094 = vadd.f32 0.0, %v1093
    %v1095 = vpop.f32.mrb[0].mxu0
    %v1096 = vadd.f32 0.0, %v1095
    %v1097 = vpop.f32.mrb[0].mxu0
    %v1098 = vadd.f32 0.0, %v1097
    %1099 = vdwg.mxu0
    %v1100 = vadd.f32 %v1005, %v1049
    %v1101 = vadd.f32 %v1006, %v1051
    %v1102 = vadd.f32 %v1007, %v1092
    %v1103 = vadd.f32 %v1008, %v1094
    %v1104 = vadd.f32 %v1009, %v1053
    %v1105 = vadd.f32 %v1010, %v1055
    %v1106 = vadd.f32 %v1011, %v1096
    %v1107 = vadd.f32 %v1012, %v1098
    %v1108 = vmul.f32 %v1100, 0.5
    %v1109 = vmul.f32 %v1104, 0.5
    %v1110 = vtanh.pop %v1108
    %v1111 = vtanh.pop %v1109
    %v1112 = vmul.f32 %v1110, 0.5
    %v1113 = vmul.f32 %v1111, 0.5
    %v1114 = vadd.f32 %v1112, 0.5
    %v1115 = vadd.f32 %v1113, 0.5
    %v1116 = vmul.f32 %v1101, 0.5
    %v1117 = vmul.f32 %v1105, 0.5
    %v1118 = vtanh.pop %v1116
    %v1119 = vtanh.pop %v1117
    %v1120 = vmul.f32 %v1118, 0.5
    %v1121 = vmul.f32 %v1119, 0.5
    %v1122 = vadd.f32 %v1120, 0.5
    %v1123 = vadd.f32 %v1121, 0.5
    %v1124 = vtanh.pop %v1102
    %v1125 = vtanh.pop %v1106
    %v1126 = vmul.f32 %v1103, 0.5
    %v1127 = vmul.f32 %v1107, 0.5
    %v1128 = vtanh.pop %v1126
    %v1129 = vtanh.pop %v1127
    %v1130 = vmul.f32 %v1128, 0.5
    %v1131 = vmul.f32 %v1129, 0.5
    %v1132 = vadd.f32 %v1130, 0.5
    %v1133 = vadd.f32 %v1131, 0.5
    %v1134 = vmul.f32 %v1122, %v1000
    %v1135 = vmul.f32 %v1123, %v1001
    %v1136 = vmul.f32 %v1114, %v1124
    %v1137 = vmul.f32 %v1115, %v1125
    %v1138 = vadd.f32 %v1134, %v1136
    %v1139 = vadd.f32 %v1135, %v1137
    %v1140 = vtanh.pop %v1138
    %v1141 = vtanh.pop %v1139
    %v1142 = vmul.f32 %v1132, %v1140
    %v1143 = vmul.f32 %v1133, %v1141
    %1144 = vst [vmem:[%s6] sm:$0xff] %v1138
    %1145 = vst [vmem:[%s6 + $0x8] sm:$0xff] %v1139
    %1146 = vst [vmem:[%s5] sm:$0xff] %v1142
    %1147 = vst [vmem:[%s5 + $0x8] sm:$0xff] %v1143
    %v1148 = vpack.c.bf16 %v1143, %v1142
    %v1150 = vunpack.c.l.b16 %v1148
    %v1151 = vunpack.c.h.b16 %v1148
    %v1152 = vpack.c.b16 %v1150, %v1150
    %v1153 = vpack.c.b16 %v1151, %v1151
    %s1156 = scalar_lea.vmem %s4, 16
    %1157 = vst [vmem:[%s1156] sm:$0xf] %v1152
    %1158 = vst [vmem:[%s1156 + $0x4] sm:$0xf] %v1153
    %v1159 = vld [vmem:[%s5] sm:$0xff]
    %v1160 = vld [vmem:[%s5 + $0x8] sm:$0xff]
    %v1161 = vld [vmem:[%s6] sm:$0xff]
    %v1162 = vld [vmem:[%s6 + $0x8] sm:$0xff]
    %s1163 = smul.u32 6, 4
    %s1164 = smul.addr %s1163, 8
    %s1165 = scalar_lea.vmem [#allocation2], %s1164
    %v1166 = vld [vmem:[%s1165] sm:$0xff]
    %v1167 = vld [vmem:[%s1165 + $0x8] sm:$0xff]
    %v1168 = vld [vmem:[%s1165 + $0x10] sm:$0xff]
    %v1169 = vld [vmem:[%s1165 + $0x18] sm:$0xff]
    %v1170 = vld [vmem:[%s1165 + $0x20] sm:$0xff]
    %v1171 = vld [vmem:[%s1165 + $0x28] sm:$0xff]
    %v1172 = vld [vmem:[%s1165 + $0x30] sm:$0xff]
    %v1173 = vld [vmem:[%s1165 + $0x38] sm:$0xff]
    %v1174 = vpack.c.bf16 %v1160, %v1159
    %1175 = vmatprep.subr.bf16.mxu0 %v630
    %1176 = vmatpush1.bf16.msra.mxu0 %v629
    %1177 = vmatprep.subr.bf16.mxu0 %v634
    %1178 = vmatpush1.bf16.msra.mxu0 %v633
    %1179 = vmatprep.subr.bf16.mxu0 %v638
    %1180 = vmatpush1.bf16.msra.mxu0 %v637
    %1181 = vmatprep.subr.bf16.mxu0 %v642
    %1182 = vmatpush1.bf16.msra.mxu0 %v641
    %1183 = vmatprep.subr.bf16.mxu0 %v646
    %1184 = vmatpush1.bf16.msra.mxu0 %v645
    %1185 = vmatprep.subr.bf16.mxu0 %v650
    %1186 = vmatpush1.bf16.msra.mxu0 %v649
    %1187 = vmatprep.subr.bf16.mxu0 %v654
    %1188 = vmatpush1.bf16.msra.mxu0 %v653
    %1189 = vmatprep.subr.bf16.mxu0 %v658
    %1190 = vmatpush1.bf16.msra.mxu0 %v657
    %1191 = vmatprep.subr.bf16.mxu0 0
    %1192 = vmatpush1.bf16.msra.mxu0 0
    %1193 = vmatprep.subr.bf16.mxu0 0
    %1194 = vmatpush1.bf16.msra.mxu0 0
    %1195 = vmatprep.subr.bf16.mxu0 0
    %1196 = vmatpush1.bf16.msra.mxu0 0
    %1197 = vmatprep.subr.bf16.mxu0 0
    %1198 = vmatpush1.bf16.msra.mxu0 0
    %1199 = vmatprep.subr.bf16.mxu0 0
    %1200 = vmatpush1.bf16.msra.mxu0 0
    %1201 = vmatprep.subr.bf16.mxu0 0
    %1202 = vmatpush1.bf16.msra.mxu0 0
    %1203 = vmatprep.subr.bf16.mxu0 0
    %1204 = vmatpush1.bf16.msra.mxu0 0
    %1205 = vmatprep.subr.bf16.mxu0 0
    %1206 = vmatpush1.bf16.msra.mxu0 0
    %1207 = vmatprep.mubr.bf16.mxu0 0
    %1208 = vmatmul.mubr.bf16.gmra.mrb[0].mxu0 %v1174
    %v1209 = vpop.f32.mrb[0].mxu0
    %v1210 = vadd.f32 0.0, %v1209
    %v1211 = vpop.f32.mrb[0].mxu0
    %v1212 = vadd.f32 0.0, %v1211
    %v1213 = vpop.f32.mrb[0].mxu0
    %v1214 = vadd.f32 0.0, %v1213
    %v1215 = vpop.f32.mrb[0].mxu0
    %v1216 = vadd.f32 0.0, %v1215
    %1217 = vdwg.mxu0
    %1218 = vmatprep.subr.bf16.mxu0 %v632
    %1219 = vmatpush1.bf16.msra.mxu0 %v631
    %1220 = vmatprep.subr.bf16.mxu0 %v636
    %1221 = vmatpush1.bf16.msra.mxu0 %v635
    %1222 = vmatprep.subr.bf16.mxu0 %v640
    %1223 = vmatpush1.bf16.msra.mxu0 %v639
    %1224 = vmatprep.subr.bf16.mxu0 %v644
    %1225 = vmatpush1.bf16.msra.mxu0 %v643
    %1226 = vmatprep.subr.bf16.mxu0 %v648
    %1227 = vmatpush1.bf16.msra.mxu0 %v647
    %1228 = vmatprep.subr.bf16.mxu0 %v652
    %1229 = vmatpush1.bf16.msra.mxu0 %v651
    %1230 = vmatprep.subr.bf16.mxu0 %v656
    %1231 = vmatpush1.bf16.msra.mxu0 %v655
    %1232 = vmatprep.subr.bf16.mxu0 %v660
    %1233 = vmatpush1.bf16.msra.mxu0 %v659
    %1234 = vmatprep.subr.bf16.mxu0 0
    %1235 = vmatpush1.bf16.msra.mxu0 0
    %1236 = vmatprep.subr.bf16.mxu0 0
    %1237 = vmatpush1.bf16.msra.mxu0 0
    %1238 = vmatprep.subr.bf16.mxu0 0
    %1239 = vmatpush1.bf16.msra.mxu0 0
    %1240 = vmatprep.subr.bf16.mxu0 0
    %1241 = vmatpush1.bf16.msra.mxu0 0
    %1242 = vmatprep.subr.bf16.mxu0 0
    %1243 = vmatpush1.bf16.msra.mxu0 0
    %1244 = vmatprep.subr.bf16.mxu0 0
    %1245 = vmatpush1.bf16.msra.mxu0 0
    %1246 = vmatprep.subr.bf16.mxu0 0
    %1247 = vmatpush1.bf16.msra.mxu0 0
    %1248 = vmatprep.subr.bf16.mxu0 0
    %1249 = vmatpush1.bf16.msra.mxu0 0
    %1250 = vmatprep.mubr.bf16.mxu0 0
    %1251 = vmatmul.mubr.bf16.gmra.mrb[0].mxu0 %v1174
    %v1252 = vpop.f32.mrb[0].mxu0
    %v1253 = vadd.f32 0.0, %v1252
    %v1254 = vpop.f32.mrb[0].mxu0
    %v1255 = vadd.f32 0.0, %v1254
    %v1256 = vpop.f32.mrb[0].mxu0
    %v1257 = vadd.f32 0.0, %v1256
    %v1258 = vpop.f32.mrb[0].mxu0
    %v1259 = vadd.f32 0.0, %v1258
    %1260 = vdwg.mxu0
    %v1261 = vadd.f32 %v1166, %v1210
    %v1262 = vadd.f32 %v1167, %v1212
    %v1263 = vadd.f32 %v1168, %v1253
    %v1264 = vadd.f32 %v1169, %v1255
    %v1265 = vadd.f32 %v1170, %v1214
    %v1266 = vadd.f32 %v1171, %v1216
    %v1267 = vadd.f32 %v1172, %v1257
    %v1268 = vadd.f32 %v1173, %v1259
    %v1269 = vmul.f32 %v1261, 0.5
    %v1270 = vmul.f32 %v1265, 0.5
    %v1271 = vtanh.pop %v1269
    %v1272 = vtanh.pop %v1270
    %v1273 = vmul.f32 %v1271, 0.5
    %v1274 = vmul.f32 %v1272, 0.5
    %v1275 = vadd.f32 %v1273, 0.5
    %v1276 = vadd.f32 %v1274, 0.5
    %v1277 = vmul.f32 %v1262, 0.5
    %v1278 = vmul.f32 %v1266, 0.5
    %v1279 = vtanh.pop %v1277
    %v1280 = vtanh.pop %v1278
    %v1281 = vmul.f32 %v1279, 0.5
    %v1282 = vmul.f32 %v1280, 0.5
    %v1283 = vadd.f32 %v1281, 0.5
    %v1284 = vadd.f32 %v1282, 0.5
    %v1285 = vtanh.pop %v1263
    %v1286 = vtanh.pop %v1267
    %v1287 = vmul.f32 %v1264, 0.5
    %v1288 = vmul.f32 %v1268, 0.5
    %v1289 = vtanh.pop %v1287
    %v1290 = vtanh.pop %v1288
    %v1291 = vmul.f32 %v1289, 0.5
    %v1292 = vmul.f32 %v1290, 0.5
    %v1293 = vadd.f32 %v1291, 0.5
    %v1294 = vadd.f32 %v1292, 0.5
    %v1295 = vmul.f32 %v1283, %v1161
    %v1296 = vmul.f32 %v1284, %v1162
    %v1297 = vmul.f32 %v1275, %v1285
    %v1298 = vmul.f32 %v1276, %v1286
    %v1299 = vadd.f32 %v1295, %v1297
    %v1300 = vadd.f32 %v1296, %v1298
    %v1301 = vtanh.pop %v1299
    %v1302 = vtanh.pop %v1300
    %v1303 = vmul.f32 %v1293, %v1301
    %v1304 = vmul.f32 %v1294, %v1302
    %1305 = vst [vmem:[%s6] sm:$0xff] %v1299
    %1306 = vst [vmem:[%s6 + $0x8] sm:$0xff] %v1300
    %1307 = vst [vmem:[%s5] sm:$0xff] %v1303
    %1308 = vst [vmem:[%s5 + $0x8] sm:$0xff] %v1304
    %v1309 = vpack.c.bf16 %v1304, %v1303
    %v1311 = vunpack.c.l.b16 %v1309
    %v1312 = vunpack.c.h.b16 %v1309
    %v1313 = vpack.c.b16 %v1311, %v1311
    %v1314 = vpack.c.b16 %v1312, %v1312
    %s1317 = scalar_lea.vmem %s4, 24
    %1318 = vst [vmem:[%s1317] sm:$0xf] %v1313
    %1319 = vst [vmem:[%s1317 + $0x4] sm:$0xf] %v1314
    %v1320 = vld [vmem:[%s5] sm:$0xff]
    %v1321 = vld [vmem:[%s5 + $0x8] sm:$0xff]
    %v1322 = vld [vmem:[%s6] sm:$0xff]
    %v1323 = vld [vmem:[%s6 + $0x8] sm:$0xff]
    %s1324 = smul.u32 8, 4
    %s1325 = smul.addr %s1324, 8
    %s1326 = scalar_lea.vmem [#allocation2], %s1325
    %v1327 = vld [vmem:[%s1326] sm:$0xff]
    %v1328 = vld [vmem:[%s1326 + $0x8] sm:$0xff]
    %v1329 = vld [vmem:[%s1326 + $0x10] sm:$0xff]
    %v1330 = vld [vmem:[%s1326 + $0x18] sm:$0xff]
    %v1331 = vld [vmem:[%s1326 + $0x20] sm:$0xff]
    %v1332 = vld [vmem:[%s1326 + $0x28] sm:$0xff]
    %v1333 = vld [vmem:[%s1326 + $0x30] sm:$0xff]
    %v1334 = vld [vmem:[%s1326 + $0x38] sm:$0xff]
    %v1335 = vpack.c.bf16 %v1321, %v1320
    %1336 = vmatprep.subr.bf16.mxu0 %v630
    %1337 = vmatpush1.bf16.msra.mxu0 %v629
    %1338 = vmatprep.subr.bf16.mxu0 %v634
    %1339 = vmatpush1.bf16.msra.mxu0 %v633
    %1340 = vmatprep.subr.bf16.mxu0 %v638
    %1341 = vmatpush1.bf16.msra.mxu0 %v637
    %1342 = vmatprep.subr.bf16.mxu0 %v642
    %1343 = vmatpush1.bf16.msra.mxu0 %v641
    %1344 = vmatprep.subr.bf16.mxu0 %v646
    %1345 = vmatpush1.bf16.msra.mxu0 %v645
    %1346 = vmatprep.subr.bf16.mxu0 %v650
    %1347 = vmatpush1.bf16.msra.mxu0 %v649
    %1348 = vmatprep.subr.bf16.mxu0 %v654
    %1349 = vmatpush1.bf16.msra.mxu0 %v653
    %1350 = vmatprep.subr.bf16.mxu0 %v658
    %1351 = vmatpush1.bf16.msra.mxu0 %v657
    %1352 = vmatprep.subr.bf16.mxu0 0
    %1353 = vmatpush1.bf16.msra.mxu0 0
    %1354 = vmatprep.subr.bf16.mxu0 0
    %1355 = vmatpush1.bf16.msra.mxu0 0
    %1356 = vmatprep.subr.bf16.mxu0 0
    %1357 = vmatpush1.bf16.msra.mxu0 0
    %1358 = vmatprep.subr.bf16.mxu0 0
    %1359 = vmatpush1.bf16.msra.mxu0 0
    %1360 = vmatprep.subr.bf16.mxu0 0
    %1361 = vmatpush1.bf16.msra.mxu0 0
    %1362 = vmatprep.subr.bf16.mxu0 0
    %1363 = vmatpush1.bf16.msra.mxu0 0
    %1364 = vmatprep.subr.bf16.mxu0 0
    %1365 = vmatpush1.bf16.msra.mxu0 0
    %1366 = vmatprep.subr.bf16.mxu0 0
    %1367 = vmatpush1.bf16.msra.mxu0 0
    %1368 = vmatprep.mubr.bf16.mxu0 0
    %1369 = vmatmul.mubr.bf16.gmra.mrb[0].mxu0 %v1335
    %v1370 = vpop.f32.mrb[0].mxu0
    %v1371 = vadd.f32 0.0, %v1370
    %v1372 = vpop.f32.mrb[0].mxu0
    %v1373 = vadd.f32 0.0, %v1372
    %v1374 = vpop.f32.mrb[0].mxu0
    %v1375 = vadd.f32 0.0, %v1374
    %v1376 = vpop.f32.mrb[0].mxu0
    %v1377 = vadd.f32 0.0, %v1376
    %1378 = vdwg.mxu0
    %1379 = vmatprep.subr.bf16.mxu0 %v632
    %1380 = vmatpush1.bf16.msra.mxu0 %v631
    %1381 = vmatprep.subr.bf16.mxu0 %v636
    %1382 = vmatpush1.bf16.msra.mxu0 %v635
    %1383 = vmatprep.subr.bf16.mxu0 %v640
    %1384 = vmatpush1.bf16.msra.mxu0 %v639
    %1385 = vmatprep.subr.bf16.mxu0 %v644
    %1386 = vmatpush1.bf16.msra.mxu0 %v643
    %1387 = vmatprep.subr.bf16.mxu0 %v648
    %1388 = vmatpush1.bf16.msra.mxu0 %v647
    %1389 = vmatprep.subr.bf16.mxu0 %v652
    %1390 = vmatpush1.bf16.msra.mxu0 %v651
    %1391 = vmatprep.subr.bf16.mxu0 %v656
    %1392 = vmatpush1.bf16.msra.mxu0 %v655
    %1393 = vmatprep.subr.bf16.mxu0 %v660
    %1394 = vmatpush1.bf16.msra.mxu0 %v659
    %1395 = vmatprep.subr.bf16.mxu0 0
    %1396 = vmatpush1.bf16.msra.mxu0 0
    %1397 = vmatprep.subr.bf16.mxu0 0
    %1398 = vmatpush1.bf16.msra.mxu0 0
    %1399 = vmatprep.subr.bf16.mxu0 0
    %1400 = vmatpush1.bf16.msra.mxu0 0
    %1401 = vmatprep.subr.bf16.mxu0 0
    %1402 = vmatpush1.bf16.msra.mxu0 0
    %1403 = vmatprep.subr.bf16.mxu0 0
    %1404 = vmatpush1.bf16.msra.mxu0 0
    %1405 = vmatprep.subr.bf16.mxu0 0
    %1406 = vmatpush1.bf16.msra.mxu0 0
    %1407 = vmatprep.subr.bf16.mxu0 0
    %1408 = vmatpush1.bf16.msra.mxu0 0
    %1409 = vmatprep.subr.bf16.mxu0 0
    %1410 = vmatpush1.bf16.msra.mxu0 0
    %1411 = vmatprep.mubr.bf16.mxu0 0
    %1412 = vmatmul.mubr.bf16.gmra.mrb[0].mxu0 %v1335
    %v1413 = vpop.f32.mrb[0].mxu0
    %v1414 = vadd.f32 0.0, %v1413
    %v1415 = vpop.f32.mrb[0].mxu0
    %v1416 = vadd.f32 0.0, %v1415
    %v1417 = vpop.f32.mrb[0].mxu0
    %v1418 = vadd.f32 0.0, %v1417
    %v1419 = vpop.f32.mrb[0].mxu0
    %v1420 = vadd.f32 0.0, %v1419
    %1421 = vdwg.mxu0
    %v1422 = vadd.f32 %v1327, %v1371
    %v1423 = vadd.f32 %v1328, %v1373
    %v1424 = vadd.f32 %v1329, %v1414
    %v1425 = vadd.f32 %v1330, %v1416
    %v1426 = vadd.f32 %v1331, %v1375
    %v1427 = vadd.f32 %v1332, %v1377
    %v1428 = vadd.f32 %v1333, %v1418
    %v1429 = vadd.f32 %v1334, %v1420
    %v1430 = vmul.f32 %v1422, 0.5
    %v1431 = vmul.f32 %v1426, 0.5
    %v1432 = vtanh.pop %v1430
    %v1433 = vtanh.pop %v1431
    %v1434 = vmul.f32 %v1432, 0.5
    %v1435 = vmul.f32 %v1433, 0.5
    %v1436 = vadd.f32 %v1434, 0.5
    %v1437 = vadd.f32 %v1435, 0.5
    %v1438 = vmul.f32 %v1423, 0.5
    %v1439 = vmul.f32 %v1427, 0.5
    %v1440 = vtanh.pop %v1438
    %v1441 = vtanh.pop %v1439
    %v1442 = vmul.f32 %v1440, 0.5
    %v1443 = vmul.f32 %v1441, 0.5
    %v1444 = vadd.f32 %v1442, 0.5
    %v1445 = vadd.f32 %v1443, 0.5
    %v1446 = vtanh.pop %v1424
    %v1447 = vtanh.pop %v1428
    %v1448 = vmul.f32 %v1425, 0.5
    %v1449 = vmul.f32 %v1429, 0.5
    %v1450 = vtanh.pop %v1448
    %v1451 = vtanh.pop %v1449
    %v1452 = vmul.f32 %v1450, 0.5
    %v1453 = vmul.f32 %v1451, 0.5
    %v1454 = vadd.f32 %v1452, 0.5
    %v1455 = vadd.f32 %v1453, 0.5
    %v1456 = vmul.f32 %v1444, %v1322
    %v1457 = vmul.f32 %v1445, %v1323
    %v1458 = vmul.f32 %v1436, %v1446
    %v1459 = vmul.f32 %v1437, %v1447
    %v1460 = vadd.f32 %v1456, %v1458
    %v1461 = vadd.f32 %v1457, %v1459
    %v1462 = vtanh.pop %v1460
    %v1463 = vtanh.pop %v1461
    %v1464 = vmul.f32 %v1454, %v1462
    %v1465 = vmul.f32 %v1455, %v1463
    %1466 = vst [vmem:[%s6] sm:$0xff] %v1460
    %1467 = vst [vmem:[%s6 + $0x8] sm:$0xff] %v1461
    %1468 = vst [vmem:[%s5] sm:$0xff] %v1464
    %1469 = vst [vmem:[%s5 + $0x8] sm:$0xff] %v1465
    %v1470 = vpack.c.bf16 %v1465, %v1464
    %v1472 = vunpack.c.l.b16 %v1470
    %v1473 = vunpack.c.h.b16 %v1470
    %v1474 = vpack.c.b16 %v1472, %v1472
    %v1475 = vpack.c.b16 %v1473, %v1473
    %s1478 = scalar_lea.vmem %s4, 32
    %1479 = vst [vmem:[%s1478] sm:$0xf] %v1474
    %1480 = vst [vmem:[%s1478 + $0x4] sm:$0xf] %v1475
    %v1481 = vld [vmem:[%s5] sm:$0xff]
    %v1482 = vld [vmem:[%s5 + $0x8] sm:$0xff]
    %v1483 = vld [vmem:[%s6] sm:$0xff]
    %v1484 = vld [vmem:[%s6 + $0x8] sm:$0xff]
    %s1485 = smul.u32 10, 4
    %s1486 = smul.addr %s1485, 8
    %s1487 = scalar_lea.vmem [#allocation2], %s1486
    %v1488 = vld [vmem:[%s1487] sm:$0xff]
    %v1489 = vld [vmem:[%s1487 + $0x8] sm:$0xff]
    %v1490 = vld [vmem:[%s1487 + $0x10] sm:$0xff]
    %v1491 = vld [vmem:[%s1487 + $0x18] sm:$0xff]
    %v1492 = vld [vmem:[%s1487 + $0x20] sm:$0xff]
    %v1493 = vld [vmem:[%s1487 + $0x28] sm:$0xff]
    %v1494 = vld [vmem:[%s1487 + $0x30] sm:$0xff]
    %v1495 = vld [vmem:[%s1487 + $0x38] sm:$0xff]
    %v1496 = vpack.c.bf16 %v1482, %v1481
    %1497 = vmatprep.subr.bf16.mxu0 %v630
    %1498 = vmatpush1.bf16.msra.mxu0 %v629
    %1499 = vmatprep.subr.bf16.mxu0 %v634
    %1500 = vmatpush1.bf16.msra.mxu0 %v633
    %1501 = vmatprep.subr.bf16.mxu0 %v638
    %1502 = vmatpush1.bf16.msra.mxu0 %v637
    %1503 = vmatprep.subr.bf16.mxu0 %v642
    %1504 = vmatpush1.bf16.msra.mxu0 %v641
    %1505 = vmatprep.subr.bf16.mxu0 %v646
    %1506 = vmatpush1.bf16.msra.mxu0 %v645
    %1507 = vmatprep.subr.bf16.mxu0 %v650
    %1508 = vmatpush1.bf16.msra.mxu0 %v649
    %1509 = vmatprep.subr.bf16.mxu0 %v654
    %1510 = vmatpush1.bf16.msra.mxu0 %v653
    %1511 = vmatprep.subr.bf16.mxu0 %v658
    %1512 = vmatpush1.bf16.msra.mxu0 %v657
    %1513 = vmatprep.subr.bf16.mxu0 0
    %1514 = vmatpush1.bf16.msra.mxu0 0
    %1515 = vmatprep.subr.bf16.mxu0 0
    %1516 = vmatpush1.bf16.msra.mxu0 0
    %1517 = vmatprep.subr.bf16.mxu0 0
    %1518 = vmatpush1.bf16.msra.mxu0 0
    %1519 = vmatprep.subr.bf16.mxu0 0
    %1520 = vmatpush1.bf16.msra.mxu0 0
    %1521 = vmatprep.subr.bf16.mxu0 0
    %1522 = vmatpush1.bf16.msra.mxu0 0
    %1523 = vmatprep.subr.bf16.mxu0 0
    %1524 = vmatpush1.bf16.msra.mxu0 0
    %1525 = vmatprep.subr.bf16.mxu0 0
    %1526 = vmatpush1.bf16.msra.mxu0 0
    %1527 = vmatprep.subr.bf16.mxu0 0
    %1528 = vmatpush1.bf16.msra.mxu0 0
    %1529 = vmatprep.mubr.bf16.mxu0 0
    %1530 = vmatmul.mubr.bf16.gmra.mrb[0].mxu0 %v1496
    %v1531 = vpop.f32.mrb[0].mxu0
    %v1532 = vadd.f32 0.0, %v1531
    %v1533 = vpop.f32.mrb[0].mxu0
    %v1534 = vadd.f32 0.0, %v1533
    %v1535 = vpop.f32.mrb[0].mxu0
    %v1536 = vadd.f32 0.0, %v1535
    %v1537 = vpop.f32.mrb[0].mxu0
    %v1538 = vadd.f32 0.0, %v1537
    %1539 = vdwg.mxu0
    %1540 = vmatprep.subr.bf16.mxu0 %v632
    %1541 = vmatpush1.bf16.msra.mxu0 %v631
    %1542 = vmatprep.subr.bf16.mxu0 %v636
    %1543 = vmatpush1.bf16.msra.mxu0 %v635
    %1544 = vmatprep.subr.bf16.mxu0 %v640
    %1545 = vmatpush1.bf16.msra.mxu0 %v639
    %1546 = vmatprep.subr.bf16.mxu0 %v644
    %1547 = vmatpush1.bf16.msra.mxu0 %v643
    %1548 = vmatprep.subr.bf16.mxu0 %v648
    %1549 = vmatpush1.bf16.msra.mxu0 %v647
    %1550 = vmatprep.subr.bf16.mxu0 %v652
    %1551 = vmatpush1.bf16.msra.mxu0 %v651
    %1552 = vmatprep.subr.bf16.mxu0 %v656
    %1553 = vmatpush1.bf16.msra.mxu0 %v655
    %1554 = vmatprep.subr.bf16.mxu0 %v660
    %1555 = vmatpush1.bf16.msra.mxu0 %v659
    %1556 = vmatprep.subr.bf16.mxu0 0
    %1557 = vmatpush1.bf16.msra.mxu0 0
    %1558 = vmatprep.subr.bf16.mxu0 0
    %1559 = vmatpush1.bf16.msra.mxu0 0
    %1560 = vmatprep.subr.bf16.mxu0 0
    %1561 = vmatpush1.bf16.msra.mxu0 0
    %1562 = vmatprep.subr.bf16.mxu0 0
    %1563 = vmatpush1.bf16.msra.mxu0 0
    %1564 = vmatprep.subr.bf16.mxu0 0
    %1565 = vmatpush1.bf16.msra.mxu0 0
    %1566 = vmatprep.subr.bf16.mxu0 0
    %1567 = vmatpush1.bf16.msra.mxu0 0
    %1568 = vmatprep.subr.bf16.mxu0 0
    %1569 = vmatpush1.bf16.msra.mxu0 0
    %1570 = vmatprep.subr.bf16.mxu0 0
    %1571 = vmatpush1.bf16.msra.mxu0 0
    %1572 = vmatprep.mubr.bf16.mxu0 0
    %1573 = vmatmul.mubr.bf16.gmra.mrb[0].mxu0 %v1496
    %v1574 = vpop.f32.mrb[0].mxu0
    %v1575 = vadd.f32 0.0, %v1574
    %v1576 = vpop.f32.mrb[0].mxu0
    %v1577 = vadd.f32 0.0, %v1576
    %v1578 = vpop.f32.mrb[0].mxu0
    %v1579 = vadd.f32 0.0, %v1578
    %v1580 = vpop.f32.mrb[0].mxu0
    %v1581 = vadd.f32 0.0, %v1580
    %1582 = vdwg.mxu0
    %v1583 = vadd.f32 %v1488, %v1532
    %v1584 = vadd.f32 %v1489, %v1534
    %v1585 = vadd.f32 %v1490, %v1575
    %v1586 = vadd.f32 %v1491, %v1577
    %v1587 = vadd.f32 %v1492, %v1536
    %v1588 = vadd.f32 %v1493, %v1538
    %v1589 = vadd.f32 %v1494, %v1579
    %v1590 = vadd.f32 %v1495, %v1581
    %v1591 = vmul.f32 %v1583, 0.5
    %v1592 = vmul.f32 %v1587, 0.5
    %v1593 = vtanh.pop %v1591
    %v1594 = vtanh.pop %v1592
    %v1595 = vmul.f32 %v1593, 0.5
    %v1596 = vmul.f32 %v1594, 0.5
    %v1597 = vadd.f32 %v1595, 0.5
    %v1598 = vadd.f32 %v1596, 0.5
    %v1599 = vmul.f32 %v1584, 0.5
    %v1600 = vmul.f32 %v1588, 0.5
    %v1601 = vtanh.pop %v1599
    %v1602 = vtanh.pop %v1600
    %v1603 = vmul.f32 %v1601, 0.5
    %v1604 = vmul.f32 %v1602, 0.5
    %v1605 = vadd.f32 %v1603, 0.5
    %v1606 = vadd.f32 %v1604, 0.5
    %v1607 = vtanh.pop %v1585
    %v1608 = vtanh.pop %v1589
    %v1609 = vmul.f32 %v1586, 0.5
    %v1610 = vmul.f32 %v1590, 0.5
    %v1611 = vtanh.pop %v1609
    %v1612 = vtanh.pop %v1610
    %v1613 = vmul.f32 %v1611, 0.5
    %v1614 = vmul.f32 %v1612, 0.5
    %v1615 = vadd.f32 %v1613, 0.5
    %v1616 = vadd.f32 %v1614, 0.5
    %v1617 = vmul.f32 %v1605, %v1483
    %v1618 = vmul.f32 %v1606, %v1484
    %v1619 = vmul.f32 %v1597, %v1607
    %v1620 = vmul.f32 %v1598, %v1608
    %v1621 = vadd.f32 %v1617, %v1619
    %v1622 = vadd.f32 %v1618, %v1620
    %v1623 = vtanh.pop %v1621
    %v1624 = vtanh.pop %v1622
    %v1625 = vmul.f32 %v1615, %v1623
    %v1626 = vmul.f32 %v1616, %v1624
    %1627 = vst [vmem:[%s6] sm:$0xff] %v1621
    %1628 = vst [vmem:[%s6 + $0x8] sm:$0xff] %v1622
    %1629 = vst [vmem:[%s5] sm:$0xff] %v1625
    %1630 = vst [vmem:[%s5 + $0x8] sm:$0xff] %v1626
    %v1631 = vpack.c.bf16 %v1626, %v1625
    %v1633 = vunpack.c.l.b16 %v1631
    %v1634 = vunpack.c.h.b16 %v1631
    %v1635 = vpack.c.b16 %v1633, %v1633
    %v1636 = vpack.c.b16 %v1634, %v1634
    %s1639 = scalar_lea.vmem %s4, 40
    %1640 = vst [vmem:[%s1639] sm:$0xf] %v1635
    %1641 = vst [vmem:[%s1639 + $0x4] sm:$0xf] %v1636
    %v1642 = vld [vmem:[%s5] sm:$0xff]
    %v1643 = vld [vmem:[%s5 + $0x8] sm:$0xff]
    %v1644 = vld [vmem:[%s6] sm:$0xff]
    %v1645 = vld [vmem:[%s6 + $0x8] sm:$0xff]
    %s1646 = smul.u32 12, 4
    %s1647 = smul.addr %s1646, 8
    %s1648 = scalar_lea.vmem [#allocation2], %s1647
    %v1649 = vld [vmem:[%s1648] sm:$0xff]
    %v1650 = vld [vmem:[%s1648 + $0x8] sm:$0xff]
    %v1651 = vld [vmem:[%s1648 + $0x10] sm:$0xff]
    %v1652 = vld [vmem:[%s1648 + $0x18] sm:$0xff]
    %v1653 = vld [vmem:[%s1648 + $0x20] sm:$0xff]
    %v1654 = vld [vmem:[%s1648 + $0x28] sm:$0xff]
    %v1655 = vld [vmem:[%s1648 + $0x30] sm:$0xff]
    %v1656 = vld [vmem:[%s1648 + $0x38] sm:$0xff]
    %v1657 = vpack.c.bf16 %v1643, %v1642
    %1658 = vmatprep.subr.bf16.mxu0 %v630
    %1659 = vmatpush1.bf16.msra.mxu0 %v629
    %1660 = vmatprep.subr.bf16.mxu0 %v634
    %1661 = vmatpush1.bf16.msra.mxu0 %v633
    %1662 = vmatprep.subr.bf16.mxu0 %v638
    %1663 = vmatpush1.bf16.msra.mxu0 %v637
    %1664 = vmatprep.subr.bf16.mxu0 %v642
    %1665 = vmatpush1.bf16.msra.mxu0 %v641
    %1666 = vmatprep.subr.bf16.mxu0 %v646
    %1667 = vmatpush1.bf16.msra.mxu0 %v645
    %1668 = vmatprep.subr.bf16.mxu0 %v650
    %1669 = vmatpush1.bf16.msra.mxu0 %v649
    %1670 = vmatprep.subr.bf16.mxu0 %v654
    %1671 = vmatpush1.bf16.msra.mxu0 %v653
    %1672 = vmatprep.subr.bf16.mxu0 %v658
    %1673 = vmatpush1.bf16.msra.mxu0 %v657
    %1674 = vmatprep.subr.bf16.mxu0 0
    %1675 = vmatpush1.bf16.msra.mxu0 0
    %1676 = vmatprep.subr.bf16.mxu0 0
    %1677 = vmatpush1.bf16.msra.mxu0 0
    %1678 = vmatprep.subr.bf16.mxu0 0
    %1679 = vmatpush1.bf16.msra.mxu0 0
    %1680 = vmatprep.subr.bf16.mxu0 0
    %1681 = vmatpush1.bf16.msra.mxu0 0
    %1682 = vmatprep.subr.bf16.mxu0 0
    %1683 = vmatpush1.bf16.msra.mxu0 0
    %1684 = vmatprep.subr.bf16.mxu0 0
    %1685 = vmatpush1.bf16.msra.mxu0 0
    %1686 = vmatprep.subr.bf16.mxu0 0
    %1687 = vmatpush1.bf16.msra.mxu0 0
    %1688 = vmatprep.subr.bf16.mxu0 0
    %1689 = vmatpush1.bf16.msra.mxu0 0
    %1690 = vmatprep.mubr.bf16.mxu0 0
    %1691 = vmatmul.mubr.bf16.gmra.mrb[0].mxu0 %v1657
    %v1692 = vpop.f32.mrb[0].mxu0
    %v1693 = vadd.f32 0.0, %v1692
    %v1694 = vpop.f32.mrb[0].mxu0
    %v1695 = vadd.f32 0.0, %v1694
    %v1696 = vpop.f32.mrb[0].mxu0
    %v1697 = vadd.f32 0.0, %v1696
    %v1698 = vpop.f32.mrb[0].mxu0
    %v1699 = vadd.f32 0.0, %v1698
    %1700 = vdwg.mxu0
    %1701 = vmatprep.subr.bf16.mxu0 %v632
    %1702 = vmatpush1.bf16.msra.mxu0 %v631
    %1703 = vmatprep.subr.bf16.mxu0 %v636
    %1704 = vmatpush1.bf16.msra.mxu0 %v635
    %1705 = vmatprep.subr.bf16.mxu0 %v640
    %1706 = vmatpush1.bf16.msra.mxu0 %v639
    %1707 = vmatprep.subr.bf16.mxu0 %v644
    %1708 = vmatpush1.bf16.msra.mxu0 %v643
    %1709 = vmatprep.subr.bf16.mxu0 %v648
    %1710 = vmatpush1.bf16.msra.mxu0 %v647
    %1711 = vmatprep.subr.bf16.mxu0 %v652
    %1712 = vmatpush1.bf16.msra.mxu0 %v651
    %1713 = vmatprep.subr.bf16.mxu0 %v656
    %1714 = vmatpush1.bf16.msra.mxu0 %v655
    %1715 = vmatprep.subr.bf16.mxu0 %v660
    %1716 = vmatpush1.bf16.msra.mxu0 %v659
    %1717 = vmatprep.subr.bf16.mxu0 0
    %1718 = vmatpush1.bf16.msra.mxu0 0
    %1719 = vmatprep.subr.bf16.mxu0 0
    %1720 = vmatpush1.bf16.msra.mxu0 0
    %1721 = vmatprep.subr.bf16.mxu0 0
    %1722 = vmatpush1.bf16.msra.mxu0 0
    %1723 = vmatprep.subr.bf16.mxu0 0
    %1724 = vmatpush1.bf16.msra.mxu0 0
    %1725 = vmatprep.subr.bf16.mxu0 0
    %1726 = vmatpush1.bf16.msra.mxu0 0
    %1727 = vmatprep.subr.bf16.mxu0 0
    %1728 = vmatpush1.bf16.msra.mxu0 0
    %1729 = vmatprep.subr.bf16.mxu0 0
    %1730 = vmatpush1.bf16.msra.mxu0 0
    %1731 = vmatprep.subr.bf16.mxu0 0
    %1732 = vmatpush1.bf16.msra.mxu0 0
    %1733 = vmatprep.mubr.bf16.mxu0 0
    %1734 = vmatmul.mubr.bf16.gmra.mrb[0].mxu0 %v1657
    %v1735 = vpop.f32.mrb[0].mxu0
    %v1736 = vadd.f32 0.0, %v1735
    %v1737 = vpop.f32.mrb[0].mxu0
    %v1738 = vadd.f32 0.0, %v1737
    %v1739 = vpop.f32.mrb[0].mxu0
    %v1740 = vadd.f32 0.0, %v1739
    %v1741 = vpop.f32.mrb[0].mxu0
    %v1742 = vadd.f32 0.0, %v1741
    %1743 = vdwg.mxu0
    %v1744 = vadd.f32 %v1649, %v1693
    %v1745 = vadd.f32 %v1650, %v1695
    %v1746 = vadd.f32 %v1651, %v1736
    %v1747 = vadd.f32 %v1652, %v1738
    %v1748 = vadd.f32 %v1653, %v1697
    %v1749 = vadd.f32 %v1654, %v1699
    %v1750 = vadd.f32 %v1655, %v1740
    %v1751 = vadd.f32 %v1656, %v1742
    %v1752 = vmul.f32 %v1744, 0.5
    %v1753 = vmul.f32 %v1748, 0.5
    %v1754 = vtanh.pop %v1752
    %v1755 = vtanh.pop %v1753
    %v1756 = vmul.f32 %v1754, 0.5
    %v1757 = vmul.f32 %v1755, 0.5
    %v1758 = vadd.f32 %v1756, 0.5
    %v1759 = vadd.f32 %v1757, 0.5
    %v1760 = vmul.f32 %v1745, 0.5
    %v1761 = vmul.f32 %v1749, 0.5
    %v1762 = vtanh.pop %v1760
    %v1763 = vtanh.pop %v1761
    %v1764 = vmul.f32 %v1762, 0.5
    %v1765 = vmul.f32 %v1763, 0.5
    %v1766 = vadd.f32 %v1764, 0.5
    %v1767 = vadd.f32 %v1765, 0.5
    %v1768 = vtanh.pop %v1746
    %v1769 = vtanh.pop %v1750
    %v1770 = vmul.f32 %v1747, 0.5
    %v1771 = vmul.f32 %v1751, 0.5
    %v1772 = vtanh.pop %v1770
    %v1773 = vtanh.pop %v1771
    %v1774 = vmul.f32 %v1772, 0.5
    %v1775 = vmul.f32 %v1773, 0.5
    %v1776 = vadd.f32 %v1774, 0.5
    %v1777 = vadd.f32 %v1775, 0.5
    %v1778 = vmul.f32 %v1766, %v1644
    %v1779 = vmul.f32 %v1767, %v1645
    %v1780 = vmul.f32 %v1758, %v1768
    %v1781 = vmul.f32 %v1759, %v1769
    %v1782 = vadd.f32 %v1778, %v1780
    %v1783 = vadd.f32 %v1779, %v1781
    %v1784 = vtanh.pop %v1782
    %v1785 = vtanh.pop %v1783
    %v1786 = vmul.f32 %v1776, %v1784
    %v1787 = vmul.f32 %v1777, %v1785
    %1788 = vst [vmem:[%s6] sm:$0xff] %v1782
    %1789 = vst [vmem:[%s6 + $0x8] sm:$0xff] %v1783
    %1790 = vst [vmem:[%s5] sm:$0xff] %v1786
    %1791 = vst [vmem:[%s5 + $0x8] sm:$0xff] %v1787
    %v1792 = vpack.c.bf16 %v1787, %v1786
    %v1794 = vunpack.c.l.b16 %v1792
    %v1795 = vunpack.c.h.b16 %v1792
    %v1796 = vpack.c.b16 %v1794, %v1794
    %v1797 = vpack.c.b16 %v1795, %v1795
    %s1800 = scalar_lea.vmem %s4, 48
    %1801 = vst [vmem:[%s1800] sm:$0xf] %v1796
    %1802 = vst [vmem:[%s1800 + $0x4] sm:$0xf] %v1797
    %v1803 = vld [vmem:[%s5] sm:$0xff]
    %v1804 = vld [vmem:[%s5 + $0x8] sm:$0xff]
    %v1805 = vld [vmem:[%s6] sm:$0xff]
    %v1806 = vld [vmem:[%s6 + $0x8] sm:$0xff]
    %s1807 = smul.u32 14, 4
    %s1808 = smul.addr %s1807, 8
    %s1809 = scalar_lea.vmem [#allocation2], %s1808
    %v1810 = vld [vmem:[%s1809] sm:$0xff]
    %v1811 = vld [vmem:[%s1809 + $0x8] sm:$0xff]
    %v1812 = vld [vmem:[%s1809 + $0x10] sm:$0xff]
    %v1813 = vld [vmem:[%s1809 + $0x18] sm:$0xff]
    %v1814 = vld [vmem:[%s1809 + $0x20] sm:$0xff]
    %v1815 = vld [vmem:[%s1809 + $0x28] sm:$0xff]
    %v1816 = vld [vmem:[%s1809 + $0x30] sm:$0xff]
    %v1817 = vld [vmem:[%s1809 + $0x38] sm:$0xff]
    %v1818 = vpack.c.bf16 %v1804, %v1803
    %1819 = vmatprep.subr.bf16.mxu0 %v630
    %1820 = vmatpush1.bf16.msra.mxu0 %v629
    %1821 = vmatprep.subr.bf16.mxu0 %v634
    %1822 = vmatpush1.bf16.msra.mxu0 %v633
    %1823 = vmatprep.subr.bf16.mxu0 %v638
    %1824 = vmatpush1.bf16.msra.mxu0 %v637
    %1825 = vmatprep.subr.bf16.mxu0 %v642
    %1826 = vmatpush1.bf16.msra.mxu0 %v641
    %1827 = vmatprep.subr.bf16.mxu0 %v646
    %1828 = vmatpush1.bf16.msra.mxu0 %v645
    %1829 = vmatprep.subr.bf16.mxu0 %v650
    %1830 = vmatpush1.bf16.msra.mxu0 %v649
    %1831 = vmatprep.subr.bf16.mxu0 %v654
    %1832 = vmatpush1.bf16.msra.mxu0 %v653
    %1833 = vmatprep.subr.bf16.mxu0 %v658
    %1834 = vmatpush1.bf16.msra.mxu0 %v657
    %1835 = vmatprep.subr.bf16.mxu0 0
    %1836 = vmatpush1.bf16.msra.mxu0 0
    %1837 = vmatprep.subr.bf16.mxu0 0
    %1838 = vmatpush1.bf16.msra.mxu0 0
    %1839 = vmatprep.subr.bf16.mxu0 0
    %1840 = vmatpush1.bf16.msra.mxu0 0
    %1841 = vmatprep.subr.bf16.mxu0 0
    %1842 = vmatpush1.bf16.msra.mxu0 0
    %1843 = vmatprep.subr.bf16.mxu0 0
    %1844 = vmatpush1.bf16.msra.mxu0 0
    %1845 = vmatprep.subr.bf16.mxu0 0
    %1846 = vmatpush1.bf16.msra.mxu0 0
    %1847 = vmatprep.subr.bf16.mxu0 0
    %1848 = vmatpush1.bf16.msra.mxu0 0
    %1849 = vmatprep.subr.bf16.mxu0 0
    %1850 = vmatpush1.bf16.msra.mxu0 0
    %1851 = vmatprep.mubr.bf16.mxu0 0
    %1852 = vmatmul.mubr.bf16.gmra.mrb[0].mxu0 %v1818
    %v1853 = vpop.f32.mrb[0].mxu0
    %v1854 = vadd.f32 0.0, %v1853
    %v1855 = vpop.f32.mrb[0].mxu0
    %v1856 = vadd.f32 0.0, %v1855
    %v1857 = vpop.f32.mrb[0].mxu0
    %v1858 = vadd.f32 0.0, %v1857
    %v1859 = vpop.f32.mrb[0].mxu0
    %v1860 = vadd.f32 0.0, %v1859
    %1861 = vdwg.mxu0
    %1862 = vmatprep.subr.bf16.mxu0 %v632
    %1863 = vmatpush1.bf16.msra.mxu0 %v631
    %1864 = vmatprep.subr.bf16.mxu0 %v636
    %1865 = vmatpush1.bf16.msra.mxu0 %v635
    %1866 = vmatprep.subr.bf16.mxu0 %v640
    %1867 = vmatpush1.bf16.msra.mxu0 %v639
    %1868 = vmatprep.subr.bf16.mxu0 %v644
    %1869 = vmatpush1.bf16.msra.mxu0 %v643
    %1870 = vmatprep.subr.bf16.mxu0 %v648
    %1871 = vmatpush1.bf16.msra.mxu0 %v647
    %1872 = vmatprep.subr.bf16.mxu0 %v652
    %1873 = vmatpush1.bf16.msra.mxu0 %v651
    %1874 = vmatprep.subr.bf16.mxu0 %v656
    %1875 = vmatpush1.bf16.msra.mxu0 %v655
    %1876 = vmatprep.subr.bf16.mxu0 %v660
    %1877 = vmatpush1.bf16.msra.mxu0 %v659
    %1878 = vmatprep.subr.bf16.mxu0 0
    %1879 = vmatpush1.bf16.msra.mxu0 0
    %1880 = vmatprep.subr.bf16.mxu0 0
    %1881 = vmatpush1.bf16.msra.mxu0 0
    %1882 = vmatprep.subr.bf16.mxu0 0
    %1883 = vmatpush1.bf16.msra.mxu0 0
    %1884 = vmatprep.subr.bf16.mxu0 0
    %1885 = vmatpush1.bf16.msra.mxu0 0
    %1886 = vmatprep.subr.bf16.mxu0 0
    %1887 = vmatpush1.bf16.msra.mxu0 0
    %1888 = vmatprep.subr.bf16.mxu0 0
    %1889 = vmatpush1.bf16.msra.mxu0 0
    %1890 = vmatprep.subr.bf16.mxu0 0
    %1891 = vmatpush1.bf16.msra.mxu0 0
    %1892 = vmatprep.subr.bf16.mxu0 0
    %1893 = vmatpush1.bf16.msra.mxu0 0
    %1894 = vmatprep.mubr.bf16.mxu0 0
    %1895 = vmatmul.mubr.bf16.gmra.mrb[0].mxu0 %v1818
    %v1896 = vpop.f32.mrb[0].mxu0
    %v1897 = vadd.f32 0.0, %v1896
    %v1898 = vpop.f32.mrb[0].mxu0
    %v1899 = vadd.f32 0.0, %v1898
    %v1900 = vpop.f32.mrb[0].mxu0
    %v1901 = vadd.f32 0.0, %v1900
    %v1902 = vpop.f32.mrb[0].mxu0
    %v1903 = vadd.f32 0.0, %v1902
    %1904 = vdwg.mxu0
    %v1905 = vadd.f32 %v1810, %v1854
    %v1906 = vadd.f32 %v1811, %v1856
    %v1907 = vadd.f32 %v1812, %v1897
    %v1908 = vadd.f32 %v1813, %v1899
    %v1909 = vadd.f32 %v1814, %v1858
    %v1910 = vadd.f32 %v1815, %v1860
    %v1911 = vadd.f32 %v1816, %v1901
    %v1912 = vadd.f32 %v1817, %v1903
    %v1913 = vmul.f32 %v1905, 0.5
    %v1914 = vmul.f32 %v1909, 0.5
    %v1915 = vtanh.pop %v1913
    %v1916 = vtanh.pop %v1914
    %v1917 = vmul.f32 %v1915, 0.5
    %v1918 = vmul.f32 %v1916, 0.5
    %v1919 = vadd.f32 %v1917, 0.5
    %v1920 = vadd.f32 %v1918, 0.5
    %v1921 = vmul.f32 %v1906, 0.5
    %v1922 = vmul.f32 %v1910, 0.5
    %v1923 = vtanh.pop %v1921
    %v1924 = vtanh.pop %v1922
    %v1925 = vmul.f32 %v1923, 0.5
    %v1926 = vmul.f32 %v1924, 0.5
    %v1927 = vadd.f32 %v1925, 0.5
    %v1928 = vadd.f32 %v1926, 0.5
    %v1929 = vtanh.pop %v1907
    %v1930 = vtanh.pop %v1911
    %v1931 = vmul.f32 %v1908, 0.5
    %v1932 = vmul.f32 %v1912, 0.5
    %v1933 = vtanh.pop %v1931
    %v1934 = vtanh.pop %v1932
    %v1935 = vmul.f32 %v1933, 0.5
    %v1936 = vmul.f32 %v1934, 0.5
    %v1937 = vadd.f32 %v1935, 0.5
    %v1938 = vadd.f32 %v1936, 0.5
    %v1939 = vmul.f32 %v1927, %v1805
    %v1940 = vmul.f32 %v1928, %v1806
    %v1941 = vmul.f32 %v1919, %v1929
    %v1942 = vmul.f32 %v1920, %v1930
    %v1943 = vadd.f32 %v1939, %v1941
    %v1944 = vadd.f32 %v1940, %v1942
    %v1945 = vtanh.pop %v1943
    %v1946 = vtanh.pop %v1944
    %v1947 = vmul.f32 %v1937, %v1945
    %v1948 = vmul.f32 %v1938, %v1946
    %1949 = vst [vmem:[%s6] sm:$0xff] %v1943
    %1950 = vst [vmem:[%s6 + $0x8] sm:$0xff] %v1944
    %1951 = vst [vmem:[%s5] sm:$0xff] %v1947
    %1952 = vst [vmem:[%s5 + $0x8] sm:$0xff] %v1948
    %v1953 = vpack.c.bf16 %v1948, %v1947
    %v1955 = vunpack.c.l.b16 %v1953
    %v1956 = vunpack.c.h.b16 %v1953
    %v1957 = vpack.c.b16 %v1955, %v1955
    %v1958 = vpack.c.b16 %v1956, %v1956
    %s1961 = scalar_lea.vmem %s4, 56
    %1962 = vst [vmem:[%s1961] sm:$0xf] %v1957
    %1963 = vst [vmem:[%s1961 + $0x4] sm:$0xf] %v1958
    // Predicated region
    $region34: #{rnn_forward.2} parent=1 // pred_check
      _
    $region35: #{rnn_forward.2} parent=1 // pred_check_branch
      %1965 = sbr.rel (0) target = $region37
    $region36: #{rnn_forward.2} parent=1 // pred_region
      _
    $region37: #{rnn_forward.2} parent=1 // pred_fallthru
      _
    // Predicated region
    $region38: #{rnn_forward.2} parent=1 // pred_check
      _
    $region39: #{rnn_forward.2} parent=1 // pred_check_branch
      %1967 = sbr.rel (0) target = $region41
    $region40: #{rnn_forward.2} parent=1 // pred_region
      _
    $region41: #{rnn_forward.2} parent=1 // pred_fallthru
      _
    // Predicated region
    $region42: #{rnn_forward.2} parent=1 // pred_check
      _
    $region43: #{rnn_forward.2} parent=1 // pred_check_branch
      %1969 = sbr.rel (0) target = $region45
    $region44: #{rnn_forward.2} parent=1 // pred_region
      _
    $region45: #{rnn_forward.2} parent=1 // pred_fallthru
      _
    // Predicated region
    $region46: #{rnn_forward.2} parent=1 // pred_check
      _
    $region47: #{rnn_forward.2} parent=1 // pred_check_branch
      %1971 = sbr.rel (0) target = $region49
    $region48: #{rnn_forward.2} parent=1 // pred_region
      _
    $region49: #{rnn_forward.2} parent=1 // pred_fallthru
      _
    // Predicated region
    $region50: #{rnn_forward.2} parent=1 // pred_check
      _
    $region51: #{rnn_forward.2} parent=1 // pred_check_branch
      %1973 = sbr.rel (0) target = $region53
    $region52: #{rnn_forward.2} parent=1 // pred_region
      _
    $region53: #{rnn_forward.2} parent=1 // pred_fallthru
      _
    // Predicated region
    $region54: #{rnn_forward.2} parent=1 // pred_check
      _
    $region55: #{rnn_forward.2} parent=1 // pred_check_branch
      %1975 = sbr.rel (0) target = $region57
    $region56: #{rnn_forward.2} parent=1 // pred_region
      _
    $region57: #{rnn_forward.2} parent=1 // pred_fallthru
      _
    %1976 = vsyncpa [#allocation4], 1
    %1977 = vsyncpa [#allocation6], 1

// kernel: rnn_forward.3
$region0: #{rnn_forward.3}
  #allocation0 [shape = 'u32[]', space=smem, size = 0x4, offset = 0x4, fixed_abs, tag = 'smem constant byte address 0x4 - core index']
  #allocation1 [shape = 'u32[144,128]{1,0:T(1,128)}', space=vmem, size = 0x12000, scoped, tag = 'internal scratch']
  #allocation2 [shape = 'f32[128,512]{1,0:T(8,128)}', space=vmem, size = 0x40000, scoped, tag = 'scratch operand']
  %s0 = inlined_call_operand.vmem [shape: bf16[128,128], index: 0, kind: input, shape index: {}]
  %s1 = inlined_call_operand.vmem [shape: bf16[128,512], index: 1, kind: input, shape index: {}]
  %s2 = inlined_call_operand.hbm [shape: bf16[128,512], index: 2, kind: input, shape index: {}]
  %s3 = inlined_call_operand.vmem [shape: f32[1,512], index: 3, kind: input, shape index: {}]
  %s4 = inlined_call_operand.vmem [shape: bf16[128,128], index: 4, kind: output, shape index: {0}]
  %s5 = inlined_call_operand.vmem [shape: f32[16,128], index: 5, kind: output, shape index: {1}]
  %s6 = inlined_call_operand.vmem [shape: f32[16,128], index: 6, kind: output, shape index: {2}]
  %7 = xla_tuple %s4, %s5, %s6
  %s8 = sld [smem:[#allocation0]]
  $region50: #{rnn_forward.3} parent=0
    _
  %s10 = ssub.s32 1, %s8
  %s11 = scalar_select 0, %s10, %s8
  $region1: #{rnn_forward.3} parent=0
    #allocation3 [shape = 'u8[131072]{0}', space=vmem, size = 0x20000, scoped, tag = 'input window, operand 2, single buffered']
    #allocation4 [shape = 's32[1]{0}', space=sflag, size = 0x4, scoped, tag = 'scoped memory for rnn_forward.3']
    %12 = vsyncpa [#allocation4], 0
    // Predicated region
    $region2: #{rnn_forward.3} parent=1 // pred_check
      _
    $region3: #{rnn_forward.3} parent=1 // pred_check_branch
      %14 = sbr.rel (0) target = $region5
    $region4: #{rnn_forward.3} parent=1 // pred_region
      _
    $region5: #{rnn_forward.3} parent=1 // pred_fallthru
      _
    // Predicated region
    $region6: #{rnn_forward.3} parent=1 // pred_check
      _
    $region7: #{rnn_forward.3} parent=1 // pred_check_branch
      %16 = sbr.rel (0) target = $region9
    $region8: #{rnn_forward.3} parent=1 // pred_region
      _
    $region9: #{rnn_forward.3} parent=1 // pred_fallthru
      _
    // Predicated region
    $region10: #{rnn_forward.3} parent=1 // pred_check
      _
    $region11: #{rnn_forward.3} parent=1 // pred_check_branch
      %18 = sbr.rel (0) target = $region13
    $region12: #{rnn_forward.3} parent=1 // pred_region
      %s20 = ssub.s32 4096, 4096
      %21 = vsyncadd [#allocation4], %s20
      %s22 = sshll.u32 [#allocation3], 4
      %s23 = int_to_ptr.vmem [resolvable:$true] %s22
      %28 = dma.hbm_to_vmem [thread:$0]  %s2, 4096, %s23, [#allocation4], 256, 256, 16
    $region13: #{rnn_forward.3} parent=1 // pred_fallthru
      _
    // Predicated region
    $region14: #{rnn_forward.3} parent=1 // pred_check
      _
    $region15: #{rnn_forward.3} parent=1 // pred_check_branch
      %30 = sbr.rel (0) target = $region17
    $region16: #{rnn_forward.3} parent=1 // pred_region
      _
    $region17: #{rnn_forward.3} parent=1 // pred_fallthru
      _
    // Predicated region
    $region18: #{rnn_forward.3} parent=1 // pred_check
      _
    $region19: #{rnn_forward.3} parent=1 // pred_check_branch
      %32 = sbr.rel (0) target = $region21
    $region20: #{rnn_forward.3} parent=1 // pred_region
      %33 = dma.done [#allocation4], 4096
    $region21: #{rnn_forward.3} parent=1 // pred_fallthru
      _
    %p35 = scmp.eq.s32.totalorder 0, 0
    // Predicated region
    $region22: #{rnn_forward.3} parent=1 // pred_check
      %p36 = pneg %p35
    $region23: #{rnn_forward.3} parent=1 // pred_check_branch
      %38 = sbr.rel (%p36) target = $region25
    $region24: #{rnn_forward.3} parent=1 // pred_region
      %39 = vst [vmem:[%s5] sm:$0xff] 0.0
      %40 = vst [vmem:[%s5 + $0x8] sm:$0xff] 0.0
      %41 = vst [vmem:[%s6] sm:$0xff] 0.0
      %42 = vst [vmem:[%s6 + $0x8] sm:$0xff] 0.0
    $region25: #{rnn_forward.3} parent=1 // pred_fallthru
      _
    %v43 = vld [vmem:[%s0] sm:$0xf]
    %v44 = vld [vmem:[%s0 + $0x4] sm:$0xf]
    %v45 = vld [vmem:[%s0 + $0x8] sm:$0xf]
    %v46 = vld [vmem:[%s0 + $0xc] sm:$0xf]
    %v47 = vld [vmem:[%s0 + $0x10] sm:$0xf]
    %v48 = vld [vmem:[%s0 + $0x14] sm:$0xf]
    %v49 = vld [vmem:[%s0 + $0x18] sm:$0xf]
    %v50 = vld [vmem:[%s0 + $0x1c] sm:$0xf]
    %v51 = vld [vmem:[%s0 + $0x20] sm:$0xf]
    %v52 = vld [vmem:[%s0 + $0x24] sm:$0xf]
    %v53 = vld [vmem:[%s0 + $0x28] sm:$0xf]
    %v54 = vld [vmem:[%s0 + $0x2c] sm:$0xf]
    %v55 = vld [vmem:[%s0 + $0x30] sm:$0xf]
    %v56 = vld [vmem:[%s0 + $0x34] sm:$0xf]
    %v57 = vld [vmem:[%s0 + $0x38] sm:$0xf]
    %v58 = vld [vmem:[%s0 + $0x3c] sm:$0xf]
    %v59 = vld [vmem:[%s1] sm:$0xff]
    %v60 = vld [vmem:[%s1 + $0x8] sm:$0xff]
    %v61 = vld [vmem:[%s1 + $0x10] sm:$0xff]
    %v62 = vld [vmem:[%s1 + $0x18] sm:$0xff]
    %v63 = vld [vmem:[%s1 + $0x20] sm:$0xff]
    %v64 = vld [vmem:[%s1 + $0x28] sm:$0xff]
    %v65 = vld [vmem:[%s1 + $0x30] sm:$0xff]
    %v66 = vld [vmem:[%s1 + $0x38] sm:$0xff]
    %v67 = vld [vmem:[%s1 + $0x40] sm:$0xff]
    %v68 = vld [vmem:[%s1 + $0x48] sm:$0xff]
    %v69 = vld [vmem:[%s1 + $0x50] sm:$0xff]
    %v70 = vld [vmem:[%s1 + $0x58] sm:$0xff]
    %v71 = vld [vmem:[%s1 + $0x60] sm:$0xff]
    %v72 = vld [vmem:[%s1 + $0x68] sm:$0xff]
    %v73 = vld [vmem:[%s1 + $0x70] sm:$0xff]
    %v74 = vld [vmem:[%s1 + $0x78] sm:$0xff]
    %v75 = vld [vmem:[%s1 + $0x80] sm:$0xff]
    %v76 = vld [vmem:[%s1 + $0x88] sm:$0xff]
    %v77 = vld [vmem:[%s1 + $0x90] sm:$0xff]
    %v78 = vld [vmem:[%s1 + $0x98] sm:$0xff]
    %v79 = vld [vmem:[%s1 + $0xa0] sm:$0xff]
    %v80 = vld [vmem:[%s1 + $0xa8] sm:$0xff]
    %v81 = vld [vmem:[%s1 + $0xb0] sm:$0xff]
    %v82 = vld [vmem:[%s1 + $0xb8] sm:$0xff]
    %v83 = vld [vmem:[%s1 + $0xc0] sm:$0xff]
    %v84 = vld [vmem:[%s1 + $0xc8] sm:$0xff]
    %v85 = vld [vmem:[%s1 + $0xd0] sm:$0xff]
    %v86 = vld [vmem:[%s1 + $0xd8] sm:$0xff]
    %v87 = vld [vmem:[%s1 + $0xe0] sm:$0xff]
    %v88 = vld [vmem:[%s1 + $0xe8] sm:$0xff]
    %v89 = vld [vmem:[%s1 + $0xf0] sm:$0xff]
    %v90 = vld [vmem:[%s1 + $0xf8] sm:$0xff]
    %v91 = vld [vmem:[%s3] sm:$0xf]
    %v93 = vlaneseq
    %v94 = vshrl.u32 %v93, 7
    %v95 = vsub.s32 0, %v94
    %v96 = vrot.slane %v91, %v95
    %v97 = vlaneseq
    %v98 = vshrl.u32 %v97, 7
    %v99 = vsub.s32 1, %v98
    %v100 = vrot.slane %v91, %v99
    %v101 = vlaneseq
    %v102 = vshrl.u32 %v101, 7
    %v103 = vsub.s32 2, %v102
    %v104 = vrot.slane %v91, %v103
    %v105 = vlaneseq
    %v106 = vshrl.u32 %v105, 7
    %v107 = vsub.s32 3, %v106
    %v108 = vrot.slane %v91, %v107
    %v129 = vunpack.c.l.b16 %v43
    %v130 = vunpack.c.l.b16 %v44
    %v131 = vunpack.c.l.b16 %v45
    %v132 = vunpack.c.l.b16 %v46
    %v133 = vunpack.c.l.b16 %v47
    %v134 = vunpack.c.l.b16 %v48
    %v135 = vunpack.c.l.b16 %v49
    %v136 = vunpack.c.l.b16 %v50
    %v137 = vunpack.c.l.b16 %v51
    %v138 = vunpack.c.l.b16 %v52
    %v139 = vunpack.c.l.b16 %v53
    %v140 = vunpack.c.l.b16 %v54
    %v141 = vunpack.c.l.b16 %v55
    %v142 = vunpack.c.l.b16 %v56
    %v143 = vunpack.c.l.b16 %v57
    %v144 = vunpack.c.l.b16 %v58
    %v145 = vpack.c.b16 %v130, %v129
    %v146 = vpack.c.b16 %v132, %v131
    %v147 = vpack.c.b16 %v134, %v133
    %v148 = vpack.c.b16 %v136, %v135
    %v149 = vpack.c.b16 %v138, %v137
    %v150 = vpack.c.b16 %v140, %v139
    %v151 = vpack.c.b16 %v142, %v141
    %v152 = vpack.c.b16 %v144, %v143
    %v193 = vunpack.c.l.b16 %v59
    %v194 = vunpack.c.h.b16 %v59
    %v195 = vunpack.c.l.b16 %v60
    %v196 = vunpack.c.h.b16 %v60
    %v197 = vunpack.c.l.b16 %v61
    %v198 = vunpack.c.h.b16 %v61
    %v199 = vunpack.c.l.b16 %v62
    %v200 = vunpack.c.h.b16 %v62
    %v201 = vunpack.c.l.b16 %v63
    %v202 = vunpack.c.h.b16 %v63
    %v203 = vunpack.c.l.b16 %v64
    %v204 = vunpack.c.h.b16 %v64
    %v205 = vunpack.c.l.b16 %v65
    %v206 = vunpack.c.h.b16 %v65
    %v207 = vunpack.c.l.b16 %v66
    %v208 = vunpack.c.h.b16 %v66
    %v209 = vunpack.c.l.b16 %v67
    %v210 = vunpack.c.h.b16 %v67
    %v211 = vunpack.c.l.b16 %v68
    %v212 = vunpack.c.h.b16 %v68
    %v213 = vunpack.c.l.b16 %v69
    %v214 = vunpack.c.h.b16 %v69
    %v215 = vunpack.c.l.b16 %v70
    %v216 = vunpack.c.h.b16 %v70
    %v217 = vunpack.c.l.b16 %v71
    %v218 = vunpack.c.h.b16 %v71
    %v219 = vunpack.c.l.b16 %v72
    %v220 = vunpack.c.h.b16 %v72
    %v221 = vunpack.c.l.b16 %v73
    %v222 = vunpack.c.h.b16 %v73
    %v223 = vunpack.c.l.b16 %v74
    %v224 = vunpack.c.h.b16 %v74
    %v225 = vunpack.c.l.b16 %v75
    %v226 = vunpack.c.h.b16 %v75
    %v227 = vunpack.c.l.b16 %v76
    %v228 = vunpack.c.h.b16 %v76
    %v229 = vunpack.c.l.b16 %v77
    %v230 = vunpack.c.h.b16 %v77
    %v231 = vunpack.c.l.b16 %v78
    %v232 = vunpack.c.h.b16 %v78
    %v233 = vunpack.c.l.b16 %v79
    %v234 = vunpack.c.h.b16 %v79
    %v235 = vunpack.c.l.b16 %v80
    %v236 = vunpack.c.h.b16 %v80
    %v237 = vunpack.c.l.b16 %v81
    %v238 = vunpack.c.h.b16 %v81
    %v239 = vunpack.c.l.b16 %v82
    %v240 = vunpack.c.h.b16 %v82
    %v241 = vunpack.c.l.b16 %v83
    %v242 = vunpack.c.h.b16 %v83
    %v243 = vunpack.c.l.b16 %v84
    %v244 = vunpack.c.h.b16 %v84
    %v245 = vunpack.c.l.b16 %v85
    %v246 = vunpack.c.h.b16 %v85
    %v247 = vunpack.c.l.b16 %v86
    %v248 = vunpack.c.h.b16 %v86
    %v249 = vunpack.c.l.b16 %v87
    %v250 = vunpack.c.h.b16 %v87
    %v251 = vunpack.c.l.b16 %v88
    %v252 = vunpack.c.h.b16 %v88
    %v253 = vunpack.c.l.b16 %v89
    %v254 = vunpack.c.h.b16 %v89
    %v255 = vunpack.c.l.b16 %v90
    %v256 = vunpack.c.h.b16 %v90
    %v257 = vpack.c.b16 %v197, %v193
    %v258 = vpack.c.b16 %v198, %v194
    %v259 = vpack.c.b16 %v199, %v195
    %v260 = vpack.c.b16 %v200, %v196
    %v261 = vpack.c.b16 %v205, %v201
    %v262 = vpack.c.b16 %v206, %v202
    %v263 = vpack.c.b16 %v207, %v203
    %v264 = vpack.c.b16 %v208, %v204
    %v265 = vpack.c.b16 %v213, %v209
    %v266 = vpack.c.b16 %v214, %v210
    %v267 = vpack.c.b16 %v215, %v211
    %v268 = vpack.c.b16 %v216, %v212
    %v269 = vpack.c.b16 %v221, %v217
    %v270 = vpack.c.b16 %v222, %v218
    %v271 = vpack.c.b16 %v223, %v219
    %v272 = vpack.c.b16 %v224, %v220
    %v273 = vpack.c.b16 %v229, %v225
    %v274 = vpack.c.b16 %v230, %v226
    %v275 = vpack.c.b16 %v231, %v227
    %v276 = vpack.c.b16 %v232, %v228
    %v277 = vpack.c.b16 %v237, %v233
    %v278 = vpack.c.b16 %v238, %v234
    %v279 = vpack.c.b16 %v239, %v235
    %v280 = vpack.c.b16 %v240, %v236
    %v281 = vpack.c.b16 %v245, %v241
    %v282 = vpack.c.b16 %v246, %v242
    %v283 = vpack.c.b16 %v247, %v243
    %v284 = vpack.c.b16 %v248, %v244
    %v285 = vpack.c.b16 %v253, %v249
    %v286 = vpack.c.b16 %v254, %v250
    %v287 = vpack.c.b16 %v255, %v251
    %v288 = vpack.c.b16 %v256, %v252
    %321 = vmatprep.subr.bf16.mxu0 %v258
    %322 = vmatpush1.bf16.msra.mxu0 %v257
    %323 = vmatprep.subr.bf16.mxu0 %v262
    %324 = vmatpush1.bf16.msra.mxu0 %v261
    %325 = vmatprep.subr.bf16.mxu0 %v266
    %326 = vmatpush1.bf16.msra.mxu0 %v265
    %327 = vmatprep.subr.bf16.mxu0 %v270
    %328 = vmatpush1.bf16.msra.mxu0 %v269
    %329 = vmatprep.subr.bf16.mxu0 %v274
    %330 = vmatpush1.bf16.msra.mxu0 %v273
    %331 = vmatprep.subr.bf16.mxu0 %v278
    %332 = vmatpush1.bf16.msra.mxu0 %v277
    %333 = vmatprep.subr.bf16.mxu0 %v282
    %334 = vmatpush1.bf16.msra.mxu0 %v281
    %335 = vmatprep.subr.bf16.mxu0 %v286
    %336 = vmatpush1.bf16.msra.mxu0 %v285
    %337 = vmatprep.subr.bf16.mxu0 0
    %338 = vmatpush1.bf16.msra.mxu0 0
    %339 = vmatprep.subr.bf16.mxu0 0
    %340 = vmatpush1.bf16.msra.mxu0 0
    %341 = vmatprep.subr.bf16.mxu0 0
    %342 = vmatpush1.bf16.msra.mxu0 0
    %343 = vmatprep.subr.bf16.mxu0 0
    %344 = vmatpush1.bf16.msra.mxu0 0
    %345 = vmatprep.subr.bf16.mxu0 0
    %346 = vmatpush1.bf16.msra.mxu0 0
    %347 = vmatprep.subr.bf16.mxu0 0
    %348 = vmatpush1.bf16.msra.mxu0 0
    %349 = vmatprep.subr.bf16.mxu0 0
    %350 = vmatpush1.bf16.msra.mxu0 0
    %351 = vmatprep.subr.bf16.mxu0 0
    %352 = vmatpush1.bf16.msra.mxu0 0
    %353 = vmatprep.mubr.bf16.mxu0 0
    %354 = vmatmul.mubr.bf16.gmra.mrb[0].mxu0 %v145
    %v355 = vpop.f32.mrb[0].mxu0
    %v356 = vadd.f32 %v96, %v355
    %v357 = vpop.f32.mrb[0].mxu0
    %v358 = vadd.f32 %v100, %v357
    %v359 = vpop.f32.mrb[0].mxu0
    %v360 = vadd.f32 %v96, %v359
    %v361 = vpop.f32.mrb[0].mxu0
    %v362 = vadd.f32 %v100, %v361
    %363 = vmatprep.mubr.bf16.mxu0 0
    %364 = vmatmul.mubr.bf16.gmra.mrb[0].mxu0 %v146
    %v365 = vpop.f32.mrb[0].mxu0
    %v366 = vadd.f32 %v96, %v365
    %v367 = vpop.f32.mrb[0].mxu0
    %v368 = vadd.f32 %v100, %v367
    %v369 = vpop.f32.mrb[0].mxu0
    %v370 = vadd.f32 %v96, %v369
    %v371 = vpop.f32.mrb[0].mxu0
    %v372 = vadd.f32 %v100, %v371
    %373 = vmatprep.mubr.bf16.mxu0 0
    %374 = vmatmul.mubr.bf16.gmra.mrb[0].mxu0 %v147
    %v375 = vpop.f32.mrb[0].mxu0
    %v376 = vadd.f32 %v96, %v375
    %v377 = vpop.f32.mrb[0].mxu0
    %v378 = vadd.f32 %v100, %v377
    %v379 = vpop.f32.mrb[0].mxu0
    %v380 = vadd.f32 %v96, %v379
    %v381 = vpop.f32.mrb[0].mxu0
    %v382 = vadd.f32 %v100, %v381
    %383 = vmatprep.mubr.bf16.mxu0 0
    %384 = vmatmul.mubr.bf16.gmra.mrb[0].mxu0 %v148
    %v385 = vpop.f32.mrb[0].mxu0
    %v386 = vadd.f32 %v96, %v385
    %v387 = vpop.f32.mrb[0].mxu0
    %v388 = vadd.f32 %v100, %v387
    %v389 = vpop.f32.mrb[0].mxu0
    %v390 = vadd.f32 %v96, %v389
    %v391 = vpop.f32.mrb[0].mxu0
    %v392 = vadd.f32 %v100, %v391
    %393 = vmatprep.mubr.bf16.mxu0 0
    %394 = vmatmul.mubr.bf16.gmra.mrb[0].mxu0 %v149
    %v395 = vpop.f32.mrb[0].mxu0
    %v396 = vadd.f32 %v96, %v395
    %v397 = vpop.f32.mrb[0].mxu0
    %v398 = vadd.f32 %v100, %v397
    %v399 = vpop.f32.mrb[0].mxu0
    %v400 = vadd.f32 %v96, %v399
    %v401 = vpop.f32.mrb[0].mxu0
    %v402 = vadd.f32 %v100, %v401
    %403 = vmatprep.mubr.bf16.mxu0 0
    %404 = vmatmul.mubr.bf16.gmra.mrb[0].mxu0 %v150
    %v405 = vpop.f32.mrb[0].mxu0
    %v406 = vadd.f32 %v96, %v405
    %v407 = vpop.f32.mrb[0].mxu0
    %v408 = vadd.f32 %v100, %v407
    %v409 = vpop.f32.mrb[0].mxu0
    %v410 = vadd.f32 %v96, %v409
    %v411 = vpop.f32.mrb[0].mxu0
    %v412 = vadd.f32 %v100, %v411
    %413 = vmatprep.mubr.bf16.mxu0 0
    %414 = vmatmul.mubr.bf16.gmra.mrb[0].mxu0 %v151
    %v415 = vpop.f32.mrb[0].mxu0
    %v416 = vadd.f32 %v96, %v415
    %v417 = vpop.f32.mrb[0].mxu0
    %v418 = vadd.f32 %v100, %v417
    %v419 = vpop.f32.mrb[0].mxu0
    %v420 = vadd.f32 %v96, %v419
    %v421 = vpop.f32.mrb[0].mxu0
    %v422 = vadd.f32 %v100, %v421
    %423 = vmatprep.mubr.bf16.mxu0 0
    %424 = vmatmul.mubr.bf16.gmra.mrb[0].mxu0 %v152
    %v425 = vpop.f32.mrb[0].mxu0
    %v426 = vadd.f32 %v96, %v425
    %v427 = vpop.f32.mrb[0].mxu0
    %v428 = vadd.f32 %v100, %v427
    %v429 = vpop.f32.mrb[0].mxu0
    %v430 = vadd.f32 %v96, %v429
    %v431 = vpop.f32.mrb[0].mxu0
    %v432 = vadd.f32 %v100, %v431
    %433 = vdwg.mxu0
    %434 = vmatprep.subr.bf16.mxu0 %v260
    %435 = vmatpush1.bf16.msra.mxu0 %v259
    %436 = vmatprep.subr.bf16.mxu0 %v264
    %437 = vmatpush1.bf16.msra.mxu0 %v263
    %438 = vmatprep.subr.bf16.mxu0 %v268
    %439 = vmatpush1.bf16.msra.mxu0 %v267
    %440 = vmatprep.subr.bf16.mxu0 %v272
    %441 = vmatpush1.bf16.msra.mxu0 %v271
    %442 = vmatprep.subr.bf16.mxu0 %v276
    %443 = vmatpush1.bf16.msra.mxu0 %v275
    %444 = vmatprep.subr.bf16.mxu0 %v280
    %445 = vmatpush1.bf16.msra.mxu0 %v279
    %446 = vmatprep.subr.bf16.mxu0 %v284
    %447 = vmatpush1.bf16.msra.mxu0 %v283
    %448 = vmatprep.subr.bf16.mxu0 %v288
    %449 = vmatpush1.bf16.msra.mxu0 %v287
    %450 = vmatprep.subr.bf16.mxu0 0
    %451 = vmatpush1.bf16.msra.mxu0 0
    %452 = vmatprep.subr.bf16.mxu0 0
    %453 = vmatpush1.bf16.msra.mxu0 0
    %454 = vmatprep.subr.bf16.mxu0 0
    %455 = vmatpush1.bf16.msra.mxu0 0
    %456 = vmatprep.subr.bf16.mxu0 0
    %457 = vmatpush1.bf16.msra.mxu0 0
    %458 = vmatprep.subr.bf16.mxu0 0
    %459 = vmatpush1.bf16.msra.mxu0 0
    %460 = vmatprep.subr.bf16.mxu0 0
    %461 = vmatpush1.bf16.msra.mxu0 0
    %462 = vmatprep.subr.bf16.mxu0 0
    %463 = vmatpush1.bf16.msra.mxu0 0
    %464 = vmatprep.subr.bf16.mxu0 0
    %465 = vmatpush1.bf16.msra.mxu0 0
    %466 = vmatprep.mubr.bf16.mxu0 0
    %467 = vmatmul.mubr.bf16.gmra.mrb[0].mxu0 %v145
    %v468 = vpop.f32.mrb[0].mxu0
    %v469 = vadd.f32 %v104, %v468
    %v470 = vpop.f32.mrb[0].mxu0
    %v471 = vadd.f32 %v108, %v470
    %v472 = vpop.f32.mrb[0].mxu0
    %v473 = vadd.f32 %v104, %v472
    %v474 = vpop.f32.mrb[0].mxu0
    %v475 = vadd.f32 %v108, %v474
    %476 = vmatprep.mubr.bf16.mxu0 0
    %477 = vmatmul.mubr.bf16.gmra.mrb[0].mxu0 %v146
    %v478 = vpop.f32.mrb[0].mxu0
    %v479 = vadd.f32 %v104, %v478
    %v480 = vpop.f32.mrb[0].mxu0
    %v481 = vadd.f32 %v108, %v480
    %v482 = vpop.f32.mrb[0].mxu0
    %v483 = vadd.f32 %v104, %v482
    %v484 = vpop.f32.mrb[0].mxu0
    %v485 = vadd.f32 %v108, %v484
    %486 = vmatprep.mubr.bf16.mxu0 0
    %487 = vmatmul.mubr.bf16.gmra.mrb[0].mxu0 %v147
    %v488 = vpop.f32.mrb[0].mxu0
    %v489 = vadd.f32 %v104, %v488
    %v490 = vpop.f32.mrb[0].mxu0
    %v491 = vadd.f32 %v108, %v490
    %v492 = vpop.f32.mrb[0].mxu0
    %v493 = vadd.f32 %v104, %v492
    %v494 = vpop.f32.mrb[0].mxu0
    %v495 = vadd.f32 %v108, %v494
    %496 = vmatprep.mubr.bf16.mxu0 0
    %497 = vmatmul.mubr.bf16.gmra.mrb[0].mxu0 %v148
    %v498 = vpop.f32.mrb[0].mxu0
    %v499 = vadd.f32 %v104, %v498
    %v500 = vpop.f32.mrb[0].mxu0
    %v501 = vadd.f32 %v108, %v500
    %v502 = vpop.f32.mrb[0].mxu0
    %v503 = vadd.f32 %v104, %v502
    %v504 = vpop.f32.mrb[0].mxu0
    %v505 = vadd.f32 %v108, %v504
    %506 = vmatprep.mubr.bf16.mxu0 0
    %507 = vmatmul.mubr.bf16.gmra.mrb[0].mxu0 %v149
    %v508 = vpop.f32.mrb[0].mxu0
    %v509 = vadd.f32 %v104, %v508
    %v510 = vpop.f32.mrb[0].mxu0
    %v511 = vadd.f32 %v108, %v510
    %v512 = vpop.f32.mrb[0].mxu0
    %v513 = vadd.f32 %v104, %v512
    %v514 = vpop.f32.mrb[0].mxu0
    %v515 = vadd.f32 %v108, %v514
    %516 = vmatprep.mubr.bf16.mxu0 0
    %517 = vmatmul.mubr.bf16.gmra.mrb[0].mxu0 %v150
    %v518 = vpop.f32.mrb[0].mxu0
    %v519 = vadd.f32 %v104, %v518
    %v520 = vpop.f32.mrb[0].mxu0
    %v521 = vadd.f32 %v108, %v520
    %v522 = vpop.f32.mrb[0].mxu0
    %v523 = vadd.f32 %v104, %v522
    %v524 = vpop.f32.mrb[0].mxu0
    %v525 = vadd.f32 %v108, %v524
    %526 = vmatprep.mubr.bf16.mxu0 0
    %527 = vmatmul.mubr.bf16.gmra.mrb[0].mxu0 %v151
    %v528 = vpop.f32.mrb[0].mxu0
    %v529 = vadd.f32 %v104, %v528
    %v530 = vpop.f32.mrb[0].mxu0
    %v531 = vadd.f32 %v108, %v530
    %v532 = vpop.f32.mrb[0].mxu0
    %v533 = vadd.f32 %v104, %v532
    %v534 = vpop.f32.mrb[0].mxu0
    %v535 = vadd.f32 %v108, %v534
    %536 = vmatprep.mubr.bf16.mxu0 0
    %537 = vmatmul.mubr.bf16.gmra.mrb[0].mxu0 %v152
    %v538 = vpop.f32.mrb[0].mxu0
    %v539 = vadd.f32 %v104, %v538
    %v540 = vpop.f32.mrb[0].mxu0
    %v541 = vadd.f32 %v108, %v540
    %v542 = vpop.f32.mrb[0].mxu0
    %v543 = vadd.f32 %v104, %v542
    %v544 = vpop.f32.mrb[0].mxu0
    %v545 = vadd.f32 %v108, %v544
    %546 = vdwg.mxu0
    %547 = vst [vmem:[#allocation2] sm:$0xff] %v356
    %548 = vst [vmem:[#allocation2 + $0x8] sm:$0xff] %v358
    %549 = vst [vmem:[#allocation2 + $0x10] sm:$0xff] %v469
    %550 = vst [vmem:[#allocation2 + $0x18] sm:$0xff] %v471
    %551 = vst [vmem:[#allocation2 + $0x20] sm:$0xff] %v360
    %552 = vst [vmem:[#allocation2 + $0x28] sm:$0xff] %v362
    %553 = vst [vmem:[#allocation2 + $0x30] sm:$0xff] %v473
    %554 = vst [vmem:[#allocation2 + $0x38] sm:$0xff] %v475
    %555 = vst [vmem:[#allocation2 + $0x40] sm:$0xff] %v366
    %556 = vst [vmem:[#allocation2 + $0x48] sm:$0xff] %v368
    %557 = vst [vmem:[#allocation2 + $0x50] sm:$0xff] %v479
    %558 = vst [vmem:[#allocation2 + $0x58] sm:$0xff] %v481
    %559 = vst [vmem:[#allocation2 + $0x60] sm:$0xff] %v370
    %560 = vst [vmem:[#allocation2 + $0x68] sm:$0xff] %v372
    %561 = vst [vmem:[#allocation2 + $0x70] sm:$0xff] %v483
    %562 = vst [vmem:[#allocation2 + $0x78] sm:$0xff] %v485
    %563 = vst [vmem:[#allocation2 + $0x80] sm:$0xff] %v376
    %564 = vst [vmem:[#allocation2 + $0x88] sm:$0xff] %v378
    %565 = vst [vmem:[#allocation2 + $0x90] sm:$0xff] %v489
    %566 = vst [vmem:[#allocation2 + $0x98] sm:$0xff] %v491
    %567 = vst [vmem:[#allocation2 + $0xa0] sm:$0xff] %v380
    %568 = vst [vmem:[#allocation2 + $0xa8] sm:$0xff] %v382
    %569 = vst [vmem:[#allocation2 + $0xb0] sm:$0xff] %v493
    %570 = vst [vmem:[#allocation2 + $0xb8] sm:$0xff] %v495
    %571 = vst [vmem:[#allocation2 + $0xc0] sm:$0xff] %v386
    %572 = vst [vmem:[#allocation2 + $0xc8] sm:$0xff] %v388
    %573 = vst [vmem:[#allocation2 + $0xd0] sm:$0xff] %v499
    %574 = vst [vmem:[#allocation2 + $0xd8] sm:$0xff] %v501
    %575 = vst [vmem:[#allocation2 + $0xe0] sm:$0xff] %v390
    %576 = vst [vmem:[#allocation2 + $0xe8] sm:$0xff] %v392
    %577 = vst [vmem:[#allocation2 + $0xf0] sm:$0xff] %v503
    %578 = vst [vmem:[#allocation2 + $0xf8] sm:$0xff] %v505
    %579 = vst [vmem:[#allocation2 + $0x100] sm:$0xff] %v396
    %580 = vst [vmem:[#allocation2 + $0x108] sm:$0xff] %v398
    %581 = vst [vmem:[#allocation2 + $0x110] sm:$0xff] %v509
    %582 = vst [vmem:[#allocation2 + $0x118] sm:$0xff] %v511
    %583 = vst [vmem:[#allocation2 + $0x120] sm:$0xff] %v400
    %584 = vst [vmem:[#allocation2 + $0x128] sm:$0xff] %v402
    %585 = vst [vmem:[#allocation2 + $0x130] sm:$0xff] %v513
    %586 = vst [vmem:[#allocation2 + $0x138] sm:$0xff] %v515
    %587 = vst [vmem:[#allocation2 + $0x140] sm:$0xff] %v406
    %588 = vst [vmem:[#allocation2 + $0x148] sm:$0xff] %v408
    %589 = vst [vmem:[#allocation2 + $0x150] sm:$0xff] %v519
    %590 = vst [vmem:[#allocation2 + $0x158] sm:$0xff] %v521
    %591 = vst [vmem:[#allocation2 + $0x160] sm:$0xff] %v410
    %592 = vst [vmem:[#allocation2 + $0x168] sm:$0xff] %v412
    %593 = vst [vmem:[#allocation2 + $0x170] sm:$0xff] %v523
    %594 = vst [vmem:[#allocation2 + $0x178] sm:$0xff] %v525
    %595 = vst [vmem:[#allocation2 + $0x180] sm:$0xff] %v416
    %596 = vst [vmem:[#allocation2 + $0x188] sm:$0xff] %v418
    %597 = vst [vmem:[#allocation2 + $0x190] sm:$0xff] %v529
    %598 = vst [vmem:[#allocation2 + $0x198] sm:$0xff] %v531
    %599 = vst [vmem:[#allocation2 + $0x1a0] sm:$0xff] %v420
    %600 = vst [vmem:[#allocation2 + $0x1a8] sm:$0xff] %v422
    %601 = vst [vmem:[#allocation2 + $0x1b0] sm:$0xff] %v533
    %602 = vst [vmem:[#allocation2 + $0x1b8] sm:$0xff] %v535
    %603 = vst [vmem:[#allocation2 + $0x1c0] sm:$0xff] %v426
    %604 = vst [vmem:[#allocation2 + $0x1c8] sm:$0xff] %v428
    %605 = vst [vmem:[#allocation2 + $0x1d0] sm:$0xff] %v539
    %606 = vst [vmem:[#allocation2 + $0x1d8] sm:$0xff] %v541
    %607 = vst [vmem:[#allocation2 + $0x1e0] sm:$0xff] %v430
    %608 = vst [vmem:[#allocation2 + $0x1e8] sm:$0xff] %v432
    %609 = vst [vmem:[#allocation2 + $0x1f0] sm:$0xff] %v543
    %610 = vst [vmem:[#allocation2 + $0x1f8] sm:$0xff] %v545
    %v611 = vld [vmem:[#allocation3] sm:$0xff]
    %v612 = vld [vmem:[#allocation3 + $0x8] sm:$0xff]
    %v613 = vld [vmem:[#allocation3 + $0x10] sm:$0xff]
    %v614 = vld [vmem:[#allocation3 + $0x18] sm:$0xff]
    %v615 = vld [vmem:[#allocation3 + $0x20] sm:$0xff]
    %v616 = vld [vmem:[#allocation3 + $0x28] sm:$0xff]
    %v617 = vld [vmem:[#allocation3 + $0x30] sm:$0xff]
    %v618 = vld [vmem:[#allocation3 + $0x38] sm:$0xff]
    %v619 = vld [vmem:[#allocation3 + $0x40] sm:$0xff]
    %v620 = vld [vmem:[#allocation3 + $0x48] sm:$0xff]
    %v621 = vld [vmem:[#allocation3 + $0x50] sm:$0xff]
    %v622 = vld [vmem:[#allocation3 + $0x58] sm:$0xff]
    %v623 = vld [vmem:[#allocation3 + $0x60] sm:$0xff]
    %v624 = vld [vmem:[#allocation3 + $0x68] sm:$0xff]
    %v625 = vld [vmem:[#allocation3 + $0x70] sm:$0xff]
    %v626 = vld [vmem:[#allocation3 + $0x78] sm:$0xff]
    %v627 = vld [vmem:[#allocation3 + $0x80] sm:$0xff]
    %v628 = vld [vmem:[#allocation3 + $0x88] sm:$0xff]
    %v629 = vld [vmem:[#allocation3 + $0x90] sm:$0xff]
    %v630 = vld [vmem:[#allocation3 + $0x98] sm:$0xff]
    %v631 = vld [vmem:[#allocation3 + $0xa0] sm:$0xff]
    %v632 = vld [vmem:[#allocation3 + $0xa8] sm:$0xff]
    %v633 = vld [vmem:[#allocation3 + $0xb0] sm:$0xff]
    %v634 = vld [vmem:[#allocation3 + $0xb8] sm:$0xff]
    %v635 = vld [vmem:[#allocation3 + $0xc0] sm:$0xff]
    %v636 = vld [vmem:[#allocation3 + $0xc8] sm:$0xff]
    %v637 = vld [vmem:[#allocation3 + $0xd0] sm:$0xff]
    %v638 = vld [vmem:[#allocation3 + $0xd8] sm:$0xff]
    %v639 = vld [vmem:[#allocation3 + $0xe0] sm:$0xff]
    %v640 = vld [vmem:[#allocation3 + $0xe8] sm:$0xff]
    %v641 = vld [vmem:[#allocation3 + $0xf0] sm:$0xff]
    %v642 = vld [vmem:[#allocation3 + $0xf8] sm:$0xff]
    %v643 = vld [vmem:[%s5] sm:$0xff]
    %v644 = vld [vmem:[%s5 + $0x8] sm:$0xff]
    %v645 = vld [vmem:[%s6] sm:$0xff]
    %v646 = vld [vmem:[%s6 + $0x8] sm:$0xff]
    %s647 = smul.u32 0, 4
    %s648 = smul.addr %s647, 8
    %s649 = scalar_lea.vmem [#allocation2], %s648
    %v650 = vld [vmem:[%s649] sm:$0xff]
    %v651 = vld [vmem:[%s649 + $0x8] sm:$0xff]
    %v652 = vld [vmem:[%s649 + $0x10] sm:$0xff]
    %v653 = vld [vmem:[%s649 + $0x18] sm:$0xff]
    %v654 = vld [vmem:[%s649 + $0x20] sm:$0xff]
    %v655 = vld [vmem:[%s649 + $0x28] sm:$0xff]
    %v656 = vld [vmem:[%s649 + $0x30] sm:$0xff]
    %v657 = vld [vmem:[%s649 + $0x38] sm:$0xff]
    %v658 = vpack.c.bf16 %v644, %v643
    %v691 = vunpack.c.l.b16 %v611
    %v692 = vunpack.c.h.b16 %v611
    %v693 = vunpack.c.l.b16 %v612
    %v694 = vunpack.c.h.b16 %v612
    %v695 = vunpack.c.l.b16 %v613
    %v696 = vunpack.c.h.b16 %v613
    %v697 = vunpack.c.l.b16 %v614
    %v698 = vunpack.c.h.b16 %v614
    %v699 = vunpack.c.l.b16 %v615
    %v700 = vunpack.c.h.b16 %v615
    %v701 = vunpack.c.l.b16 %v616
    %v702 = vunpack.c.h.b16 %v616
    %v703 = vunpack.c.l.b16 %v617
    %v704 = vunpack.c.h.b16 %v617
    %v705 = vunpack.c.l.b16 %v618
    %v706 = vunpack.c.h.b16 %v618
    %v707 = vunpack.c.l.b16 %v619
    %v708 = vunpack.c.h.b16 %v619
    %v709 = vunpack.c.l.b16 %v620
    %v710 = vunpack.c.h.b16 %v620
    %v711 = vunpack.c.l.b16 %v621
    %v712 = vunpack.c.h.b16 %v621
    %v713 = vunpack.c.l.b16 %v622
    %v714 = vunpack.c.h.b16 %v622
    %v715 = vunpack.c.l.b16 %v623
    %v716 = vunpack.c.h.b16 %v623
    %v717 = vunpack.c.l.b16 %v624
    %v718 = vunpack.c.h.b16 %v624
    %v719 = vunpack.c.l.b16 %v625
    %v720 = vunpack.c.h.b16 %v625
    %v721 = vunpack.c.l.b16 %v626
    %v722 = vunpack.c.h.b16 %v626
    %v723 = vunpack.c.l.b16 %v627
    %v724 = vunpack.c.h.b16 %v627
    %v725 = vunpack.c.l.b16 %v628
    %v726 = vunpack.c.h.b16 %v628
    %v727 = vunpack.c.l.b16 %v629
    %v728 = vunpack.c.h.b16 %v629
    %v729 = vunpack.c.l.b16 %v630
    %v730 = vunpack.c.h.b16 %v630
    %v731 = vunpack.c.l.b16 %v631
    %v732 = vunpack.c.h.b16 %v631
    %v733 = vunpack.c.l.b16 %v632
    %v734 = vunpack.c.h.b16 %v632
    %v735 = vunpack.c.l.b16 %v633
    %v736 = vunpack.c.h.b16 %v633
    %v737 = vunpack.c.l.b16 %v634
    %v738 = vunpack.c.h.b16 %v634
    %v739 = vunpack.c.l.b16 %v635
    %v740 = vunpack.c.h.b16 %v635
    %v741 = vunpack.c.l.b16 %v636
    %v742 = vunpack.c.h.b16 %v636
    %v743 = vunpack.c.l.b16 %v637
    %v744 = vunpack.c.h.b16 %v637
    %v745 = vunpack.c.l.b16 %v638
    %v746 = vunpack.c.h.b16 %v638
    %v747 = vunpack.c.l.b16 %v639
    %v748 = vunpack.c.h.b16 %v639
    %v749 = vunpack.c.l.b16 %v640
    %v750 = vunpack.c.h.b16 %v640
    %v751 = vunpack.c.l.b16 %v641
    %v752 = vunpack.c.h.b16 %v641
    %v753 = vunpack.c.l.b16 %v642
    %v754 = vunpack.c.h.b16 %v642
    %v755 = vpack.c.b16 %v695, %v691
    %v756 = vpack.c.b16 %v696, %v692
    %v757 = vpack.c.b16 %v697, %v693
    %v758 = vpack.c.b16 %v698, %v694
    %v759 = vpack.c.b16 %v703, %v699
    %v760 = vpack.c.b16 %v704, %v700
    %v761 = vpack.c.b16 %v705, %v701
    %v762 = vpack.c.b16 %v706, %v702
    %v763 = vpack.c.b16 %v711, %v707
    %v764 = vpack.c.b16 %v712, %v708
    %v765 = vpack.c.b16 %v713, %v709
    %v766 = vpack.c.b16 %v714, %v710
    %v767 = vpack.c.b16 %v719, %v715
    %v768 = vpack.c.b16 %v720, %v716
    %v769 = vpack.c.b16 %v721, %v717
    %v770 = vpack.c.b16 %v722, %v718
    %v771 = vpack.c.b16 %v727, %v723
    %v772 = vpack.c.b16 %v728, %v724
    %v773 = vpack.c.b16 %v729, %v725
    %v774 = vpack.c.b16 %v730, %v726
    %v775 = vpack.c.b16 %v735, %v731
    %v776 = vpack.c.b16 %v736, %v732
    %v777 = vpack.c.b16 %v737, %v733
    %v778 = vpack.c.b16 %v738, %v734
    %v779 = vpack.c.b16 %v743, %v739
    %v780 = vpack.c.b16 %v744, %v740
    %v781 = vpack.c.b16 %v745, %v741
    %v782 = vpack.c.b16 %v746, %v742
    %v783 = vpack.c.b16 %v751, %v747
    %v784 = vpack.c.b16 %v752, %v748
    %v785 = vpack.c.b16 %v753, %v749
    %v786 = vpack.c.b16 %v754, %v750
    %819 = vmatprep.subr.bf16.mxu0 %v756
    %820 = vmatpush1.bf16.msra.mxu0 %v755
    %821 = vmatprep.subr.bf16.mxu0 %v760
    %822 = vmatpush1.bf16.msra.mxu0 %v759
    %823 = vmatprep.subr.bf16.mxu0 %v764
    %824 = vmatpush1.bf16.msra.mxu0 %v763
    %825 = vmatprep.subr.bf16.mxu0 %v768
    %826 = vmatpush1.bf16.msra.mxu0 %v767
    %827 = vmatprep.subr.bf16.mxu0 %v772
    %828 = vmatpush1.bf16.msra.mxu0 %v771
    %829 = vmatprep.subr.bf16.mxu0 %v776
    %830 = vmatpush1.bf16.msra.mxu0 %v775
    %831 = vmatprep.subr.bf16.mxu0 %v780
    %832 = vmatpush1.bf16.msra.mxu0 %v779
    %833 = vmatprep.subr.bf16.mxu0 %v784
    %834 = vmatpush1.bf16.msra.mxu0 %v783
    %835 = vmatprep.subr.bf16.mxu0 0
    %836 = vmatpush1.bf16.msra.mxu0 0
    %837 = vmatprep.subr.bf16.mxu0 0
    %838 = vmatpush1.bf16.msra.mxu0 0
    %839 = vmatprep.subr.bf16.mxu0 0
    %840 = vmatpush1.bf16.msra.mxu0 0
    %841 = vmatprep.subr.bf16.mxu0 0
    %842 = vmatpush1.bf16.msra.mxu0 0
    %843 = vmatprep.subr.bf16.mxu0 0
    %844 = vmatpush1.bf16.msra.mxu0 0
    %845 = vmatprep.subr.bf16.mxu0 0
    %846 = vmatpush1.bf16.msra.mxu0 0
    %847 = vmatprep.subr.bf16.mxu0 0
    %848 = vmatpush1.bf16.msra.mxu0 0
    %849 = vmatprep.subr.bf16.mxu0 0
    %850 = vmatpush1.bf16.msra.mxu0 0
    %851 = vmatprep.mubr.bf16.mxu0 0
    %852 = vmatmul.mubr.bf16.gmra.mrb[0].mxu0 %v658
    %v853 = vpop.f32.mrb[0].mxu0
    %v854 = vadd.f32 0.0, %v853
    %v855 = vpop.f32.mrb[0].mxu0
    %v856 = vadd.f32 0.0, %v855
    %v857 = vpop.f32.mrb[0].mxu0
    %v858 = vadd.f32 0.0, %v857
    %v859 = vpop.f32.mrb[0].mxu0
    %v860 = vadd.f32 0.0, %v859
    %861 = vdwg.mxu0
    %862 = vmatprep.subr.bf16.mxu0 %v758
    %863 = vmatpush1.bf16.msra.mxu0 %v757
    %864 = vmatprep.subr.bf16.mxu0 %v762
    %865 = vmatpush1.bf16.msra.mxu0 %v761
    %866 = vmatprep.subr.bf16.mxu0 %v766
    %867 = vmatpush1.bf16.msra.mxu0 %v765
    %868 = vmatprep.subr.bf16.mxu0 %v770
    %869 = vmatpush1.bf16.msra.mxu0 %v769
    %870 = vmatprep.subr.bf16.mxu0 %v774
    %871 = vmatpush1.bf16.msra.mxu0 %v773
    %872 = vmatprep.subr.bf16.mxu0 %v778
    %873 = vmatpush1.bf16.msra.mxu0 %v777
    %874 = vmatprep.subr.bf16.mxu0 %v782
    %875 = vmatpush1.bf16.msra.mxu0 %v781
    %876 = vmatprep.subr.bf16.mxu0 %v786
    %877 = vmatpush1.bf16.msra.mxu0 %v785
    %878 = vmatprep.subr.bf16.mxu0 0
    %879 = vmatpush1.bf16.msra.mxu0 0
    %880 = vmatprep.subr.bf16.mxu0 0
    %881 = vmatpush1.bf16.msra.mxu0 0
    %882 = vmatprep.subr.bf16.mxu0 0
    %883 = vmatpush1.bf16.msra.mxu0 0
    %884 = vmatprep.subr.bf16.mxu0 0
    %885 = vmatpush1.bf16.msra.mxu0 0
    %886 = vmatprep.subr.bf16.mxu0 0
    %887 = vmatpush1.bf16.msra.mxu0 0
    %888 = vmatprep.subr.bf16.mxu0 0
    %889 = vmatpush1.bf16.msra.mxu0 0
    %890 = vmatprep.subr.bf16.mxu0 0
    %891 = vmatpush1.bf16.msra.mxu0 0
    %892 = vmatprep.subr.bf16.mxu0 0
    %893 = vmatpush1.bf16.msra.mxu0 0
    %894 = vmatprep.mubr.bf16.mxu0 0
    %895 = vmatmul.mubr.bf16.gmra.mrb[0].mxu0 %v658
    %v896 = vpop.f32.mrb[0].mxu0
    %v897 = vadd.f32 0.0, %v896
    %v898 = vpop.f32.mrb[0].mxu0
    %v899 = vadd.f32 0.0, %v898
    %v900 = vpop.f32.mrb[0].mxu0
    %v901 = vadd.f32 0.0, %v900
    %v902 = vpop.f32.mrb[0].mxu0
    %v903 = vadd.f32 0.0, %v902
    %904 = vdwg.mxu0
    %v905 = vadd.f32 %v650, %v854
    %v906 = vadd.f32 %v651, %v856
    %v907 = vadd.f32 %v652, %v897
    %v908 = vadd.f32 %v653, %v899
    %v909 = vadd.f32 %v654, %v858
    %v910 = vadd.f32 %v655, %v860
    %v911 = vadd.f32 %v656, %v901
    %v912 = vadd.f32 %v657, %v903
    %v913 = vmul.f32 %v905, 0.5
    %v914 = vmul.f32 %v909, 0.5
    %v915 = vtanh.pop %v913
    %v916 = vtanh.pop %v914
    %v917 = vmul.f32 %v915, 0.5
    %v918 = vmul.f32 %v916, 0.5
    %v919 = vadd.f32 %v917, 0.5
    %v920 = vadd.f32 %v918, 0.5
    %v921 = vmul.f32 %v906, 0.5
    %v922 = vmul.f32 %v910, 0.5
    %v923 = vtanh.pop %v921
    %v924 = vtanh.pop %v922
    %v925 = vmul.f32 %v923, 0.5
    %v926 = vmul.f32 %v924, 0.5
    %v927 = vadd.f32 %v925, 0.5
    %v928 = vadd.f32 %v926, 0.5
    %v929 = vtanh.pop %v907
    %v930 = vtanh.pop %v911
    %v931 = vmul.f32 %v908, 0.5
    %v932 = vmul.f32 %v912, 0.5
    %v933 = vtanh.pop %v931
    %v934 = vtanh.pop %v932
    %v935 = vmul.f32 %v933, 0.5
    %v936 = vmul.f32 %v934, 0.5
    %v937 = vadd.f32 %v935, 0.5
    %v938 = vadd.f32 %v936, 0.5
    %v939 = vmul.f32 %v927, %v645
    %v940 = vmul.f32 %v928, %v646
    %v941 = vmul.f32 %v919, %v929
    %v942 = vmul.f32 %v920, %v930
    %v943 = vadd.f32 %v939, %v941
    %v944 = vadd.f32 %v940, %v942
    %v945 = vtanh.pop %v943
    %v946 = vtanh.pop %v944
    %v947 = vmul.f32 %v937, %v945
    %v948 = vmul.f32 %v938, %v946
    %949 = vst [vmem:[%s6] sm:$0xff] %v943
    %950 = vst [vmem:[%s6 + $0x8] sm:$0xff] %v944
    %951 = vst [vmem:[%s5] sm:$0xff] %v947
    %952 = vst [vmem:[%s5 + $0x8] sm:$0xff] %v948
    %v953 = vpack.c.bf16 %v948, %v947
    %v955 = vunpack.c.l.b16 %v953
    %v956 = vunpack.c.h.b16 %v953
    %v957 = vpack.c.b16 %v955, %v955
    %v958 = vpack.c.b16 %v956, %v956
    %961 = vst [vmem:[%s4] sm:$0xf] %v957
    %962 = vst [vmem:[%s4 + $0x4] sm:$0xf] %v958
    %v963 = vld [vmem:[%s5] sm:$0xff]
    %v964 = vld [vmem:[%s5 + $0x8] sm:$0xff]
    %v965 = vld [vmem:[%s6] sm:$0xff]
    %v966 = vld [vmem:[%s6 + $0x8] sm:$0xff]
    %s967 = smul.u32 2, 4
    %s968 = smul.addr %s967, 8
    %s969 = scalar_lea.vmem [#allocation2], %s968
    %v970 = vld [vmem:[%s969] sm:$0xff]
    %v971 = vld [vmem:[%s969 + $0x8] sm:$0xff]
    %v972 = vld [vmem:[%s969 + $0x10] sm:$0xff]
    %v973 = vld [vmem:[%s969 + $0x18] sm:$0xff]
    %v974 = vld [vmem:[%s969 + $0x20] sm:$0xff]
    %v975 = vld [vmem:[%s969 + $0x28] sm:$0xff]
    %v976 = vld [vmem:[%s969 + $0x30] sm:$0xff]
    %v977 = vld [vmem:[%s969 + $0x38] sm:$0xff]
    %v978 = vpack.c.bf16 %v964, %v963
    %979 = vmatprep.subr.bf16.mxu0 %v756
    %980 = vmatpush1.bf16.msra.mxu0 %v755
    %981 = vmatprep.subr.bf16.mxu0 %v760
    %982 = vmatpush1.bf16.msra.mxu0 %v759
    %983 = vmatprep.subr.bf16.mxu0 %v764
    %984 = vmatpush1.bf16.msra.mxu0 %v763
    %985 = vmatprep.subr.bf16.mxu0 %v768
    %986 = vmatpush1.bf16.msra.mxu0 %v767
    %987 = vmatprep.subr.bf16.mxu0 %v772
    %988 = vmatpush1.bf16.msra.mxu0 %v771
    %989 = vmatprep.subr.bf16.mxu0 %v776
    %990 = vmatpush1.bf16.msra.mxu0 %v775
    %991 = vmatprep.subr.bf16.mxu0 %v780
    %992 = vmatpush1.bf16.msra.mxu0 %v779
    %993 = vmatprep.subr.bf16.mxu0 %v784
    %994 = vmatpush1.bf16.msra.mxu0 %v783
    %995 = vmatprep.subr.bf16.mxu0 0
    %996 = vmatpush1.bf16.msra.mxu0 0
    %997 = vmatprep.subr.bf16.mxu0 0
    %998 = vmatpush1.bf16.msra.mxu0 0
    %999 = vmatprep.subr.bf16.mxu0 0
    %1000 = vmatpush1.bf16.msra.mxu0 0
    %1001 = vmatprep.subr.bf16.mxu0 0
    %1002 = vmatpush1.bf16.msra.mxu0 0
    %1003 = vmatprep.subr.bf16.mxu0 0
    %1004 = vmatpush1.bf16.msra.mxu0 0
    %1005 = vmatprep.subr.bf16.mxu0 0
    %1006 = vmatpush1.bf16.msra.mxu0 0
    %1007 = vmatprep.subr.bf16.mxu0 0
    %1008 = vmatpush1.bf16.msra.mxu0 0
    %1009 = vmatprep.subr.bf16.mxu0 0
    %1010 = vmatpush1.bf16.msra.mxu0 0
    %1011 = vmatprep.mubr.bf16.mxu0 0
    %1012 = vmatmul.mubr.bf16.gmra.mrb[0].mxu0 %v978
    %v1013 = vpop.f32.mrb[0].mxu0
    %v1014 = vadd.f32 0.0, %v1013
    %v1015 = vpop.f32.mrb[0].mxu0
    %v1016 = vadd.f32 0.0, %v1015
    %v1017 = vpop.f32.mrb[0].mxu0
    %v1018 = vadd.f32 0.0, %v1017
    %v1019 = vpop.f32.mrb[0].mxu0
    %v1020 = vadd.f32 0.0, %v1019
    %1021 = vdwg.mxu0
    %1022 = vmatprep.subr.bf16.mxu0 %v758
    %1023 = vmatpush1.bf16.msra.mxu0 %v757
    %1024 = vmatprep.subr.bf16.mxu0 %v762
    %1025 = vmatpush1.bf16.msra.mxu0 %v761
    %1026 = vmatprep.subr.bf16.mxu0 %v766
    %1027 = vmatpush1.bf16.msra.mxu0 %v765
    %1028 = vmatprep.subr.bf16.mxu0 %v770
    %1029 = vmatpush1.bf16.msra.mxu0 %v769
    %1030 = vmatprep.subr.bf16.mxu0 %v774
    %1031 = vmatpush1.bf16.msra.mxu0 %v773
    %1032 = vmatprep.subr.bf16.mxu0 %v778
    %1033 = vmatpush1.bf16.msra.mxu0 %v777
    %1034 = vmatprep.subr.bf16.mxu0 %v782
    %1035 = vmatpush1.bf16.msra.mxu0 %v781
    %1036 = vmatprep.subr.bf16.mxu0 %v786
    %1037 = vmatpush1.bf16.msra.mxu0 %v785
    %1038 = vmatprep.subr.bf16.mxu0 0
    %1039 = vmatpush1.bf16.msra.mxu0 0
    %1040 = vmatprep.subr.bf16.mxu0 0
    %1041 = vmatpush1.bf16.msra.mxu0 0
    %1042 = vmatprep.subr.bf16.mxu0 0
    %1043 = vmatpush1.bf16.msra.mxu0 0
    %1044 = vmatprep.subr.bf16.mxu0 0
    %1045 = vmatpush1.bf16.msra.mxu0 0
    %1046 = vmatprep.subr.bf16.mxu0 0
    %1047 = vmatpush1.bf16.msra.mxu0 0
    %1048 = vmatprep.subr.bf16.mxu0 0
    %1049 = vmatpush1.bf16.msra.mxu0 0
    %1050 = vmatprep.subr.bf16.mxu0 0
    %1051 = vmatpush1.bf16.msra.mxu0 0
    %1052 = vmatprep.subr.bf16.mxu0 0
    %1053 = vmatpush1.bf16.msra.mxu0 0
    %1054 = vmatprep.mubr.bf16.mxu0 0
    %1055 = vmatmul.mubr.bf16.gmra.mrb[0].mxu0 %v978
    %v1056 = vpop.f32.mrb[0].mxu0
    %v1057 = vadd.f32 0.0, %v1056
    %v1058 = vpop.f32.mrb[0].mxu0
    %v1059 = vadd.f32 0.0, %v1058
    %v1060 = vpop.f32.mrb[0].mxu0
    %v1061 = vadd.f32 0.0, %v1060
    %v1062 = vpop.f32.mrb[0].mxu0
    %v1063 = vadd.f32 0.0, %v1062
    %1064 = vdwg.mxu0
    %v1065 = vadd.f32 %v970, %v1014
    %v1066 = vadd.f32 %v971, %v1016
    %v1067 = vadd.f32 %v972, %v1057
    %v1068 = vadd.f32 %v973, %v1059
    %v1069 = vadd.f32 %v974, %v1018
    %v1070 = vadd.f32 %v975, %v1020
    %v1071 = vadd.f32 %v976, %v1061
    %v1072 = vadd.f32 %v977, %v1063
    %v1073 = vmul.f32 %v1065, 0.5
    %v1074 = vmul.f32 %v1069, 0.5
    %v1075 = vtanh.pop %v1073
    %v1076 = vtanh.pop %v1074
    %v1077 = vmul.f32 %v1075, 0.5
    %v1078 = vmul.f32 %v1076, 0.5
    %v1079 = vadd.f32 %v1077, 0.5
    %v1080 = vadd.f32 %v1078, 0.5
    %v1081 = vmul.f32 %v1066, 0.5
    %v1082 = vmul.f32 %v1070, 0.5
    %v1083 = vtanh.pop %v1081
    %v1084 = vtanh.pop %v1082
    %v1085 = vmul.f32 %v1083, 0.5
    %v1086 = vmul.f32 %v1084, 0.5
    %v1087 = vadd.f32 %v1085, 0.5
    %v1088 = vadd.f32 %v1086, 0.5
    %v1089 = vtanh.pop %v1067
    %v1090 = vtanh.pop %v1071
    %v1091 = vmul.f32 %v1068, 0.5
    %v1092 = vmul.f32 %v1072, 0.5
    %v1093 = vtanh.pop %v1091
    %v1094 = vtanh.pop %v1092
    %v1095 = vmul.f32 %v1093, 0.5
    %v1096 = vmul.f32 %v1094, 0.5
    %v1097 = vadd.f32 %v1095, 0.5
    %v1098 = vadd.f32 %v1096, 0.5
    %v1099 = vmul.f32 %v1087, %v965
    %v1100 = vmul.f32 %v1088, %v966
    %v1101 = vmul.f32 %v1079, %v1089
    %v1102 = vmul.f32 %v1080, %v1090
    %v1103 = vadd.f32 %v1099, %v1101
    %v1104 = vadd.f32 %v1100, %v1102
    %v1105 = vtanh.pop %v1103
    %v1106 = vtanh.pop %v1104
    %v1107 = vmul.f32 %v1097, %v1105
    %v1108 = vmul.f32 %v1098, %v1106
    %1109 = vst [vmem:[%s6] sm:$0xff] %v1103
    %1110 = vst [vmem:[%s6 + $0x8] sm:$0xff] %v1104
    %1111 = vst [vmem:[%s5] sm:$0xff] %v1107
    %1112 = vst [vmem:[%s5 + $0x8] sm:$0xff] %v1108
    %v1113 = vpack.c.bf16 %v1108, %v1107
    %v1115 = vunpack.c.l.b16 %v1113
    %v1116 = vunpack.c.h.b16 %v1113
    %v1117 = vpack.c.b16 %v1115, %v1115
    %v1118 = vpack.c.b16 %v1116, %v1116
    %s1121 = scalar_lea.vmem %s4, 8
    %1122 = vst [vmem:[%s1121] sm:$0xf] %v1117
    %1123 = vst [vmem:[%s1121 + $0x4] sm:$0xf] %v1118
    %v1124 = vld [vmem:[%s5] sm:$0xff]
    %v1125 = vld [vmem:[%s5 + $0x8] sm:$0xff]
    %v1126 = vld [vmem:[%s6] sm:$0xff]
    %v1127 = vld [vmem:[%s6 + $0x8] sm:$0xff]
    %s1128 = smul.u32 4, 4
    %s1129 = smul.addr %s1128, 8
    %s1130 = scalar_lea.vmem [#allocation2], %s1129
    %v1131 = vld [vmem:[%s1130] sm:$0xff]
    %v1132 = vld [vmem:[%s1130 + $0x8] sm:$0xff]
    %v1133 = vld [vmem:[%s1130 + $0x10] sm:$0xff]
    %v1134 = vld [vmem:[%s1130 + $0x18] sm:$0xff]
    %v1135 = vld [vmem:[%s1130 + $0x20] sm:$0xff]
    %v1136 = vld [vmem:[%s1130 + $0x28] sm:$0xff]
    %v1137 = vld [vmem:[%s1130 + $0x30] sm:$0xff]
    %v1138 = vld [vmem:[%s1130 + $0x38] sm:$0xff]
    %v1139 = vpack.c.bf16 %v1125, %v1124
    %1140 = vmatprep.subr.bf16.mxu0 %v756
    %1141 = vmatpush1.bf16.msra.mxu0 %v755
    %1142 = vmatprep.subr.bf16.mxu0 %v760
    %1143 = vmatpush1.bf16.msra.mxu0 %v759
    %1144 = vmatprep.subr.bf16.mxu0 %v764
    %1145 = vmatpush1.bf16.msra.mxu0 %v763
    %1146 = vmatprep.subr.bf16.mxu0 %v768
    %1147 = vmatpush1.bf16.msra.mxu0 %v767
    %1148 = vmatprep.subr.bf16.mxu0 %v772
    %1149 = vmatpush1.bf16.msra.mxu0 %v771
    %1150 = vmatprep.subr.bf16.mxu0 %v776
    %1151 = vmatpush1.bf16.msra.mxu0 %v775
    %1152 = vmatprep.subr.bf16.mxu0 %v780
    %1153 = vmatpush1.bf16.msra.mxu0 %v779
    %1154 = vmatprep.subr.bf16.mxu0 %v784
    %1155 = vmatpush1.bf16.msra.mxu0 %v783
    %1156 = vmatprep.subr.bf16.mxu0 0
    %1157 = vmatpush1.bf16.msra.mxu0 0
    %1158 = vmatprep.subr.bf16.mxu0 0
    %1159 = vmatpush1.bf16.msra.mxu0 0
    %1160 = vmatprep.subr.bf16.mxu0 0
    %1161 = vmatpush1.bf16.msra.mxu0 0
    %1162 = vmatprep.subr.bf16.mxu0 0
    %1163 = vmatpush1.bf16.msra.mxu0 0
    %1164 = vmatprep.subr.bf16.mxu0 0
    %1165 = vmatpush1.bf16.msra.mxu0 0
    %1166 = vmatprep.subr.bf16.mxu0 0
    %1167 = vmatpush1.bf16.msra.mxu0 0
    %1168 = vmatprep.subr.bf16.mxu0 0
    %1169 = vmatpush1.bf16.msra.mxu0 0
    %1170 = vmatprep.subr.bf16.mxu0 0
    %1171 = vmatpush1.bf16.msra.mxu0 0
    %1172 = vmatprep.mubr.bf16.mxu0 0
    %1173 = vmatmul.mubr.bf16.gmra.mrb[0].mxu0 %v1139
    %v1174 = vpop.f32.mrb[0].mxu0
    %v1175 = vadd.f32 0.0, %v1174
    %v1176 = vpop.f32.mrb[0].mxu0
    %v1177 = vadd.f32 0.0, %v1176
    %v1178 = vpop.f32.mrb[0].mxu0
    %v1179 = vadd.f32 0.0, %v1178
    %v1180 = vpop.f32.mrb[0].mxu0
    %v1181 = vadd.f32 0.0, %v1180
    %1182 = vdwg.mxu0
    %1183 = vmatprep.subr.bf16.mxu0 %v758
    %1184 = vmatpush1.bf16.msra.mxu0 %v757
    %1185 = vmatprep.subr.bf16.mxu0 %v762
    %1186 = vmatpush1.bf16.msra.mxu0 %v761
    %1187 = vmatprep.subr.bf16.mxu0 %v766
    %1188 = vmatpush1.bf16.msra.mxu0 %v765
    %1189 = vmatprep.subr.bf16.mxu0 %v770
    %1190 = vmatpush1.bf16.msra.mxu0 %v769
    %1191 = vmatprep.subr.bf16.mxu0 %v774
    %1192 = vmatpush1.bf16.msra.mxu0 %v773
    %1193 = vmatprep.subr.bf16.mxu0 %v778
    %1194 = vmatpush1.bf16.msra.mxu0 %v777
    %1195 = vmatprep.subr.bf16.mxu0 %v782
    %1196 = vmatpush1.bf16.msra.mxu0 %v781
    %1197 = vmatprep.subr.bf16.mxu0 %v786
    %1198 = vmatpush1.bf16.msra.mxu0 %v785
    %1199 = vmatprep.subr.bf16.mxu0 0
    %1200 = vmatpush1.bf16.msra.mxu0 0
    %1201 = vmatprep.subr.bf16.mxu0 0
    %1202 = vmatpush1.bf16.msra.mxu0 0
    %1203 = vmatprep.subr.bf16.mxu0 0
    %1204 = vmatpush1.bf16.msra.mxu0 0
    %1205 = vmatprep.subr.bf16.mxu0 0
    %1206 = vmatpush1.bf16.msra.mxu0 0
    %1207 = vmatprep.subr.bf16.mxu0 0
    %1208 = vmatpush1.bf16.msra.mxu0 0
    %1209 = vmatprep.subr.bf16.mxu0 0
    %1210 = vmatpush1.bf16.msra.mxu0 0
    %1211 = vmatprep.subr.bf16.mxu0 0
    %1212 = vmatpush1.bf16.msra.mxu0 0
    %1213 = vmatprep.subr.bf16.mxu0 0
    %1214 = vmatpush1.bf16.msra.mxu0 0
    %1215 = vmatprep.mubr.bf16.mxu0 0
    %1216 = vmatmul.mubr.bf16.gmra.mrb[0].mxu0 %v1139
    %v1217 = vpop.f32.mrb[0].mxu0
    %v1218 = vadd.f32 0.0, %v1217
    %v1219 = vpop.f32.mrb[0].mxu0
    %v1220 = vadd.f32 0.0, %v1219
    %v1221 = vpop.f32.mrb[0].mxu0
    %v1222 = vadd.f32 0.0, %v1221
    %v1223 = vpop.f32.mrb[0].mxu0
    %v1224 = vadd.f32 0.0, %v1223
    %1225 = vdwg.mxu0
    %v1226 = vadd.f32 %v1131, %v1175
    %v1227 = vadd.f32 %v1132, %v1177
    %v1228 = vadd.f32 %v1133, %v1218
    %v1229 = vadd.f32 %v1134, %v1220
    %v1230 = vadd.f32 %v1135, %v1179
    %v1231 = vadd.f32 %v1136, %v1181
    %v1232 = vadd.f32 %v1137, %v1222
    %v1233 = vadd.f32 %v1138, %v1224
    %v1234 = vmul.f32 %v1226, 0.5
    %v1235 = vmul.f32 %v1230, 0.5
    %v1236 = vtanh.pop %v1234
    %v1237 = vtanh.pop %v1235
    %v1238 = vmul.f32 %v1236, 0.5
    %v1239 = vmul.f32 %v1237, 0.5
    %v1240 = vadd.f32 %v1238, 0.5
    %v1241 = vadd.f32 %v1239, 0.5
    %v1242 = vmul.f32 %v1227, 0.5
    %v1243 = vmul.f32 %v1231, 0.5
    %v1244 = vtanh.pop %v1242
    %v1245 = vtanh.pop %v1243
    %v1246 = vmul.f32 %v1244, 0.5
    %v1247 = vmul.f32 %v1245, 0.5
    %v1248 = vadd.f32 %v1246, 0.5
    %v1249 = vadd.f32 %v1247, 0.5
    %v1250 = vtanh.pop %v1228
    %v1251 = vtanh.pop %v1232
    %v1252 = vmul.f32 %v1229, 0.5
    %v1253 = vmul.f32 %v1233, 0.5
    %v1254 = vtanh.pop %v1252
    %v1255 = vtanh.pop %v1253
    %v1256 = vmul.f32 %v1254, 0.5
    %v1257 = vmul.f32 %v1255, 0.5
    %v1258 = vadd.f32 %v1256, 0.5
    %v1259 = vadd.f32 %v1257, 0.5
    %v1260 = vmul.f32 %v1248, %v1126
    %v1261 = vmul.f32 %v1249, %v1127
    %v1262 = vmul.f32 %v1240, %v1250
    %v1263 = vmul.f32 %v1241, %v1251
    %v1264 = vadd.f32 %v1260, %v1262
    %v1265 = vadd.f32 %v1261, %v1263
    %v1266 = vtanh.pop %v1264
    %v1267 = vtanh.pop %v1265
    %v1268 = vmul.f32 %v1258, %v1266
    %v1269 = vmul.f32 %v1259, %v1267
    %1270 = vst [vmem:[%s6] sm:$0xff] %v1264
    %1271 = vst [vmem:[%s6 + $0x8] sm:$0xff] %v1265
    %1272 = vst [vmem:[%s5] sm:$0xff] %v1268
    %1273 = vst [vmem:[%s5 + $0x8] sm:$0xff] %v1269
    %v1274 = vpack.c.bf16 %v1269, %v1268
    %v1276 = vunpack.c.l.b16 %v1274
    %v1277 = vunpack.c.h.b16 %v1274
    %v1278 = vpack.c.b16 %v1276, %v1276
    %v1279 = vpack.c.b16 %v1277, %v1277
    %s1282 = scalar_lea.vmem %s4, 16
    %1283 = vst [vmem:[%s1282] sm:$0xf] %v1278
    %1284 = vst [vmem:[%s1282 + $0x4] sm:$0xf] %v1279
    %v1285 = vld [vmem:[%s5] sm:$0xff]
    %v1286 = vld [vmem:[%s5 + $0x8] sm:$0xff]
    %v1287 = vld [vmem:[%s6] sm:$0xff]
    %v1288 = vld [vmem:[%s6 + $0x8] sm:$0xff]
    %s1289 = smul.u32 6, 4
    %s1290 = smul.addr %s1289, 8
    %s1291 = scalar_lea.vmem [#allocation2], %s1290
    %v1292 = vld [vmem:[%s1291] sm:$0xff]
    %v1293 = vld [vmem:[%s1291 + $0x8] sm:$0xff]
    %v1294 = vld [vmem:[%s1291 + $0x10] sm:$0xff]
    %v1295 = vld [vmem:[%s1291 + $0x18] sm:$0xff]
    %v1296 = vld [vmem:[%s1291 + $0x20] sm:$0xff]
    %v1297 = vld [vmem:[%s1291 + $0x28] sm:$0xff]
    %v1298 = vld [vmem:[%s1291 + $0x30] sm:$0xff]
    %v1299 = vld [vmem:[%s1291 + $0x38] sm:$0xff]
    %v1300 = vpack.c.bf16 %v1286, %v1285
    %1301 = vmatprep.subr.bf16.mxu0 %v756
    %1302 = vmatpush1.bf16.msra.mxu0 %v755
    %1303 = vmatprep.subr.bf16.mxu0 %v760
    %1304 = vmatpush1.bf16.msra.mxu0 %v759
    %1305 = vmatprep.subr.bf16.mxu0 %v764
    %1306 = vmatpush1.bf16.msra.mxu0 %v763
    %1307 = vmatprep.subr.bf16.mxu0 %v768
    %1308 = vmatpush1.bf16.msra.mxu0 %v767
    %1309 = vmatprep.subr.bf16.mxu0 %v772
    %1310 = vmatpush1.bf16.msra.mxu0 %v771
    %1311 = vmatprep.subr.bf16.mxu0 %v776
    %1312 = vmatpush1.bf16.msra.mxu0 %v775
    %1313 = vmatprep.subr.bf16.mxu0 %v780
    %1314 = vmatpush1.bf16.msra.mxu0 %v779
    %1315 = vmatprep.subr.bf16.mxu0 %v784
    %1316 = vmatpush1.bf16.msra.mxu0 %v783
    %1317 = vmatprep.subr.bf16.mxu0 0
    %1318 = vmatpush1.bf16.msra.mxu0 0
    %1319 = vmatprep.subr.bf16.mxu0 0
    %1320 = vmatpush1.bf16.msra.mxu0 0
    %1321 = vmatprep.subr.bf16.mxu0 0
    %1322 = vmatpush1.bf16.msra.mxu0 0
    %1323 = vmatprep.subr.bf16.mxu0 0
    %1324 = vmatpush1.bf16.msra.mxu0 0
    %1325 = vmatprep.subr.bf16.mxu0 0
    %1326 = vmatpush1.bf16.msra.mxu0 0
    %1327 = vmatprep.subr.bf16.mxu0 0
    %1328 = vmatpush1.bf16.msra.mxu0 0
    %1329 = vmatprep.subr.bf16.mxu0 0
    %1330 = vmatpush1.bf16.msra.mxu0 0
    %1331 = vmatprep.subr.bf16.mxu0 0
    %1332 = vmatpush1.bf16.msra.mxu0 0
    %1333 = vmatprep.mubr.bf16.mxu0 0
    %1334 = vmatmul.mubr.bf16.gmra.mrb[0].mxu0 %v1300
    %v1335 = vpop.f32.mrb[0].mxu0
    %v1336 = vadd.f32 0.0, %v1335
    %v1337 = vpop.f32.mrb[0].mxu0
    %v1338 = vadd.f32 0.0, %v1337
    %v1339 = vpop.f32.mrb[0].mxu0
    %v1340 = vadd.f32 0.0, %v1339
    %v1341 = vpop.f32.mrb[0].mxu0
    %v1342 = vadd.f32 0.0, %v1341
    %1343 = vdwg.mxu0
    %1344 = vmatprep.subr.bf16.mxu0 %v758
    %1345 = vmatpush1.bf16.msra.mxu0 %v757
    %1346 = vmatprep.subr.bf16.mxu0 %v762
    %1347 = vmatpush1.bf16.msra.mxu0 %v761
    %1348 = vmatprep.subr.bf16.mxu0 %v766
    %1349 = vmatpush1.bf16.msra.mxu0 %v765
    %1350 = vmatprep.subr.bf16.mxu0 %v770
    %1351 = vmatpush1.bf16.msra.mxu0 %v769
    %1352 = vmatprep.subr.bf16.mxu0 %v774
    %1353 = vmatpush1.bf16.msra.mxu0 %v773
    %1354 = vmatprep.subr.bf16.mxu0 %v778
    %1355 = vmatpush1.bf16.msra.mxu0 %v777
    %1356 = vmatprep.subr.bf16.mxu0 %v782
    %1357 = vmatpush1.bf16.msra.mxu0 %v781
    %1358 = vmatprep.subr.bf16.mxu0 %v786
    %1359 = vmatpush1.bf16.msra.mxu0 %v785
    %1360 = vmatprep.subr.bf16.mxu0 0
    %1361 = vmatpush1.bf16.msra.mxu0 0
    %1362 = vmatprep.subr.bf16.mxu0 0
    %1363 = vmatpush1.bf16.msra.mxu0 0
    %1364 = vmatprep.subr.bf16.mxu0 0
    %1365 = vmatpush1.bf16.msra.mxu0 0
    %1366 = vmatprep.subr.bf16.mxu0 0
    %1367 = vmatpush1.bf16.msra.mxu0 0
    %1368 = vmatprep.subr.bf16.mxu0 0
    %1369 = vmatpush1.bf16.msra.mxu0 0
    %1370 = vmatprep.subr.bf16.mxu0 0
    %1371 = vmatpush1.bf16.msra.mxu0 0
    %1372 = vmatprep.subr.bf16.mxu0 0
    %1373 = vmatpush1.bf16.msra.mxu0 0
    %1374 = vmatprep.subr.bf16.mxu0 0
    %1375 = vmatpush1.bf16.msra.mxu0 0
    %1376 = vmatprep.mubr.bf16.mxu0 0
    %1377 = vmatmul.mubr.bf16.gmra.mrb[0].mxu0 %v1300
    %v1378 = vpop.f32.mrb[0].mxu0
    %v1379 = vadd.f32 0.0, %v1378
    %v1380 = vpop.f32.mrb[0].mxu0
    %v1381 = vadd.f32 0.0, %v1380
    %v1382 = vpop.f32.mrb[0].mxu0
    %v1383 = vadd.f32 0.0, %v1382
    %v1384 = vpop.f32.mrb[0].mxu0
    %v1385 = vadd.f32 0.0, %v1384
    %1386 = vdwg.mxu0
    %v1387 = vadd.f32 %v1292, %v1336
    %v1388 = vadd.f32 %v1293, %v1338
    %v1389 = vadd.f32 %v1294, %v1379
    %v1390 = vadd.f32 %v1295, %v1381
    %v1391 = vadd.f32 %v1296, %v1340
    %v1392 = vadd.f32 %v1297, %v1342
    %v1393 = vadd.f32 %v1298, %v1383
    %v1394 = vadd.f32 %v1299, %v1385
    %v1395 = vmul.f32 %v1387, 0.5
    %v1396 = vmul.f32 %v1391, 0.5
    %v1397 = vtanh.pop %v1395
    %v1398 = vtanh.pop %v1396
    %v1399 = vmul.f32 %v1397, 0.5
    %v1400 = vmul.f32 %v1398, 0.5
    %v1401 = vadd.f32 %v1399, 0.5
    %v1402 = vadd.f32 %v1400, 0.5
    %v1403 = vmul.f32 %v1388, 0.5
    %v1404 = vmul.f32 %v1392, 0.5
    %v1405 = vtanh.pop %v1403
    %v1406 = vtanh.pop %v1404
    %v1407 = vmul.f32 %v1405, 0.5
    %v1408 = vmul.f32 %v1406, 0.5
    %v1409 = vadd.f32 %v1407, 0.5
    %v1410 = vadd.f32 %v1408, 0.5
    %v1411 = vtanh.pop %v1389
    %v1412 = vtanh.pop %v1393
    %v1413 = vmul.f32 %v1390, 0.5
    %v1414 = vmul.f32 %v1394, 0.5
    %v1415 = vtanh.pop %v1413
    %v1416 = vtanh.pop %v1414
    %v1417 = vmul.f32 %v1415, 0.5
    %v1418 = vmul.f32 %v1416, 0.5
    %v1419 = vadd.f32 %v1417, 0.5
    %v1420 = vadd.f32 %v1418, 0.5
    %v1421 = vmul.f32 %v1409, %v1287
    %v1422 = vmul.f32 %v1410, %v1288
    %v1423 = vmul.f32 %v1401, %v1411
    %v1424 = vmul.f32 %v1402, %v1412
    %v1425 = vadd.f32 %v1421, %v1423
    %v1426 = vadd.f32 %v1422, %v1424
    %v1427 = vtanh.pop %v1425
    %v1428 = vtanh.pop %v1426
    %v1429 = vmul.f32 %v1419, %v1427
    %v1430 = vmul.f32 %v1420, %v1428
    %1431 = vst [vmem:[%s6] sm:$0xff] %v1425
    %1432 = vst [vmem:[%s6 + $0x8] sm:$0xff] %v1426
    %1433 = vst [vmem:[%s5] sm:$0xff] %v1429
    %1434 = vst [vmem:[%s5 + $0x8] sm:$0xff] %v1430
    %v1435 = vpack.c.bf16 %v1430, %v1429
    %v1437 = vunpack.c.l.b16 %v1435
    %v1438 = vunpack.c.h.b16 %v1435
    %v1439 = vpack.c.b16 %v1437, %v1437
    %v1440 = vpack.c.b16 %v1438, %v1438
    %s1443 = scalar_lea.vmem %s4, 24
    %1444 = vst [vmem:[%s1443] sm:$0xf] %v1439
    %1445 = vst [vmem:[%s1443 + $0x4] sm:$0xf] %v1440
    %v1446 = vld [vmem:[%s5] sm:$0xff]
    %v1447 = vld [vmem:[%s5 + $0x8] sm:$0xff]
    %v1448 = vld [vmem:[%s6] sm:$0xff]
    %v1449 = vld [vmem:[%s6 + $0x8] sm:$0xff]
    %s1450 = smul.u32 8, 4
    %s1451 = smul.addr %s1450, 8
    %s1452 = scalar_lea.vmem [#allocation2], %s1451
    %v1453 = vld [vmem:[%s1452] sm:$0xff]
    %v1454 = vld [vmem:[%s1452 + $0x8] sm:$0xff]
    %v1455 = vld [vmem:[%s1452 + $0x10] sm:$0xff]
    %v1456 = vld [vmem:[%s1452 + $0x18] sm:$0xff]
    %v1457 = vld [vmem:[%s1452 + $0x20] sm:$0xff]
    %v1458 = vld [vmem:[%s1452 + $0x28] sm:$0xff]
    %v1459 = vld [vmem:[%s1452 + $0x30] sm:$0xff]
    %v1460 = vld [vmem:[%s1452 + $0x38] sm:$0xff]
    %v1461 = vpack.c.bf16 %v1447, %v1446
    %1462 = vmatprep.subr.bf16.mxu0 %v756
    %1463 = vmatpush1.bf16.msra.mxu0 %v755
    %1464 = vmatprep.subr.bf16.mxu0 %v760
    %1465 = vmatpush1.bf16.msra.mxu0 %v759
    %1466 = vmatprep.subr.bf16.mxu0 %v764
    %1467 = vmatpush1.bf16.msra.mxu0 %v763
    %1468 = vmatprep.subr.bf16.mxu0 %v768
    %1469 = vmatpush1.bf16.msra.mxu0 %v767
    %1470 = vmatprep.subr.bf16.mxu0 %v772
    %1471 = vmatpush1.bf16.msra.mxu0 %v771
    %1472 = vmatprep.subr.bf16.mxu0 %v776
    %1473 = vmatpush1.bf16.msra.mxu0 %v775
    %1474 = vmatprep.subr.bf16.mxu0 %v780
    %1475 = vmatpush1.bf16.msra.mxu0 %v779
    %1476 = vmatprep.subr.bf16.mxu0 %v784
    %1477 = vmatpush1.bf16.msra.mxu0 %v783
    %1478 = vmatprep.subr.bf16.mxu0 0
    %1479 = vmatpush1.bf16.msra.mxu0 0
    %1480 = vmatprep.subr.bf16.mxu0 0
    %1481 = vmatpush1.bf16.msra.mxu0 0
    %1482 = vmatprep.subr.bf16.mxu0 0
    %1483 = vmatpush1.bf16.msra.mxu0 0
    %1484 = vmatprep.subr.bf16.mxu0 0
    %1485 = vmatpush1.bf16.msra.mxu0 0
    %1486 = vmatprep.subr.bf16.mxu0 0
    %1487 = vmatpush1.bf16.msra.mxu0 0
    %1488 = vmatprep.subr.bf16.mxu0 0
    %1489 = vmatpush1.bf16.msra.mxu0 0
    %1490 = vmatprep.subr.bf16.mxu0 0
    %1491 = vmatpush1.bf16.msra.mxu0 0
    %1492 = vmatprep.subr.bf16.mxu0 0
    %1493 = vmatpush1.bf16.msra.mxu0 0
    %1494 = vmatprep.mubr.bf16.mxu0 0
    %1495 = vmatmul.mubr.bf16.gmra.mrb[0].mxu0 %v1461
    %v1496 = vpop.f32.mrb[0].mxu0
    %v1497 = vadd.f32 0.0, %v1496
    %v1498 = vpop.f32.mrb[0].mxu0
    %v1499 = vadd.f32 0.0, %v1498
    %v1500 = vpop.f32.mrb[0].mxu0
    %v1501 = vadd.f32 0.0, %v1500
    %v1502 = vpop.f32.mrb[0].mxu0
    %v1503 = vadd.f32 0.0, %v1502
    %1504 = vdwg.mxu0
    %1505 = vmatprep.subr.bf16.mxu0 %v758
    %1506 = vmatpush1.bf16.msra.mxu0 %v757
    %1507 = vmatprep.subr.bf16.mxu0 %v762
    %1508 = vmatpush1.bf16.msra.mxu0 %v761
    %1509 = vmatprep.subr.bf16.mxu0 %v766
    %1510 = vmatpush1.bf16.msra.mxu0 %v765
    %1511 = vmatprep.subr.bf16.mxu0 %v770
    %1512 = vmatpush1.bf16.msra.mxu0 %v769
    %1513 = vmatprep.subr.bf16.mxu0 %v774
    %1514 = vmatpush1.bf16.msra.mxu0 %v773
    %1515 = vmatprep.subr.bf16.mxu0 %v778
    %1516 = vmatpush1.bf16.msra.mxu0 %v777
    %1517 = vmatprep.subr.bf16.mxu0 %v782
    %1518 = vmatpush1.bf16.msra.mxu0 %v781
    %1519 = vmatprep.subr.bf16.mxu0 %v786
    %1520 = vmatpush1.bf16.msra.mxu0 %v785
    %1521 = vmatprep.subr.bf16.mxu0 0
    %1522 = vmatpush1.bf16.msra.mxu0 0
    %1523 = vmatprep.subr.bf16.mxu0 0
    %1524 = vmatpush1.bf16.msra.mxu0 0
    %1525 = vmatprep.subr.bf16.mxu0 0
    %1526 = vmatpush1.bf16.msra.mxu0 0
    %1527 = vmatprep.subr.bf16.mxu0 0
    %1528 = vmatpush1.bf16.msra.mxu0 0
    %1529 = vmatprep.subr.bf16.mxu0 0
    %1530 = vmatpush1.bf16.msra.mxu0 0
    %1531 = vmatprep.subr.bf16.mxu0 0
    %1532 = vmatpush1.bf16.msra.mxu0 0
    %1533 = vmatprep.subr.bf16.mxu0 0
    %1534 = vmatpush1.bf16.msra.mxu0 0
    %1535 = vmatprep.subr.bf16.mxu0 0
    %1536 = vmatpush1.bf16.msra.mxu0 0
    %1537 = vmatprep.mubr.bf16.mxu0 0
    %1538 = vmatmul.mubr.bf16.gmra.mrb[0].mxu0 %v1461
    %v1539 = vpop.f32.mrb[0].mxu0
    %v1540 = vadd.f32 0.0, %v1539
    %v1541 = vpop.f32.mrb[0].mxu0
    %v1542 = vadd.f32 0.0, %v1541
    %v1543 = vpop.f32.mrb[0].mxu0
    %v1544 = vadd.f32 0.0, %v1543
    %v1545 = vpop.f32.mrb[0].mxu0
    %v1546 = vadd.f32 0.0, %v1545
    %1547 = vdwg.mxu0
    %v1548 = vadd.f32 %v1453, %v1497
    %v1549 = vadd.f32 %v1454, %v1499
    %v1550 = vadd.f32 %v1455, %v1540
    %v1551 = vadd.f32 %v1456, %v1542
    %v1552 = vadd.f32 %v1457, %v1501
    %v1553 = vadd.f32 %v1458, %v1503
    %v1554 = vadd.f32 %v1459, %v1544
    %v1555 = vadd.f32 %v1460, %v1546
    %v1556 = vmul.f32 %v1548, 0.5
    %v1557 = vmul.f32 %v1552, 0.5
    %v1558 = vtanh.pop %v1556
    %v1559 = vtanh.pop %v1557
    %v1560 = vmul.f32 %v1558, 0.5
    %v1561 = vmul.f32 %v1559, 0.5
    %v1562 = vadd.f32 %v1560, 0.5
    %v1563 = vadd.f32 %v1561, 0.5
    %v1564 = vmul.f32 %v1549, 0.5
    %v1565 = vmul.f32 %v1553, 0.5
    %v1566 = vtanh.pop %v1564
    %v1567 = vtanh.pop %v1565
    %v1568 = vmul.f32 %v1566, 0.5
    %v1569 = vmul.f32 %v1567, 0.5
    %v1570 = vadd.f32 %v1568, 0.5
    %v1571 = vadd.f32 %v1569, 0.5
    %v1572 = vtanh.pop %v1550
    %v1573 = vtanh.pop %v1554
    %v1574 = vmul.f32 %v1551, 0.5
    %v1575 = vmul.f32 %v1555, 0.5
    %v1576 = vtanh.pop %v1574
    %v1577 = vtanh.pop %v1575
    %v1578 = vmul.f32 %v1576, 0.5
    %v1579 = vmul.f32 %v1577, 0.5
    %v1580 = vadd.f32 %v1578, 0.5
    %v1581 = vadd.f32 %v1579, 0.5
    %v1582 = vmul.f32 %v1570, %v1448
    %v1583 = vmul.f32 %v1571, %v1449
    %v1584 = vmul.f32 %v1562, %v1572
    %v1585 = vmul.f32 %v1563, %v1573
    %v1586 = vadd.f32 %v1582, %v1584
    %v1587 = vadd.f32 %v1583, %v1585
    %v1588 = vtanh.pop %v1586
    %v1589 = vtanh.pop %v1587
    %v1590 = vmul.f32 %v1580, %v1588
    %v1591 = vmul.f32 %v1581, %v1589
    %1592 = vst [vmem:[%s6] sm:$0xff] %v1586
    %1593 = vst [vmem:[%s6 + $0x8] sm:$0xff] %v1587
    %1594 = vst [vmem:[%s5] sm:$0xff] %v1590
    %1595 = vst [vmem:[%s5 + $0x8] sm:$0xff] %v1591
    %v1596 = vpack.c.bf16 %v1591, %v1590
    %v1598 = vunpack.c.l.b16 %v1596
    %v1599 = vunpack.c.h.b16 %v1596
    %v1600 = vpack.c.b16 %v1598, %v1598
    %v1601 = vpack.c.b16 %v1599, %v1599
    %s1604 = scalar_lea.vmem %s4, 32
    %1605 = vst [vmem:[%s1604] sm:$0xf] %v1600
    %1606 = vst [vmem:[%s1604 + $0x4] sm:$0xf] %v1601
    %v1607 = vld [vmem:[%s5] sm:$0xff]
    %v1608 = vld [vmem:[%s5 + $0x8] sm:$0xff]
    %v1609 = vld [vmem:[%s6] sm:$0xff]
    %v1610 = vld [vmem:[%s6 + $0x8] sm:$0xff]
    %s1611 = smul.u32 10, 4
    %s1612 = smul.addr %s1611, 8
    %s1613 = scalar_lea.vmem [#allocation2], %s1612
    %v1614 = vld [vmem:[%s1613] sm:$0xff]
    %v1615 = vld [vmem:[%s1613 + $0x8] sm:$0xff]
    %v1616 = vld [vmem:[%s1613 + $0x10] sm:$0xff]
    %v1617 = vld [vmem:[%s1613 + $0x18] sm:$0xff]
    %v1618 = vld [vmem:[%s1613 + $0x20] sm:$0xff]
    %v1619 = vld [vmem:[%s1613 + $0x28] sm:$0xff]
    %v1620 = vld [vmem:[%s1613 + $0x30] sm:$0xff]
    %v1621 = vld [vmem:[%s1613 + $0x38] sm:$0xff]
    %v1622 = vpack.c.bf16 %v1608, %v1607
    %1623 = vmatprep.subr.bf16.mxu0 %v756
    %1624 = vmatpush1.bf16.msra.mxu0 %v755
    %1625 = vmatprep.subr.bf16.mxu0 %v760
    %1626 = vmatpush1.bf16.msra.mxu0 %v759
    %1627 = vmatprep.subr.bf16.mxu0 %v764
    %1628 = vmatpush1.bf16.msra.mxu0 %v763
    %1629 = vmatprep.subr.bf16.mxu0 %v768
    %1630 = vmatpush1.bf16.msra.mxu0 %v767
    %1631 = vmatprep.subr.bf16.mxu0 %v772
    %1632 = vmatpush1.bf16.msra.mxu0 %v771
    %1633 = vmatprep.subr.bf16.mxu0 %v776
    %1634 = vmatpush1.bf16.msra.mxu0 %v775
    %1635 = vmatprep.subr.bf16.mxu0 %v780
    %1636 = vmatpush1.bf16.msra.mxu0 %v779
    %1637 = vmatprep.subr.bf16.mxu0 %v784
    %1638 = vmatpush1.bf16.msra.mxu0 %v783
    %1639 = vmatprep.subr.bf16.mxu0 0
    %1640 = vmatpush1.bf16.msra.mxu0 0
    %1641 = vmatprep.subr.bf16.mxu0 0
    %1642 = vmatpush1.bf16.msra.mxu0 0
    %1643 = vmatprep.subr.bf16.mxu0 0
    %1644 = vmatpush1.bf16.msra.mxu0 0
    %1645 = vmatprep.subr.bf16.mxu0 0
    %1646 = vmatpush1.bf16.msra.mxu0 0
    %1647 = vmatprep.subr.bf16.mxu0 0
    %1648 = vmatpush1.bf16.msra.mxu0 0
    %1649 = vmatprep.subr.bf16.mxu0 0
    %1650 = vmatpush1.bf16.msra.mxu0 0
    %1651 = vmatprep.subr.bf16.mxu0 0
    %1652 = vmatpush1.bf16.msra.mxu0 0
    %1653 = vmatprep.subr.bf16.mxu0 0
    %1654 = vmatpush1.bf16.msra.mxu0 0
    %1655 = vmatprep.mubr.bf16.mxu0 0
    %1656 = vmatmul.mubr.bf16.gmra.mrb[0].mxu0 %v1622
    %v1657 = vpop.f32.mrb[0].mxu0
    %v1658 = vadd.f32 0.0, %v1657
    %v1659 = vpop.f32.mrb[0].mxu0
    %v1660 = vadd.f32 0.0, %v1659
    %v1661 = vpop.f32.mrb[0].mxu0
    %v1662 = vadd.f32 0.0, %v1661
    %v1663 = vpop.f32.mrb[0].mxu0
    %v1664 = vadd.f32 0.0, %v1663
    %1665 = vdwg.mxu0
    %1666 = vmatprep.subr.bf16.mxu0 %v758
    %1667 = vmatpush1.bf16.msra.mxu0 %v757
    %1668 = vmatprep.subr.bf16.mxu0 %v762
    %1669 = vmatpush1.bf16.msra.mxu0 %v761
    %1670 = vmatprep.subr.bf16.mxu0 %v766
    %1671 = vmatpush1.bf16.msra.mxu0 %v765
    %1672 = vmatprep.subr.bf16.mxu0 %v770
    %1673 = vmatpush1.bf16.msra.mxu0 %v769
    %1674 = vmatprep.subr.bf16.mxu0 %v774
    %1675 = vmatpush1.bf16.msra.mxu0 %v773
    %1676 = vmatprep.subr.bf16.mxu0 %v778
    %1677 = vmatpush1.bf16.msra.mxu0 %v777
    %1678 = vmatprep.subr.bf16.mxu0 %v782
    %1679 = vmatpush1.bf16.msra.mxu0 %v781
    %1680 = vmatprep.subr.bf16.mxu0 %v786
    %1681 = vmatpush1.bf16.msra.mxu0 %v785
    %1682 = vmatprep.subr.bf16.mxu0 0
    %1683 = vmatpush1.bf16.msra.mxu0 0
    %1684 = vmatprep.subr.bf16.mxu0 0
    %1685 = vmatpush1.bf16.msra.mxu0 0
    %1686 = vmatprep.subr.bf16.mxu0 0
    %1687 = vmatpush1.bf16.msra.mxu0 0
    %1688 = vmatprep.subr.bf16.mxu0 0
    %1689 = vmatpush1.bf16.msra.mxu0 0
    %1690 = vmatprep.subr.bf16.mxu0 0
    %1691 = vmatpush1.bf16.msra.mxu0 0
    %1692 = vmatprep.subr.bf16.mxu0 0
    %1693 = vmatpush1.bf16.msra.mxu0 0
    %1694 = vmatprep.subr.bf16.mxu0 0
    %1695 = vmatpush1.bf16.msra.mxu0 0
    %1696 = vmatprep.subr.bf16.mxu0 0
    %1697 = vmatpush1.bf16.msra.mxu0 0
    %1698 = vmatprep.mubr.bf16.mxu0 0
    %1699 = vmatmul.mubr.bf16.gmra.mrb[0].mxu0 %v1622
    %v1700 = vpop.f32.mrb[0].mxu0
    %v1701 = vadd.f32 0.0, %v1700
    %v1702 = vpop.f32.mrb[0].mxu0
    %v1703 = vadd.f32 0.0, %v1702
    %v1704 = vpop.f32.mrb[0].mxu0
    %v1705 = vadd.f32 0.0, %v1704
    %v1706 = vpop.f32.mrb[0].mxu0
    %v1707 = vadd.f32 0.0, %v1706
    %1708 = vdwg.mxu0
    %v1709 = vadd.f32 %v1614, %v1658
    %v1710 = vadd.f32 %v1615, %v1660
    %v1711 = vadd.f32 %v1616, %v1701
    %v1712 = vadd.f32 %v1617, %v1703
    %v1713 = vadd.f32 %v1618, %v1662
    %v1714 = vadd.f32 %v1619, %v1664
    %v1715 = vadd.f32 %v1620, %v1705
    %v1716 = vadd.f32 %v1621, %v1707
    %v1717 = vmul.f32 %v1709, 0.5
    %v1718 = vmul.f32 %v1713, 0.5
    %v1719 = vtanh.pop %v1717
    %v1720 = vtanh.pop %v1718
    %v1721 = vmul.f32 %v1719, 0.5
    %v1722 = vmul.f32 %v1720, 0.5
    %v1723 = vadd.f32 %v1721, 0.5
    %v1724 = vadd.f32 %v1722, 0.5
    %v1725 = vmul.f32 %v1710, 0.5
    %v1726 = vmul.f32 %v1714, 0.5
    %v1727 = vtanh.pop %v1725
    %v1728 = vtanh.pop %v1726
    %v1729 = vmul.f32 %v1727, 0.5
    %v1730 = vmul.f32 %v1728, 0.5
    %v1731 = vadd.f32 %v1729, 0.5
    %v1732 = vadd.f32 %v1730, 0.5
    %v1733 = vtanh.pop %v1711
    %v1734 = vtanh.pop %v1715
    %v1735 = vmul.f32 %v1712, 0.5
    %v1736 = vmul.f32 %v1716, 0.5
    %v1737 = vtanh.pop %v1735
    %v1738 = vtanh.pop %v1736
    %v1739 = vmul.f32 %v1737, 0.5
    %v1740 = vmul.f32 %v1738, 0.5
    %v1741 = vadd.f32 %v1739, 0.5
    %v1742 = vadd.f32 %v1740, 0.5
    %v1743 = vmul.f32 %v1731, %v1609
    %v1744 = vmul.f32 %v1732, %v1610
    %v1745 = vmul.f32 %v1723, %v1733
    %v1746 = vmul.f32 %v1724, %v1734
    %v1747 = vadd.f32 %v1743, %v1745
    %v1748 = vadd.f32 %v1744, %v1746
    %v1749 = vtanh.pop %v1747
    %v1750 = vtanh.pop %v1748
    %v1751 = vmul.f32 %v1741, %v1749
    %v1752 = vmul.f32 %v1742, %v1750
    %1753 = vst [vmem:[%s6] sm:$0xff] %v1747
    %1754 = vst [vmem:[%s6 + $0x8] sm:$0xff] %v1748
    %1755 = vst [vmem:[%s5] sm:$0xff] %v1751
    %1756 = vst [vmem:[%s5 + $0x8] sm:$0xff] %v1752
    %v1757 = vpack.c.bf16 %v1752, %v1751
    %v1759 = vunpack.c.l.b16 %v1757
    %v1760 = vunpack.c.h.b16 %v1757
    %v1761 = vpack.c.b16 %v1759, %v1759
    %v1762 = vpack.c.b16 %v1760, %v1760
    %s1765 = scalar_lea.vmem %s4, 40
    %1766 = vst [vmem:[%s1765] sm:$0xf] %v1761
    %1767 = vst [vmem:[%s1765 + $0x4] sm:$0xf] %v1762
    %v1768 = vld [vmem:[%s5] sm:$0xff]
    %v1769 = vld [vmem:[%s5 + $0x8] sm:$0xff]
    %v1770 = vld [vmem:[%s6] sm:$0xff]
    %v1771 = vld [vmem:[%s6 + $0x8] sm:$0xff]
    %s1772 = smul.u32 12, 4
    %s1773 = smul.addr %s1772, 8
    %s1774 = scalar_lea.vmem [#allocation2], %s1773
    %v1775 = vld [vmem:[%s1774] sm:$0xff]
    %v1776 = vld [vmem:[%s1774 + $0x8] sm:$0xff]
    %v1777 = vld [vmem:[%s1774 + $0x10] sm:$0xff]
    %v1778 = vld [vmem:[%s1774 + $0x18] sm:$0xff]
    %v1779 = vld [vmem:[%s1774 + $0x20] sm:$0xff]
    %v1780 = vld [vmem:[%s1774 + $0x28] sm:$0xff]
    %v1781 = vld [vmem:[%s1774 + $0x30] sm:$0xff]
    %v1782 = vld [vmem:[%s1774 + $0x38] sm:$0xff]
    %v1783 = vpack.c.bf16 %v1769, %v1768
    %1784 = vmatprep.subr.bf16.mxu0 %v756
    %1785 = vmatpush1.bf16.msra.mxu0 %v755
    %1786 = vmatprep.subr.bf16.mxu0 %v760
    %1787 = vmatpush1.bf16.msra.mxu0 %v759
    %1788 = vmatprep.subr.bf16.mxu0 %v764
    %1789 = vmatpush1.bf16.msra.mxu0 %v763
    %1790 = vmatprep.subr.bf16.mxu0 %v768
    %1791 = vmatpush1.bf16.msra.mxu0 %v767
    %1792 = vmatprep.subr.bf16.mxu0 %v772
    %1793 = vmatpush1.bf16.msra.mxu0 %v771
    %1794 = vmatprep.subr.bf16.mxu0 %v776
    %1795 = vmatpush1.bf16.msra.mxu0 %v775
    %1796 = vmatprep.subr.bf16.mxu0 %v780
    %1797 = vmatpush1.bf16.msra.mxu0 %v779
    %1798 = vmatprep.subr.bf16.mxu0 %v784
    %1799 = vmatpush1.bf16.msra.mxu0 %v783
    %1800 = vmatprep.subr.bf16.mxu0 0
    %1801 = vmatpush1.bf16.msra.mxu0 0
    %1802 = vmatprep.subr.bf16.mxu0 0
    %1803 = vmatpush1.bf16.msra.mxu0 0
    %1804 = vmatprep.subr.bf16.mxu0 0
    %1805 = vmatpush1.bf16.msra.mxu0 0
    %1806 = vmatprep.subr.bf16.mxu0 0
    %1807 = vmatpush1.bf16.msra.mxu0 0
    %1808 = vmatprep.subr.bf16.mxu0 0
    %1809 = vmatpush1.bf16.msra.mxu0 0
    %1810 = vmatprep.subr.bf16.mxu0 0
    %1811 = vmatpush1.bf16.msra.mxu0 0
    %1812 = vmatprep.subr.bf16.mxu0 0
    %1813 = vmatpush1.bf16.msra.mxu0 0
    %1814 = vmatprep.subr.bf16.mxu0 0
    %1815 = vmatpush1.bf16.msra.mxu0 0
    %1816 = vmatprep.mubr.bf16.mxu0 0
    %1817 = vmatmul.mubr.bf16.gmra.mrb[0].mxu0 %v1783
    %v1818 = vpop.f32.mrb[0].mxu0
    %v1819 = vadd.f32 0.0, %v1818
    %v1820 = vpop.f32.mrb[0].mxu0
    %v1821 = vadd.f32 0.0, %v1820
    %v1822 = vpop.f32.mrb[0].mxu0
    %v1823 = vadd.f32 0.0, %v1822
    %v1824 = vpop.f32.mrb[0].mxu0
    %v1825 = vadd.f32 0.0, %v1824
    %1826 = vdwg.mxu0
    %1827 = vmatprep.subr.bf16.mxu0 %v758
    %1828 = vmatpush1.bf16.msra.mxu0 %v757
    %1829 = vmatprep.subr.bf16.mxu0 %v762
    %1830 = vmatpush1.bf16.msra.mxu0 %v761
    %1831 = vmatprep.subr.bf16.mxu0 %v766
    %1832 = vmatpush1.bf16.msra.mxu0 %v765
    %1833 = vmatprep.subr.bf16.mxu0 %v770
    %1834 = vmatpush1.bf16.msra.mxu0 %v769
    %1835 = vmatprep.subr.bf16.mxu0 %v774
    %1836 = vmatpush1.bf16.msra.mxu0 %v773
    %1837 = vmatprep.subr.bf16.mxu0 %v778
    %1838 = vmatpush1.bf16.msra.mxu0 %v777
    %1839 = vmatprep.subr.bf16.mxu0 %v782
    %1840 = vmatpush1.bf16.msra.mxu0 %v781
    %1841 = vmatprep.subr.bf16.mxu0 %v786
    %1842 = vmatpush1.bf16.msra.mxu0 %v785
    %1843 = vmatprep.subr.bf16.mxu0 0
    %1844 = vmatpush1.bf16.msra.mxu0 0
    %1845 = vmatprep.subr.bf16.mxu0 0
    %1846 = vmatpush1.bf16.msra.mxu0 0
    %1847 = vmatprep.subr.bf16.mxu0 0
    %1848 = vmatpush1.bf16.msra.mxu0 0
    %1849 = vmatprep.subr.bf16.mxu0 0
    %1850 = vmatpush1.bf16.msra.mxu0 0
    %1851 = vmatprep.subr.bf16.mxu0 0
    %1852 = vmatpush1.bf16.msra.mxu0 0
    %1853 = vmatprep.subr.bf16.mxu0 0
    %1854 = vmatpush1.bf16.msra.mxu0 0
    %1855 = vmatprep.subr.bf16.mxu0 0
    %1856 = vmatpush1.bf16.msra.mxu0 0
    %1857 = vmatprep.subr.bf16.mxu0 0
    %1858 = vmatpush1.bf16.msra.mxu0 0
    %1859 = vmatprep.mubr.bf16.mxu0 0
    %1860 = vmatmul.mubr.bf16.gmra.mrb[0].mxu0 %v1783
    %v1861 = vpop.f32.mrb[0].mxu0
    %v1862 = vadd.f32 0.0, %v1861
    %v1863 = vpop.f32.mrb[0].mxu0
    %v1864 = vadd.f32 0.0, %v1863
    %v1865 = vpop.f32.mrb[0].mxu0
    %v1866 = vadd.f32 0.0, %v1865
    %v1867 = vpop.f32.mrb[0].mxu0
    %v1868 = vadd.f32 0.0, %v1867
    %1869 = vdwg.mxu0
    %v1870 = vadd.f32 %v1775, %v1819
    %v1871 = vadd.f32 %v1776, %v1821
    %v1872 = vadd.f32 %v1777, %v1862
    %v1873 = vadd.f32 %v1778, %v1864
    %v1874 = vadd.f32 %v1779, %v1823
    %v1875 = vadd.f32 %v1780, %v1825
    %v1876 = vadd.f32 %v1781, %v1866
    %v1877 = vadd.f32 %v1782, %v1868
    %v1878 = vmul.f32 %v1870, 0.5
    %v1879 = vmul.f32 %v1874, 0.5
    %v1880 = vtanh.pop %v1878
    %v1881 = vtanh.pop %v1879
    %v1882 = vmul.f32 %v1880, 0.5
    %v1883 = vmul.f32 %v1881, 0.5
    %v1884 = vadd.f32 %v1882, 0.5
    %v1885 = vadd.f32 %v1883, 0.5
    %v1886 = vmul.f32 %v1871, 0.5
    %v1887 = vmul.f32 %v1875, 0.5
    %v1888 = vtanh.pop %v1886
    %v1889 = vtanh.pop %v1887
    %v1890 = vmul.f32 %v1888, 0.5
    %v1891 = vmul.f32 %v1889, 0.5
    %v1892 = vadd.f32 %v1890, 0.5
    %v1893 = vadd.f32 %v1891, 0.5
    %v1894 = vtanh.pop %v1872
    %v1895 = vtanh.pop %v1876
    %v1896 = vmul.f32 %v1873, 0.5
    %v1897 = vmul.f32 %v1877, 0.5
    %v1898 = vtanh.pop %v1896
    %v1899 = vtanh.pop %v1897
    %v1900 = vmul.f32 %v1898, 0.5
    %v1901 = vmul.f32 %v1899, 0.5
    %v1902 = vadd.f32 %v1900, 0.5
    %v1903 = vadd.f32 %v1901, 0.5
    %v1904 = vmul.f32 %v1892, %v1770
    %v1905 = vmul.f32 %v1893, %v1771
    %v1906 = vmul.f32 %v1884, %v1894
    %v1907 = vmul.f32 %v1885, %v1895
    %v1908 = vadd.f32 %v1904, %v1906
    %v1909 = vadd.f32 %v1905, %v1907
    %v1910 = vtanh.pop %v1908
    %v1911 = vtanh.pop %v1909
    %v1912 = vmul.f32 %v1902, %v1910
    %v1913 = vmul.f32 %v1903, %v1911
    %1914 = vst [vmem:[%s6] sm:$0xff] %v1908
    %1915 = vst [vmem:[%s6 + $0x8] sm:$0xff] %v1909
    %1916 = vst [vmem:[%s5] sm:$0xff] %v1912
    %1917 = vst [vmem:[%s5 + $0x8] sm:$0xff] %v1913
    %v1918 = vpack.c.bf16 %v1913, %v1912
    %v1920 = vunpack.c.l.b16 %v1918
    %v1921 = vunpack.c.h.b16 %v1918
    %v1922 = vpack.c.b16 %v1920, %v1920
    %v1923 = vpack.c.b16 %v1921, %v1921
    %s1926 = scalar_lea.vmem %s4, 48
    %1927 = vst [vmem:[%s1926] sm:$0xf] %v1922
    %1928 = vst [vmem:[%s1926 + $0x4] sm:$0xf] %v1923
    %v1929 = vld [vmem:[%s5] sm:$0xff]
    %v1930 = vld [vmem:[%s5 + $0x8] sm:$0xff]
    %v1931 = vld [vmem:[%s6] sm:$0xff]
    %v1932 = vld [vmem:[%s6 + $0x8] sm:$0xff]
    %s1933 = smul.u32 14, 4
    %s1934 = smul.addr %s1933, 8
    %s1935 = scalar_lea.vmem [#allocation2], %s1934
    %v1936 = vld [vmem:[%s1935] sm:$0xff]
    %v1937 = vld [vmem:[%s1935 + $0x8] sm:$0xff]
    %v1938 = vld [vmem:[%s1935 + $0x10] sm:$0xff]
    %v1939 = vld [vmem:[%s1935 + $0x18] sm:$0xff]
    %v1940 = vld [vmem:[%s1935 + $0x20] sm:$0xff]
    %v1941 = vld [vmem:[%s1935 + $0x28] sm:$0xff]
    %v1942 = vld [vmem:[%s1935 + $0x30] sm:$0xff]
    %v1943 = vld [vmem:[%s1935 + $0x38] sm:$0xff]
    %v1944 = vpack.c.bf16 %v1930, %v1929
    %1945 = vmatprep.subr.bf16.mxu0 %v756
    %1946 = vmatpush1.bf16.msra.mxu0 %v755
    %1947 = vmatprep.subr.bf16.mxu0 %v760
    %1948 = vmatpush1.bf16.msra.mxu0 %v759
    %1949 = vmatprep.subr.bf16.mxu0 %v764
    %1950 = vmatpush1.bf16.msra.mxu0 %v763
    %1951 = vmatprep.subr.bf16.mxu0 %v768
    %1952 = vmatpush1.bf16.msra.mxu0 %v767
    %1953 = vmatprep.subr.bf16.mxu0 %v772
    %1954 = vmatpush1.bf16.msra.mxu0 %v771
    %1955 = vmatprep.subr.bf16.mxu0 %v776
    %1956 = vmatpush1.bf16.msra.mxu0 %v775
    %1957 = vmatprep.subr.bf16.mxu0 %v780
    %1958 = vmatpush1.bf16.msra.mxu0 %v779
    %1959 = vmatprep.subr.bf16.mxu0 %v784
    %1960 = vmatpush1.bf16.msra.mxu0 %v783
    %1961 = vmatprep.subr.bf16.mxu0 0
    %1962 = vmatpush1.bf16.msra.mxu0 0
    %1963 = vmatprep.subr.bf16.mxu0 0
    %1964 = vmatpush1.bf16.msra.mxu0 0
    %1965 = vmatprep.subr.bf16.mxu0 0
    %1966 = vmatpush1.bf16.msra.mxu0 0
    %1967 = vmatprep.subr.bf16.mxu0 0
    %1968 = vmatpush1.bf16.msra.mxu0 0
    %1969 = vmatprep.subr.bf16.mxu0 0
    %1970 = vmatpush1.bf16.msra.mxu0 0
    %1971 = vmatprep.subr.bf16.mxu0 0
    %1972 = vmatpush1.bf16.msra.mxu0 0
    %1973 = vmatprep.subr.bf16.mxu0 0
    %1974 = vmatpush1.bf16.msra.mxu0 0
    %1975 = vmatprep.subr.bf16.mxu0 0
    %1976 = vmatpush1.bf16.msra.mxu0 0
    %1977 = vmatprep.mubr.bf16.mxu0 0
    %1978 = vmatmul.mubr.bf16.gmra.mrb[0].mxu0 %v1944
    %v1979 = vpop.f32.mrb[0].mxu0
    %v1980 = vadd.f32 0.0, %v1979
    %v1981 = vpop.f32.mrb[0].mxu0
    %v1982 = vadd.f32 0.0, %v1981
    %v1983 = vpop.f32.mrb[0].mxu0
    %v1984 = vadd.f32 0.0, %v1983
    %v1985 = vpop.f32.mrb[0].mxu0
    %v1986 = vadd.f32 0.0, %v1985
    %1987 = vdwg.mxu0
    %1988 = vmatprep.subr.bf16.mxu0 %v758
    %1989 = vmatpush1.bf16.msra.mxu0 %v757
    %1990 = vmatprep.subr.bf16.mxu0 %v762
    %1991 = vmatpush1.bf16.msra.mxu0 %v761
    %1992 = vmatprep.subr.bf16.mxu0 %v766
    %1993 = vmatpush1.bf16.msra.mxu0 %v765
    %1994 = vmatprep.subr.bf16.mxu0 %v770
    %1995 = vmatpush1.bf16.msra.mxu0 %v769
    %1996 = vmatprep.subr.bf16.mxu0 %v774
    %1997 = vmatpush1.bf16.msra.mxu0 %v773
    %1998 = vmatprep.subr.bf16.mxu0 %v778
    %1999 = vmatpush1.bf16.msra.mxu0 %v777
    %2000 = vmatprep.subr.bf16.mxu0 %v782
    %2001 = vmatpush1.bf16.msra.mxu0 %v781
    %2002 = vmatprep.subr.bf16.mxu0 %v786
    %2003 = vmatpush1.bf16.msra.mxu0 %v785
    %2004 = vmatprep.subr.bf16.mxu0 0
    %2005 = vmatpush1.bf16.msra.mxu0 0
    %2006 = vmatprep.subr.bf16.mxu0 0
    %2007 = vmatpush1.bf16.msra.mxu0 0
    %2008 = vmatprep.subr.bf16.mxu0 0
    %2009 = vmatpush1.bf16.msra.mxu0 0
    %2010 = vmatprep.subr.bf16.mxu0 0
    %2011 = vmatpush1.bf16.msra.mxu0 0
    %2012 = vmatprep.subr.bf16.mxu0 0
    %2013 = vmatpush1.bf16.msra.mxu0 0
    %2014 = vmatprep.subr.bf16.mxu0 0
    %2015 = vmatpush1.bf16.msra.mxu0 0
    %2016 = vmatprep.subr.bf16.mxu0 0
    %2017 = vmatpush1.bf16.msra.mxu0 0
    %2018 = vmatprep.subr.bf16.mxu0 0
    %2019 = vmatpush1.bf16.msra.mxu0 0
    %2020 = vmatprep.mubr.bf16.mxu0 0
    %2021 = vmatmul.mubr.bf16.gmra.mrb[0].mxu0 %v1944
    %v2022 = vpop.f32.mrb[0].mxu0
    %v2023 = vadd.f32 0.0, %v2022
    %v2024 = vpop.f32.mrb[0].mxu0
    %v2025 = vadd.f32 0.0, %v2024
    %v2026 = vpop.f32.mrb[0].mxu0
    %v2027 = vadd.f32 0.0, %v2026
    %v2028 = vpop.f32.mrb[0].mxu0
    %v2029 = vadd.f32 0.0, %v2028
    %2030 = vdwg.mxu0
    %v2031 = vadd.f32 %v1936, %v1980
    %v2032 = vadd.f32 %v1937, %v1982
    %v2033 = vadd.f32 %v1938, %v2023
    %v2034 = vadd.f32 %v1939, %v2025
    %v2035 = vadd.f32 %v1940, %v1984
    %v2036 = vadd.f32 %v1941, %v1986
    %v2037 = vadd.f32 %v1942, %v2027
    %v2038 = vadd.f32 %v1943, %v2029
    %v2039 = vmul.f32 %v2031, 0.5
    %v2040 = vmul.f32 %v2035, 0.5
    %v2041 = vtanh.pop %v2039
    %v2042 = vtanh.pop %v2040
    %v2043 = vmul.f32 %v2041, 0.5
    %v2044 = vmul.f32 %v2042, 0.5
    %v2045 = vadd.f32 %v2043, 0.5
    %v2046 = vadd.f32 %v2044, 0.5
    %v2047 = vmul.f32 %v2032, 0.5
    %v2048 = vmul.f32 %v2036, 0.5
    %v2049 = vtanh.pop %v2047
    %v2050 = vtanh.pop %v2048
    %v2051 = vmul.f32 %v2049, 0.5
    %v2052 = vmul.f32 %v2050, 0.5
    %v2053 = vadd.f32 %v2051, 0.5
    %v2054 = vadd.f32 %v2052, 0.5
    %v2055 = vtanh.pop %v2033
    %v2056 = vtanh.pop %v2037
    %v2057 = vmul.f32 %v2034, 0.5
    %v2058 = vmul.f32 %v2038, 0.5
    %v2059 = vtanh.pop %v2057
    %v2060 = vtanh.pop %v2058
    %v2061 = vmul.f32 %v2059, 0.5
    %v2062 = vmul.f32 %v2060, 0.5
    %v2063 = vadd.f32 %v2061, 0.5
    %v2064 = vadd.f32 %v2062, 0.5
    %v2065 = vmul.f32 %v2053, %v1931
    %v2066 = vmul.f32 %v2054, %v1932
    %v2067 = vmul.f32 %v2045, %v2055
    %v2068 = vmul.f32 %v2046, %v2056
    %v2069 = vadd.f32 %v2065, %v2067
    %v2070 = vadd.f32 %v2066, %v2068
    %v2071 = vtanh.pop %v2069
    %v2072 = vtanh.pop %v2070
    %v2073 = vmul.f32 %v2063, %v2071
    %v2074 = vmul.f32 %v2064, %v2072
    %2075 = vst [vmem:[%s6] sm:$0xff] %v2069
    %2076 = vst [vmem:[%s6 + $0x8] sm:$0xff] %v2070
    %2077 = vst [vmem:[%s5] sm:$0xff] %v2073
    %2078 = vst [vmem:[%s5 + $0x8] sm:$0xff] %v2074
    %v2079 = vpack.c.bf16 %v2074, %v2073
    %v2081 = vunpack.c.l.b16 %v2079
    %v2082 = vunpack.c.h.b16 %v2079
    %v2083 = vpack.c.b16 %v2081, %v2081
    %v2084 = vpack.c.b16 %v2082, %v2082
    %s2087 = scalar_lea.vmem %s4, 56
    %2088 = vst [vmem:[%s2087] sm:$0xf] %v2083
    %2089 = vst [vmem:[%s2087 + $0x4] sm:$0xf] %v2084
    // Predicated region
    $region26: #{rnn_forward.3} parent=1 // pred_check
      _
    $region27: #{rnn_forward.3} parent=1 // pred_check_branch
      %2091 = sbr.rel (0) target = $region29
    $region28: #{rnn_forward.3} parent=1 // pred_region
      _
    $region29: #{rnn_forward.3} parent=1 // pred_fallthru
      _
    // Predicated region
    $region30: #{rnn_forward.3} parent=1 // pred_check
      _
    $region31: #{rnn_forward.3} parent=1 // pred_check_branch
      %2093 = sbr.rel (0) target = $region33
    $region32: #{rnn_forward.3} parent=1 // pred_region
      _
    $region33: #{rnn_forward.3} parent=1 // pred_fallthru
      _
    // Predicated region
    $region34: #{rnn_forward.3} parent=1 // pred_check
      _
    $region35: #{rnn_forward.3} parent=1 // pred_check_branch
      %2095 = sbr.rel (0) target = $region37
    $region36: #{rnn_forward.3} parent=1 // pred_region
      _
    $region37: #{rnn_forward.3} parent=1 // pred_fallthru
      _
    // Predicated region
    $region38: #{rnn_forward.3} parent=1 // pred_check
      _
    $region39: #{rnn_forward.3} parent=1 // pred_check_branch
      %2097 = sbr.rel (0) target = $region41
    $region40: #{rnn_forward.3} parent=1 // pred_region
      _
    $region41: #{rnn_forward.3} parent=1 // pred_fallthru
      _
    // Predicated region
    $region42: #{rnn_forward.3} parent=1 // pred_check
      _
    $region43: #{rnn_forward.3} parent=1 // pred_check_branch
      %2099 = sbr.rel (0) target = $region45
    $region44: #{rnn_forward.3} parent=1 // pred_region
      _
    $region45: #{rnn_forward.3} parent=1 // pred_fallthru
      _
    // Predicated region
    $region46: #{rnn_forward.3} parent=1 // pred_check
      _
    $region47: #{rnn_forward.3} parent=1 // pred_check_branch
      %2101 = sbr.rel (0) target = $region49
    $region48: #{rnn_forward.3} parent=1 // pred_region
      _
    $region49: #{rnn_forward.3} parent=1 // pred_fallthru
      _
    %2102 = vsyncpa [#allocation4], 1

</llo_original>
